<compile_context>
chip_gen: v6e
topology: v6e:2x2x1
jax: 0.10.0
libtpu: 0.0.40
codegen_flags: <defaults>
</compile_context>

<pallas_src>
import math
import functools

import jax
import jax.numpy as jnp
from jax.experimental import pallas as pl
from jax.experimental.pallas import tpu as pltpu


ACT_DTYPE = jnp.bfloat16


# ----------------------------------------------------------------------------
# helpers
# ----------------------------------------------------------------------------
def _gelu(x):
    # TODO(synk): PyTorch nn.GELU() defaults to exact erf; erf has no
    # guaranteed Mosaic lowering, so the tanh approximation is used
    # (max abs deviation ~3e-4).
    c = math.sqrt(2.0 / math.pi)
    return 0.5 * x * (1.0 + jnp.tanh(c * (x + 0.044715 * x * x * x)))


def _bn_scale_shift(bn, eps=1e-5):
    """Inference-mode BatchNorm as per-channel (scale, shift) 1-D vectors."""
    scale = bn["weight"] / jnp.sqrt(bn["var"] + eps)
    shift = bn["bias"] - bn["mean"] * scale
    return scale, shift


def _pick_tile(n, row_bytes, *, granule=16, target_bytes=2 << 20, min_steps=2):
    """Largest divisor of n that is a multiple of `granule` (bf16 sublane
    tile), keeps a block near `target_bytes`, and if possible leaves at least
    `min_steps` grid steps (v7x has 2 TensorCores + pipeline overlap)."""
    cap = max(granule, min(n, int(target_bytes // max(int(row_bytes), 1))))
    for t in range(cap, 0, -1):
        if n % t == 0 and t % granule == 0 and n // t >= min_steps:
            return t
    for t in range(cap, 0, -1):
        if n % t == 0 and t % granule == 0:
            return t
    return n


def _est_vmem(*shapes_dtypes):
    """Rough double-buffered VMEM footprint for a set of blocks."""
    total = 0
    for shp, dt in shapes_dtypes:
        total += 2 * math.prod(shp) * jnp.dtype(dt).itemsize
    return total


def _mosaic_params(semantics, est_bytes=0):
    vmem = None
    if est_bytes > 12 * 1024 * 1024:          # v5e scoped-VMEM default = 16 MiB
        vmem = min(int(est_bytes * 1.25), 32 * 1024 * 1024)
    return pltpu.CompilerParams(dimension_semantics=semantics,
                                vmem_limit_bytes=vmem)


# ----------------------------------------------------------------------------
# Pallas kernels
# ----------------------------------------------------------------------------
def _branch_kernel(x_ref, w1_ref, b1_ref, w2_ref, b2_ref,
                   o_ref, osum_ref, isum_ref):
    """x @ W1 + b1 -> ReLU -> @ W2 + b2 (intermediate stays in VMEM) plus
    per-batch channel sums of the input and output tokens (accumulated across
    the token-tile grid axis for the re-weighting path)."""
    x = x_ref[0]                                               # (tn, Cp) bf16
    y = jnp.dot(x, w1_ref[...], preferred_element_type=jnp.float32)
    y = jnp.maximum(y + b1_ref[...], 0.0)
    z = jnp.dot(y.astype(x.dtype), w2_ref[...],
                preferred_element_type=jnp.float32) + b2_ref[...]
    o_ref[0] = z.astype(o_ref.dtype)

    @pl.when(pl.program_id(1) == 0)
    def _():
        osum_ref[...] = jnp.zeros_like(osum_ref)
        isum_ref[...] = jnp.zeros_like(isum_ref)

    osum_ref[0] = osum_ref[0] + jnp.sum(z, axis=0, keepdims=True)
    isum_ref[0] = isum_ref[0] + jnp.sum(x.astype(jnp.float32), axis=0,
                                        keepdims=True)


def branch_mlp(x_tok, w1, b1, w2, b2):
    """x_tok: (B, Nb, Cp).  Returns (tokens_out, out_sums, in_sums)."""
    bsz, nb, cp = x_tok.shape
    ch = w1.shape[-1]
    itm = jnp.dtype(x_tok.dtype).itemsize
    tn = _pick_tile(nb, cp * 2 * itm)
    est = _est_vmem(((tn, cp), x_tok.dtype), ((tn, cp), x_tok.dtype),
                    ((cp, ch), w1.dtype), ((ch, cp), w2.dtype),
                    ((1, ch), jnp.float32), ((1, cp), jnp.float32),
                    ((2, cp), jnp.float32))
    return pl.pallas_call(
        _branch_kernel,
        out_shape=(jax.ShapeDtypeStruct((bsz, nb, cp), x_tok.dtype),
                   jax.ShapeDtypeStruct((bsz, 1, cp), jnp.float32),
                   jax.ShapeDtypeStruct((bsz, 1, cp), jnp.float32)),
        grid=(bsz, nb // tn),
        in_specs=[pl.BlockSpec((1, tn, cp), lambda b, t: (b, t, 0)),
                  pl.BlockSpec((cp, ch), lambda b, t: (0, 0)),
                  pl.BlockSpec((1, ch), lambda b, t: (0, 0)),
                  pl.BlockSpec((ch, cp), lambda b, t: (0, 0)),
                  pl.BlockSpec((1, cp), lambda b, t: (0, 0))],
        out_specs=[pl.BlockSpec((1, tn, cp), lambda b, t: (b, t, 0)),
                   pl.BlockSpec((1, 1, cp), lambda b, t: (b, 0, 0)),
                   pl.BlockSpec((1, 1, cp), lambda b, t: (b, 0, 0))],
        input_output_aliases={0: 0},          # token buffer reused for output
        compiler_params=_mosaic_params(("parallel", "arbitrary"), est),
    )(x_tok, w1, b1, w2, b2)


def _reweight_kernel(mh_ref, mw_ref, mx_ref, wc_ref, bc_ref,
                     w1_ref, b1_ref, w2_ref, b2_ref, o_ref):
    """Per batch: mean(h)+mean(w)+mean(c) -> fc1 -> GELU -> fc2 (branch-major
    columns, one dot) -> softmax over the 3 branches."""
    mh = mh_ref[0]                                             # (1, C) f32
    mw = mw_ref[0]
    mx = mx_ref[0]
    # mean over HW of mlp_c(norm1(x)) == mean(x) @ Wc_folded + bc_folded
    mc = jnp.dot(mx, wc_ref[...], preferred_element_type=jnp.float32) + bc_ref[...]
    s = mh + mw + mc
    z = _gelu(jnp.dot(s, w1_ref[...], preferred_element_type=jnp.float32)
              + b1_ref[...])                                   # (1, C//4)
    logits = jnp.dot(z, w2_ref[...],
                     preferred_element_type=jnp.float32) + b2_ref[...]  # (1,3C)
    c = o_ref.shape[-1]
    a0 = logits[:, :c]
    a1 = logits[:, c:2 * c]
    a2 = logits[:, 2 * c:]
    m = jnp.maximum(jnp.maximum(a0, a1), a2)
    e0 = jnp.exp(a0 - m)
    e1 = jnp.exp(a1 - m)
    e2 = jnp.exp(a2 - m)
    inv = 1.0 / (e0 + e1 + e2)
    o_ref[0] = jnp.concatenate([e0 * inv, e1 * inv, e2 * inv], axis=0)  # (3, C)


def reweight(mh, mw, mx, wc, bc, w1, b1, w2, b2):
    bsz, _, c = mh.shape
    c4 = w1.shape[-1]
    c3 = w2.shape[-1]
    return pl.pallas_call(
        _reweight_kernel,
        out_shape=jax.ShapeDtypeStruct((bsz, 3, c), jnp.float32),
        grid=(bsz,),
        in_specs=[pl.BlockSpec((1, 1, c), lambda b: (b, 0, 0)),
                  pl.BlockSpec((1, 1, c), lambda b: (b, 0, 0)),
                  pl.BlockSpec((1, 1, c), lambda b: (b, 0, 0)),
                  pl.BlockSpec((c, c), lambda b: (0, 0)),
                  pl.BlockSpec((1, c), lambda b: (0, 0)),
                  pl.BlockSpec((c, c4), lambda b: (0, 0)),
                  pl.BlockSpec((1, c4), lambda b: (0, 0)),
                  pl.BlockSpec((c4, c3), lambda b: (0, 0)),
                  pl.BlockSpec((1, c3), lambda b: (0, 0))],
        out_specs=pl.BlockSpec((1, 3, c), lambda b: (b, 0, 0)),
        compiler_params=_mosaic_params(("parallel",)),
    )(mh, mw, mx, wc, bc, w1, b1, w2, b2)


def _combine_kernel(h_ref, w_ref, x_ref, a_ref, wc_ref, bc_ref,
                    wp_ref, bp_ref, o_ref):
    """c-branch matmul (a[2] pre-folded into the (C,C) weight) + branch
    re-weighting + proj + first residual."""
    x = x_ref[0]                                               # (t, C) bf16
    a = a_ref[0]                                               # (3, C) f32
    wc_s = (wc_ref[...].astype(jnp.float32) * a[2:3, :]).astype(x.dtype)
    bc_s = bc_ref[...] * a[2:3, :]
    comb = (h_ref[0].astype(jnp.float32) * a[0:1, :]
            + w_ref[0].astype(jnp.float32) * a[1:2, :]
            + jnp.dot(x, wc_s, preferred_element_type=jnp.float32) + bc_s)
    y = jnp.dot(comb.astype(x.dtype), wp_ref[...],
                preferred_element_type=jnp.float32) + bp_ref[...]
    o_ref[0] = (x.astype(jnp.float32) + y).astype(o_ref.dtype)


def combine_proj(h_t, w_t, x_t, a_pack, wc, bc, wp, bp):
    bsz, hw, c = h_t.shape
    itm = jnp.dtype(x_t.dtype).itemsize
    t = _pick_tile(hw, c * itm * 4)
    est = (_est_vmem(((t, c), x_t.dtype)) * 4
           + _est_vmem(((c, c), wc.dtype), ((c, c), wp.dtype),
                       ((3, c), jnp.float32), ((1, c), jnp.float32),
                       ((1, c), jnp.float32)))
    return pl.pallas_call(
        _combine_kernel,
        out_shape=jax.ShapeDtypeStruct((bsz, hw, c), x_t.dtype),
        grid=(bsz, hw // t),
        in_specs=[pl.BlockSpec((1, t, c), lambda b, j: (b, j, 0)),
                  pl.BlockSpec((1, t, c), lambda b, j: (b, j, 0)),
                  pl.BlockSpec((1, t, c), lambda b, j: (b, j, 0)),
                  pl.BlockSpec((1, 3, c), lambda b, j: (b, 0, 0)),
                  pl.BlockSpec((c, c), lambda b, j: (0, 0)),
                  pl.BlockSpec((1, c), lambda b, j: (0, 0)),
                  pl.BlockSpec((c, c), lambda b, j: (0, 0)),
                  pl.BlockSpec((1, c), lambda b, j: (0, 0))],
        out_specs=pl.BlockSpec((1, t, c), lambda b, j: (b, j, 0)),
        input_output_aliases={2: 0},          # residual/x aliased to output
        compiler_params=_mosaic_params(("parallel", "parallel"), est),
    )(h_t, w_t, x_t, a_pack, wc, bc, wp, bp)


def _mlp_kernel(x_ref, w1_ref, b1_ref, w2_ref, b2_ref, o_ref):
    """norm2 (pre-folded into W1,b1) + fc1 + GELU + fc2 + second residual."""
    x = x_ref[...]
    y = jnp.dot(x, w1_ref[...], preferred_element_type=jnp.float32) + b1_ref[...]
    y = _gelu(y)
    y = jnp.dot(y.astype(x.dtype), w2_ref[...],
                preferred_element_type=jnp.float32) + b2_ref[...]
    o_ref[...] = (x.astype(jnp.float32) + y).astype(o_ref.dtype)


def mlp_block(x_tok, w1, b1, w2, b2, out_dtype=jnp.float32):
    n, c = x_tok.shape
    hid = w1.shape[1]
    itm = jnp.dtype(x_tok.dtype).itemsize
    otm = jnp.dtype(out_dtype).itemsize
    tn = _pick_tile(n, c * (itm + otm) + hid * 4)
    est = (_est_vmem(((tn, c), x_tok.dtype), ((tn, c), out_dtype),
                     ((c, hid), w1.dtype), ((hid, c), w2.dtype),
                     ((1, hid), jnp.float32), ((1, c), jnp.float32))
           + 4 * tn * hid)                    # f32 intermediate
    return pl.pallas_call(
        _mlp_kernel,
        out_shape=jax.ShapeDtypeStruct((n, c), out_dtype),
        grid=(n // tn,),
        in_specs=[pl.BlockSpec((tn, c), lambda i: (i, 0)),
                  pl.BlockSpec((c, hid), lambda i: (0, 0)),
                  pl.BlockSpec((1, hid), lambda i: (0, 0)),
                  pl.BlockSpec((hid, c), lambda i: (0, 0)),
                  pl.BlockSpec((1, c), lambda i: (0, 0))],
        out_specs=pl.BlockSpec((tn, c), lambda i: (i, 0)),
        compiler_params=_mosaic_params(("parallel",), est),
    )(x_tok, w1, b1, w2, b2)


# ----------------------------------------------------------------------------
# parameters (deterministic synthetic init, PyTorch-equivalent layout)
# ----------------------------------------------------------------------------
def init_params(key, dim, pixel, mlp_ratio):
    hidden = int(dim * mlp_ratio)
    it = iter(jax.random.split(key, 64))

    def w(shape, scale=0.1):
        return jax.random.normal(next(it), shape, jnp.float32) * scale

    def bn(c):
        return {"weight": 1.0 + w((c,), 0.1),
                "bias": w((c,), 0.1),
                "mean": w((c,), 0.1),
                "var": 0.5 + jnp.abs(w((c,), 0.2))}

    return {
        "norm1": bn(dim),
        "norm2": bn(dim),
        "attn": {
            "mlp_h1_wT": w((dim * pixel, dim // 2)),
            "mlp_h1_norm": bn(dim // 2),
            "mlp_h2_wT": w((dim // 2, dim * pixel)),
            "mlp_h2_b": w((1, dim * pixel)),
            "mlp_w1_wT": w((dim * pixel, dim // 2)),
            "mlp_w1_norm": bn(dim // 2),
            "mlp_w2_wT": w((dim // 2, dim * pixel)),
            "mlp_w2_b": w((1, dim * pixel)),
            "mlp_c_wT": w((dim, dim)),
            "mlp_c_b": w((1, dim)),
            "rw1_wT": w((dim, dim // 4)),
            "rw1_b": w((1, dim // 4)),
            "rw2_wT": w((dim // 4, 3 * dim)),
            "rw2_b": w((1, 3 * dim)),
            "proj_wT": w((dim, dim)),
            "proj_b": w((1, dim)),
        },
        "mlp_fc1_wT": w((dim, hidden)),
        "mlp_fc1_b": w((1, hidden)),
        "mlp_fc2_wT": w((hidden, dim)),
        "mlp_fc2_b": w((1, dim)),
    }


# ----------------------------------------------------------------------------
# HireBlock forward
# ----------------------------------------------------------------------------
def hire_block_forward(x_nchw, params, *, pixel=2, step=1):
    B, C, H, W = x_nchw.shape
    pa = params["attn"]
    cdt = ACT_DTYPE

    # ---------------- fold BatchNorms / biases into matmul weights ----------
    s1, t1 = _bn_scale_shift(params["norm1"])            # (C,)
    s1r = jnp.repeat(s1, pixel)                          # regrouped channel
    t1r = jnp.repeat(t1, pixel)                          # order is c*pixel + p

    # h branch: norm1 + mlp_h1 (no bias) + mlp_h1_norm folded into (W1, b1)
    sh, th = _bn_scale_shift(pa["mlp_h1_norm"])
    w1h = ((s1r[:, None] * pa["mlp_h1_wT"]) * sh[None, :]).astype(cdt)
    b1h = (t1r[None, :] @ pa["mlp_h1_wT"]) * sh[None, :] + th[None, :]
    # w branch
    sw, tw = _bn_scale_shift(pa["mlp_w1_norm"])
    w1w = ((s1r[:, None] * pa["mlp_w1_wT"]) * sw[None, :]).astype(cdt)
    b1w = (t1r[None, :] @ pa["mlp_w1_wT"]) * sw[None, :] + tw[None, :]

    w2h = pa["mlp_h2_wT"].astype(cdt)
    b2h = pa["mlp_h2_b"]
    w2w = pa["mlp_w2_wT"].astype(cdt)
    b2w = pa["mlp_w2_b"]

    # c branch: norm1 folded into mlp_c
    wc_f = s1[:, None] * pa["mlp_c_wT"]
    bc_f = pa["mlp_c_b"] + t1[None, :] @ pa["mlp_c_wT"]
    wc_bf = wc_f.astype(cdt)

    # re-weighting MLP: permute fc2 columns to branch-major (out ch o = c*3+k)
    rw2_w = jnp.concatenate([pa["rw2_wT"][:, k::3] for k in range(3)], axis=1)
    rw2_b = jnp.concatenate([pa["rw2_b"][:, k::3] for k in range(3)], axis=1)

    # channel MLP: norm2 folded into fc1
    s2, t2 = _bn_scale_shift(params["norm2"])
    fc1_w = (s2[:, None] * params["mlp_fc1_wT"]).astype(cdt)
    fc1_b = params["mlp_fc1_b"] + t2[None, :] @ params["mlp_fc1_wT"]
    fc2_w = params["mlp_fc2_wT"].astype(cdt)
    fc2_b = params["mlp_fc2_b"]
    proj_w = pa["proj_wT"].astype(cdt)
    proj_b = pa["proj_b"]

    # ---------------- spatial regroup (still jnp glue) -----------------------
    # TODO(synk): fold roll/wrap-pad/regroup into the branch kernels' BlockSpecs.
    xb = jnp.transpose(x_nchw, (0, 2, 3, 1)).astype(cdt)       # NHWC bf16
    pad_h = (pixel - H % pixel) % pixel
    pad_w = (pixel - W % pixel) % pixel
    Hp = (H + pad_h) // pixel
    Wp = (W + pad_w) // pixel
    Cp = C * pixel

    h = jnp.roll(xb, step, axis=1) if step else xb
    if pad_h:
        h = jnp.pad(h, ((0, 0), (0, pad_h), (0, 0), (0, 0)), mode="wrap")
    h_tok = (h.reshape(B, Hp, pixel, W, C)
              .transpose(0, 1, 3, 4, 2).reshape(B, Hp * W, Cp))

    w_ = jnp.roll(xb, step, axis=2) if step else xb
    if pad_w:
        w_ = jnp.pad(w_, ((0, 0), (0, 0), (0, pad_w), (0, 0)), mode="wrap")
    w_tok = (w_.reshape(B, H, Wp, pixel, C)
               .transpose(0, 1, 2, 4, 3).reshape(B, H * Wp, Cp))

    # ---------------- h/w branch MLPs (with per-batch channel sums) ----------
    h_out, h_osum, h_isum = branch_mlp(h_tok, w1h, b1h, w2h, b2h)
    w_out, w_osum, _ = branch_mlp(w_tok, w1w, b1w, w2w, b2w)

    # ---------------- un-regroup, crop, undo step shift ----------------------
    h_sp = (h_out.reshape(B, Hp, W, C, pixel)
                 .transpose(0, 1, 4, 2, 3).reshape(B, Hp * pixel, W, C))[:, :H]
    if step:
        h_sp = jnp.roll(h_sp, -step, axis=1)
    w_sp = (w_out.reshape(B, H, Wp, C, pixel)
                 .transpose(0, 1, 2, 4, 3).reshape(B, H, Wp * pixel, C))[:, :, :W]
    if step:
        w_sp = jnp.roll(w_sp, -step, axis=2)

    HW = H * W
    h_t = h_sp.reshape(B, HW, C)
    w_t = w_sp.reshape(B, HW, C)
    x_t = xb.reshape(B, HW, C)

    # ---------------- per-batch means from the branch-kernel partial sums ----
    inv_hw = jnp.float32(1.0 / HW)
    if pad_h == 0:
        # roll / regroup are per-batch permutations -> sums are exact
        mean_h = h_osum.reshape(B, C, pixel).sum(axis=-1) * inv_hw
        mean_x = h_isum.reshape(B, C, pixel).sum(axis=-1) * inv_hw
    else:
        mean_h = jnp.mean(h_t.astype(jnp.float32), axis=1)
        mean_x = jnp.mean(x_t.astype(jnp.float32), axis=1)
    if pad_w == 0:
        mean_w = w_osum.reshape(B, C, pixel).sum(axis=-1) * inv_hw
    else:
        mean_w = jnp.mean(w_t.astype(jnp.float32), axis=1)
    mean_h = mean_h.reshape(B, 1, C)
    mean_w = mean_w.reshape(B, 1, C)
    mean_x = mean_x.reshape(B, 1, C)

    # ---------------- re-weighting (tiny per-batch kernel, no full reads) ----
    a_pack = reweight(mean_h, mean_w, mean_x, wc_f, bc_f,
                      pa["rw1_wT"], pa["rw1_b"], rw2_w, rw2_b)   # (B, 3, C)

    # ---------------- c-branch + combine + proj + first residual -------------
    x1 = combine_proj(h_t, w_t, x_t, a_pack, wc_bf, bc_f, proj_w, proj_b)

    # ---------------- norm2 + channel MLP + second residual ------------------
    x2 = mlp_block(x1.reshape(B * HW, C), fc1_w, fc1_b, fc2_w, fc2_b,
                   out_dtype=jnp.float32)

    out = x2.reshape(B, H, W, C)
    return jnp.transpose(out, (0, 3, 1, 2))                     # back to NCHW


# ----------------------------------------------------------------------------
# main
# ----------------------------------------------------------------------------
if __name__ == "__main__":
    key = jax.random.PRNGKey(0)
    kx, kp = jax.random.split(key)

    B, C, H, W = 2, 16, 16, 16        # dim=16, pixel=2, step=1, mlp_ratio=4
    x = jax.random.normal(kx, (B, C, H, W), jnp.float32)
    params = init_params(kp, dim=C, pixel=2, mlp_ratio=4.0)

    fwd = jax.jit(functools.partial(hire_block_forward, pixel=2, step=1))
    out = fwd(x, params)
    jax.block_until_ready(out)

    assert out.shape == (B, C, H, W)
    assert bool(jnp.all(jnp.isfinite(out)))
    print("KERNEL_OK")
</pallas_src>

<mosaic_0001>
module attributes {stable_mosaic.version = 11 : i64} {
  func.func @_branch_kernel(%arg0: i32, %arg1: i32, %arg2: memref<1x64x32xbf16, #tpu.memory_space<vmem>>, %arg3: memref<32x8xbf16, #tpu.memory_space<vmem>>, %arg4: memref<1x8xf32, #tpu.memory_space<vmem>>, %arg5: memref<8x32xbf16, #tpu.memory_space<vmem>>, %arg6: memref<1x32xf32, #tpu.memory_space<vmem>>, %arg7: memref<1x64x32xbf16, #tpu.memory_space<vmem>>, %arg8: memref<1x1x32xf32, #tpu.memory_space<vmem>>, %arg9: memref<1x1x32xf32, #tpu.memory_space<vmem>>) attributes {dimension_semantics = [#tpu.dimension_semantics<parallel>, #tpu.dimension_semantics<arbitrary>], iteration_bounds = array<i64: 2, 2>, scalar_prefetch = 0 : i64, scratch_operands = 0 : i64, tpu.core_type = #tpu.core_type<tc>, window_params = [{transform_indices = @transform_0, window_bounds = array<i64: 1, 64, 32>}, {pipeline_mode = #tpu.pipeline_mode<synchronous>, transform_indices = @transform_1, window_bounds = array<i64: 32, 8>}, {pipeline_mode = #tpu.pipeline_mode<synchronous>, transform_indices = @transform_2, window_bounds = array<i64: 1, 8>}, {pipeline_mode = #tpu.pipeline_mode<synchronous>, transform_indices = @transform_3, window_bounds = array<i64: 8, 32>}, {pipeline_mode = #tpu.pipeline_mode<synchronous>, transform_indices = @transform_4, window_bounds = array<i64: 1, 32>}, {transform_indices = @transform_5, window_bounds = array<i64: 1, 64, 32>}, {transform_indices = @transform_6, window_bounds = array<i64: 1, 1, 32>}, {transform_indices = @transform_7, window_bounds = array<i64: 1, 1, 32>}]} {
    %c0 = arith.constant 0 : index
    %c0_0 = arith.constant 0 : index
    %c0_1 = arith.constant 0 : index
    %0 = vector.load %arg2[%c0, %c0_0, %c0_1] : memref<1x64x32xbf16, #tpu.memory_space<vmem>>, vector<1x64x32xbf16>
    %1 = vector.shape_cast %0 : vector<1x64x32xbf16> to vector<64x32xbf16>
    %c0_2 = arith.constant 0 : index
    %c0_3 = arith.constant 0 : index
    %2 = vector.load %arg3[%c0_2, %c0_3] : memref<32x8xbf16, #tpu.memory_space<vmem>>, vector<32x8xbf16>
    %cst = arith.constant dense<0.000000e+00> : vector<64x8xf32>
    %3 = tpu.matmul %1, %2, %cst {dimension_numbers = #tpu.dot_dimension_numbers<[1], [0], [0], [1], [0, 0, 1, 1], [], []>} : vector<64x32xbf16>, vector<32x8xbf16>, vector<64x8xf32> -> vector<64x8xf32>
    %c0_4 = arith.constant 0 : index
    %c0_5 = arith.constant 0 : index
    %4 = vector.load %arg4[%c0_4, %c0_5] : memref<1x8xf32, #tpu.memory_space<vmem>>, vector<1x8xf32>
    %5 = vector.broadcast %4 : vector<1x8xf32> to vector<64x8xf32>
    %6 = arith.addf %3, %5 : vector<64x8xf32>
    %cst_6 = arith.constant 0.000000e+00 : f32
    %7 = vector.broadcast %cst_6 : f32 to vector<64x8xf32>
    %8 = arith.maximumf %6, %7 : vector<64x8xf32>
    %9 = arith.truncf %8 : vector<64x8xf32> to vector<64x8xbf16>
    %c0_7 = arith.constant 0 : index
    %c0_8 = arith.constant 0 : index
    %10 = vector.load %arg5[%c0_7, %c0_8] : memref<8x32xbf16, #tpu.memory_space<vmem>>, vector<8x32xbf16>
    %cst_9 = arith.constant dense<0.000000e+00> : vector<64x32xf32>
    %11 = tpu.matmul %9, %10, %cst_9 {dimension_numbers = #tpu.dot_dimension_numbers<[1], [0], [0], [1], [0, 0, 1, 1], [], []>} : vector<64x8xbf16>, vector<8x32xbf16>, vector<64x32xf32> -> vector<64x32xf32>
    %c0_10 = arith.constant 0 : index
    %c0_11 = arith.constant 0 : index
    %12 = vector.load %arg6[%c0_10, %c0_11] : memref<1x32xf32, #tpu.memory_space<vmem>>, vector<1x32xf32>
    %13 = vector.broadcast %12 : vector<1x32xf32> to vector<64x32xf32>
    %14 = arith.addf %11, %13 : vector<64x32xf32>
    %15 = arith.truncf %14 : vector<64x32xf32> to vector<64x32xbf16>
    %c0_12 = arith.constant 0 : index
    %c0_13 = arith.constant 0 : index
    %c0_14 = arith.constant 0 : index
    %16 = vector.load %arg7[%c0_12, %c0_13, %c0_14] : memref<1x64x32xbf16, #tpu.memory_space<vmem>>, vector<1x64x32xbf16>
    %17 = vector.shape_cast %16 : vector<1x64x32xbf16> to vector<64x32xbf16>
    %18 = vector.shape_cast %15 : vector<64x32xbf16> to vector<1x64x32xbf16>
    tpu.vector_store %arg7[%c0_12, %c0_13, %c0_14], %18 {strides = array<i32>} : memref<1x64x32xbf16, #tpu.memory_space<vmem>>, vector<1x64x32xbf16>,
    %c0_i32 = arith.constant 0 : i32
    %19 = arith.cmpi eq, %arg1, %c0_i32 : i32
    %20 = arith.extui %19 : i1 to i32
    %c0_i32_15 = arith.constant 0 : i32
    %21 = arith.cmpi ne, %20, %c0_i32_15 : i32
    scf.if %21 {
      %cst_30 = arith.constant 0.000000e+00 : f32
      %39 = vector.broadcast %cst_30 : f32 to vector<1x1x32xf32>
      %c0_31 = arith.constant 0 : index
      %c0_32 = arith.constant 0 : index
      %c0_33 = arith.constant 0 : index
      %40 = vector.load %arg8[%c0_31, %c0_32, %c0_33] : memref<1x1x32xf32, #tpu.memory_space<vmem>>, vector<1x1x32xf32>
      tpu.vector_store %arg8[%c0_31, %c0_32, %c0_33], %39 {strides = array<i32>} : memref<1x1x32xf32, #tpu.memory_space<vmem>>, vector<1x1x32xf32>,
      %cst_34 = arith.constant 0.000000e+00 : f32
      %41 = vector.broadcast %cst_34 : f32 to vector<1x1x32xf32>
      %c0_35 = arith.constant 0 : index
      %c0_36 = arith.constant 0 : index
      %c0_37 = arith.constant 0 : index
      %42 = vector.load %arg9[%c0_35, %c0_36, %c0_37] : memref<1x1x32xf32, #tpu.memory_space<vmem>>, vector<1x1x32xf32>
      tpu.vector_store %arg9[%c0_35, %c0_36, %c0_37], %41 {strides = array<i32>} : memref<1x1x32xf32, #tpu.memory_space<vmem>>, vector<1x1x32xf32>,
    } else {
    }
    %c0_16 = arith.constant 0 : index
    %c0_17 = arith.constant 0 : index
    %c0_18 = arith.constant 0 : index
    %22 = vector.load %arg8[%c0_16, %c0_17, %c0_18] : memref<1x1x32xf32, #tpu.memory_space<vmem>>, vector<1x1x32xf32>
    %23 = vector.shape_cast %22 : vector<1x1x32xf32> to vector<1x32xf32>
    %cst_19 = arith.constant dense<0.000000e+00> : vector<32xf32>
    %24 = vector.multi_reduction <add>, %14, %cst_19 [0] : vector<64x32xf32> to vector<32xf32>
    %25 = vector.shape_cast %24 : vector<32xf32> to vector<1x32xf32>
    %26 = arith.addf %23, %25 : vector<1x32xf32>
    %c0_20 = arith.constant 0 : index
    %c0_21 = arith.constant 0 : index
    %c0_22 = arith.constant 0 : index
    %27 = vector.load %arg8[%c0_20, %c0_21, %c0_22] : memref<1x1x32xf32, #tpu.memory_space<vmem>>, vector<1x1x32xf32>
    %28 = vector.shape_cast %27 : vector<1x1x32xf32> to vector<1x32xf32>
    %29 = vector.shape_cast %26 : vector<1x32xf32> to vector<1x1x32xf32>
    tpu.vector_store %arg8[%c0_20, %c0_21, %c0_22], %29 {strides = array<i32>} : memref<1x1x32xf32, #tpu.memory_space<vmem>>, vector<1x1x32xf32>,
    %c0_23 = arith.constant 0 : index
    %c0_24 = arith.constant 0 : index
    %c0_25 = arith.constant 0 : index
    %30 = vector.load %arg9[%c0_23, %c0_24, %c0_25] : memref<1x1x32xf32, #tpu.memory_space<vmem>>, vector<1x1x32xf32>
    %31 = vector.shape_cast %30 : vector<1x1x32xf32> to vector<1x32xf32>
    %32 = arith.extf %1 : vector<64x32xbf16> to vector<64x32xf32>
    %cst_26 = arith.constant dense<0.000000e+00> : vector<32xf32>
    %33 = vector.multi_reduction <add>, %32, %cst_26 [0] : vector<64x32xf32> to vector<32xf32>
    %34 = vector.shape_cast %33 : vector<32xf32> to vector<1x32xf32>
    %35 = arith.addf %31, %34 : vector<1x32xf32>
    %c0_27 = arith.constant 0 : index
    %c0_28 = arith.constant 0 : index
    %c0_29 = arith.constant 0 : index
    %36 = vector.load %arg9[%c0_27, %c0_28, %c0_29] : memref<1x1x32xf32, #tpu.memory_space<vmem>>, vector<1x1x32xf32>
    %37 = vector.shape_cast %36 : vector<1x1x32xf32> to vector<1x32xf32>
    %38 = vector.shape_cast %35 : vector<1x32xf32> to vector<1x1x32xf32>
    tpu.vector_store %arg9[%c0_27, %c0_28, %c0_29], %38 {strides = array<i32>} : memref<1x1x32xf32, #tpu.memory_space<vmem>>, vector<1x1x32xf32>,
    return
  }
  func.func @transform_0(%arg0: i32, %arg1: i32) -> (i32, i32, i32) {
    %c0_i32 = arith.constant 0 : i32
    %c0_i32_0 = arith.constant 0 : i32
    return %arg0, %arg1, %c0_i32 : i32, i32, i32
  }
  func.func @transform_1(%arg0: i32, %arg1: i32) -> (i32, i32) {
    %c0_i32 = arith.constant 0 : i32
    %c0_i32_0 = arith.constant 0 : i32
    %c0_i32_1 = arith.constant 0 : i32
    return %c0_i32, %c0_i32_0 : i32, i32
  }
  func.func @transform_2(%arg0: i32, %arg1: i32) -> (i32, i32) {
    %c0_i32 = arith.constant 0 : i32
    %c0_i32_0 = arith.constant 0 : i32
    %c0_i32_1 = arith.constant 0 : i32
    return %c0_i32, %c0_i32_0 : i32, i32
  }
  func.func @transform_3(%arg0: i32, %arg1: i32) -> (i32, i32) {
    %c0_i32 = arith.constant 0 : i32
    %c0_i32_0 = arith.constant 0 : i32
    %c0_i32_1 = arith.constant 0 : i32
    return %c0_i32, %c0_i32_0 : i32, i32
  }
  func.func @transform_4(%arg0: i32, %arg1: i32) -> (i32, i32) {
    %c0_i32 = arith.constant 0 : i32
    %c0_i32_0 = arith.constant 0 : i32
    %c0_i32_1 = arith.constant 0 : i32
    return %c0_i32, %c0_i32_0 : i32, i32
  }
  func.func @transform_5(%arg0: i32, %arg1: i32) -> (i32, i32, i32) {
    %c0_i32 = arith.constant 0 : i32
    %c0_i32_0 = arith.constant 0 : i32
    return %arg0, %arg1, %c0_i32 : i32, i32, i32
  }
  func.func @transform_6(%arg0: i32, %arg1: i32) -> (i32, i32, i32) {
    %c0_i32 = arith.constant 0 : i32
    %c0_i32_0 = arith.constant 0 : i32
    %c0_i32_1 = arith.constant 0 : i32
    return %arg0, %c0_i32, %c0_i32_0 : i32, i32, i32
  }
  func.func @transform_7(%arg0: i32, %arg1: i32) -> (i32, i32, i32) {
    %c0_i32 = arith.constant 0 : i32
    %c0_i32_0 = arith.constant 0 : i32
    %c0_i32_1 = arith.constant 0 : i32
    return %arg0, %c0_i32, %c0_i32_0 : i32, i32, i32
  }
}

module attributes {stable_mosaic.version = 11 : i64} {
  func.func @_branch_kernel(%arg0: i32, %arg1: i32, %arg2: memref<1x64x32xbf16, #tpu.memory_space<vmem>>, %arg3: memref<32x8xbf16, #tpu.memory_space<vmem>>, %arg4: memref<1x8xf32, #tpu.memory_space<vmem>>, %arg5: memref<8x32xbf16, #tpu.memory_space<vmem>>, %arg6: memref<1x32xf32, #tpu.memory_space<vmem>>, %arg7: memref<1x64x32xbf16, #tpu.memory_space<vmem>>, %arg8: memref<1x1x32xf32, #tpu.memory_space<vmem>>, %arg9: memref<1x1x32xf32, #tpu.memory_space<vmem>>) attributes {dimension_semantics = [#tpu.dimension_semantics<parallel>, #tpu.dimension_semantics<arbitrary>], iteration_bounds = array<i64: 2, 2>, scalar_prefetch = 0 : i64, scratch_operands = 0 : i64, tpu.core_type = #tpu.core_type<tc>, window_params = [{transform_indices = @transform_0, window_bounds = array<i64: 1, 64, 32>}, {pipeline_mode = #tpu.pipeline_mode<synchronous>, transform_indices = @transform_1, window_bounds = array<i64: 32, 8>}, {pipeline_mode = #tpu.pipeline_mode<synchronous>, transform_indices = @transform_2, window_bounds = array<i64: 1, 8>}, {pipeline_mode = #tpu.pipeline_mode<synchronous>, transform_indices = @transform_3, window_bounds = array<i64: 8, 32>}, {pipeline_mode = #tpu.pipeline_mode<synchronous>, transform_indices = @transform_4, window_bounds = array<i64: 1, 32>}, {transform_indices = @transform_5, window_bounds = array<i64: 1, 64, 32>}, {transform_indices = @transform_6, window_bounds = array<i64: 1, 1, 32>}, {transform_indices = @transform_7, window_bounds = array<i64: 1, 1, 32>}]} {
    %c0 = arith.constant 0 : index
    %c0_0 = arith.constant 0 : index
    %c0_1 = arith.constant 0 : index
    %0 = vector.load %arg2[%c0, %c0_0, %c0_1] : memref<1x64x32xbf16, #tpu.memory_space<vmem>>, vector<1x64x32xbf16>
    %1 = vector.shape_cast %0 : vector<1x64x32xbf16> to vector<64x32xbf16>
    %c0_2 = arith.constant 0 : index
    %c0_3 = arith.constant 0 : index
    %2 = vector.load %arg3[%c0_2, %c0_3] : memref<32x8xbf16, #tpu.memory_space<vmem>>, vector<32x8xbf16>
    %cst = arith.constant dense<0.000000e+00> : vector<64x8xf32>
    %3 = tpu.matmul %1, %2, %cst {dimension_numbers = #tpu.dot_dimension_numbers<[1], [0], [0], [1], [0, 0, 1, 1], [], []>} : vector<64x32xbf16>, vector<32x8xbf16>, vector<64x8xf32> -> vector<64x8xf32>
    %c0_4 = arith.constant 0 : index
    %c0_5 = arith.constant 0 : index
    %4 = vector.load %arg4[%c0_4, %c0_5] : memref<1x8xf32, #tpu.memory_space<vmem>>, vector<1x8xf32>
    %5 = vector.broadcast %4 : vector<1x8xf32> to vector<64x8xf32>
    %6 = arith.addf %3, %5 : vector<64x8xf32>
    %cst_6 = arith.constant 0.000000e+00 : f32
    %7 = vector.broadcast %cst_6 : f32 to vector<64x8xf32>
    %8 = arith.maximumf %6, %7 : vector<64x8xf32>
    %9 = arith.truncf %8 : vector<64x8xf32> to vector<64x8xbf16>
    %c0_7 = arith.constant 0 : index
    %c0_8 = arith.constant 0 : index
    %10 = vector.load %arg5[%c0_7, %c0_8] : memref<8x32xbf16, #tpu.memory_space<vmem>>, vector<8x32xbf16>
    %cst_9 = arith.constant dense<0.000000e+00> : vector<64x32xf32>
    %11 = tpu.matmul %9, %10, %cst_9 {dimension_numbers = #tpu.dot_dimension_numbers<[1], [0], [0], [1], [0, 0, 1, 1], [], []>} : vector<64x8xbf16>, vector<8x32xbf16>, vector<64x32xf32> -> vector<64x32xf32>
    %c0_10 = arith.constant 0 : index
    %c0_11 = arith.constant 0 : index
    %12 = vector.load %arg6[%c0_10, %c0_11] : memref<1x32xf32, #tpu.memory_space<vmem>>, vector<1x32xf32>
    %13 = vector.broadcast %12 : vector<1x32xf32> to vector<64x32xf32>
    %14 = arith.addf %11, %13 : vector<64x32xf32>
    %15 = arith.truncf %14 : vector<64x32xf32> to vector<64x32xbf16>
    %c0_12 = arith.constant 0 : index
    %c0_13 = arith.constant 0 : index
    %c0_14 = arith.constant 0 : index
    %16 = vector.load %arg7[%c0_12, %c0_13, %c0_14] : memref<1x64x32xbf16, #tpu.memory_space<vmem>>, vector<1x64x32xbf16>
    %17 = vector.shape_cast %16 : vector<1x64x32xbf16> to vector<64x32xbf16>
    %18 = vector.shape_cast %15 : vector<64x32xbf16> to vector<1x64x32xbf16>
    tpu.vector_store %arg7[%c0_12, %c0_13, %c0_14], %18 {strides = array<i32>} : memref<1x64x32xbf16, #tpu.memory_space<vmem>>, vector<1x64x32xbf16>,
    %c0_i32 = arith.constant 0 : i32
    %19 = arith.cmpi eq, %arg1, %c0_i32 : i32
    %20 = arith.extui %19 : i1 to i32
    %c0_i32_15 = arith.constant 0 : i32
    %21 = arith.cmpi ne, %20, %c0_i32_15 : i32
    scf.if %21 {
      %cst_30 = arith.constant 0.000000e+00 : f32
      %39 = vector.broadcast %cst_30 : f32 to vector<1x1x32xf32>
      %c0_31 = arith.constant 0 : index
      %c0_32 = arith.constant 0 : index
      %c0_33 = arith.constant 0 : index
      %40 = vector.load %arg8[%c0_31, %c0_32, %c0_33] : memref<1x1x32xf32, #tpu.memory_space<vmem>>, vector<1x1x32xf32>
      tpu.vector_store %arg8[%c0_31, %c0_32, %c0_33], %39 {strides = array<i32>} : memref<1x1x32xf32, #tpu.memory_space<vmem>>, vector<1x1x32xf32>,
      %cst_34 = arith.constant 0.000000e+00 : f32
      %41 = vector.broadcast %cst_34 : f32 to vector<1x1x32xf32>
      %c0_35 = arith.constant 0 : index
      %c0_36 = arith.constant 0 : index
      %c0_37 = arith.constant 0 : index
      %42 = vector.load %arg9[%c0_35, %c0_36, %c0_37] : memref<1x1x32xf32, #tpu.memory_space<vmem>>, vector<1x1x32xf32>
      tpu.vector_store %arg9[%c0_35, %c0_36, %c0_37], %41 {strides = array<i32>} : memref<1x1x32xf32, #tpu.memory_space<vmem>>, vector<1x1x32xf32>,
    } else {
    }
    %c0_16 = arith.constant 0 : index
    %c0_17 = arith.constant 0 : index
    %c0_18 = arith.constant 0 : index
    %22 = vector.load %arg8[%c0_16, %c0_17, %c0_18] : memref<1x1x32xf32, #tpu.memory_space<vmem>>, vector<1x1x32xf32>
    %23 = vector.shape_cast %22 : vector<1x1x32xf32> to vector<1x32xf32>
    %cst_19 = arith.constant dense<0.000000e+00> : vector<32xf32>
    %24 = vector.multi_reduction <add>, %14, %cst_19 [0] : vector<64x32xf32> to vector<32xf32>
    %25 = vector.shape_cast %24 : vector<32xf32> to vector<1x32xf32>
    %26 = arith.addf %23, %25 : vector<1x32xf32>
    %c0_20 = arith.constant 0 : index
    %c0_21 = arith.constant 0 : index
    %c0_22 = arith.constant 0 : index
    %27 = vector.load %arg8[%c0_20, %c0_21, %c0_22] : memref<1x1x32xf32, #tpu.memory_space<vmem>>, vector<1x1x32xf32>
    %28 = vector.shape_cast %27 : vector<1x1x32xf32> to vector<1x32xf32>
    %29 = vector.shape_cast %26 : vector<1x32xf32> to vector<1x1x32xf32>
    tpu.vector_store %arg8[%c0_20, %c0_21, %c0_22], %29 {strides = array<i32>} : memref<1x1x32xf32, #tpu.memory_space<vmem>>, vector<1x1x32xf32>,
    %c0_23 = arith.constant 0 : index
    %c0_24 = arith.constant 0 : index
    %c0_25 = arith.constant 0 : index
    %30 = vector.load %arg9[%c0_23, %c0_24, %c0_25] : memref<1x1x32xf32, #tpu.memory_space<vmem>>, vector<1x1x32xf32>
    %31 = vector.shape_cast %30 : vector<1x1x32xf32> to vector<1x32xf32>
    %32 = arith.extf %1 : vector<64x32xbf16> to vector<64x32xf32>
    %cst_26 = arith.constant dense<0.000000e+00> : vector<32xf32>
    %33 = vector.multi_reduction <add>, %32, %cst_26 [0] : vector<64x32xf32> to vector<32xf32>
    %34 = vector.shape_cast %33 : vector<32xf32> to vector<1x32xf32>
    %35 = arith.addf %31, %34 : vector<1x32xf32>
    %c0_27 = arith.constant 0 : index
    %c0_28 = arith.constant 0 : index
    %c0_29 = arith.constant 0 : index
    %36 = vector.load %arg9[%c0_27, %c0_28, %c0_29] : memref<1x1x32xf32, #tpu.memory_space<vmem>>, vector<1x1x32xf32>
    %37 = vector.shape_cast %36 : vector<1x1x32xf32> to vector<1x32xf32>
    %38 = vector.shape_cast %35 : vector<1x32xf32> to vector<1x1x32xf32>
    tpu.vector_store %arg9[%c0_27, %c0_28, %c0_29], %38 {strides = array<i32>} : memref<1x1x32xf32, #tpu.memory_space<vmem>>, vector<1x1x32xf32>,
    return
  }
  func.func @transform_0(%arg0: i32, %arg1: i32) -> (i32, i32, i32) {
    %c0_i32 = arith.constant 0 : i32
    %c0_i32_0 = arith.constant 0 : i32
    return %arg0, %arg1, %c0_i32 : i32, i32, i32
  }
  func.func @transform_1(%arg0: i32, %arg1: i32) -> (i32, i32) {
    %c0_i32 = arith.constant 0 : i32
    %c0_i32_0 = arith.constant 0 : i32
    %c0_i32_1 = arith.constant 0 : i32
    return %c0_i32, %c0_i32_0 : i32, i32
  }
  func.func @transform_2(%arg0: i32, %arg1: i32) -> (i32, i32) {
    %c0_i32 = arith.constant 0 : i32
    %c0_i32_0 = arith.constant 0 : i32
    %c0_i32_1 = arith.constant 0 : i32
    return %c0_i32, %c0_i32_0 : i32, i32
  }
  func.func @transform_3(%arg0: i32, %arg1: i32) -> (i32, i32) {
    %c0_i32 = arith.constant 0 : i32
    %c0_i32_0 = arith.constant 0 : i32
    %c0_i32_1 = arith.constant 0 : i32
    return %c0_i32, %c0_i32_0 : i32, i32
  }
  func.func @transform_4(%arg0: i32, %arg1: i32) -> (i32, i32) {
    %c0_i32 = arith.constant 0 : i32
    %c0_i32_0 = arith.constant 0 : i32
    %c0_i32_1 = arith.constant 0 : i32
    return %c0_i32, %c0_i32_0 : i32, i32
  }
  func.func @transform_5(%arg0: i32, %arg1: i32) -> (i32, i32, i32) {
    %c0_i32 = arith.constant 0 : i32
    %c0_i32_0 = arith.constant 0 : i32
    return %arg0, %arg1, %c0_i32 : i32, i32, i32
  }
  func.func @transform_6(%arg0: i32, %arg1: i32) -> (i32, i32, i32) {
    %c0_i32 = arith.constant 0 : i32
    %c0_i32_0 = arith.constant 0 : i32
    %c0_i32_1 = arith.constant 0 : i32
    return %arg0, %c0_i32, %c0_i32_0 : i32, i32, i32
  }
  func.func @transform_7(%arg0: i32, %arg1: i32) -> (i32, i32, i32) {
    %c0_i32 = arith.constant 0 : i32
    %c0_i32_0 = arith.constant 0 : i32
    %c0_i32_1 = arith.constant 0 : i32
    return %arg0, %c0_i32, %c0_i32_0 : i32, i32, i32
  }
}

module attributes {stable_mosaic.version = 11 : i64} {
  func.func @_reweight_kernel(%arg0: i32, %arg1: memref<1x1x16xf32, #tpu.memory_space<vmem>>, %arg2: memref<1x1x16xf32, #tpu.memory_space<vmem>>, %arg3: memref<1x1x16xf32, #tpu.memory_space<vmem>>, %arg4: memref<16x16xf32, #tpu.memory_space<vmem>>, %arg5: memref<1x16xf32, #tpu.memory_space<vmem>>, %arg6: memref<16x4xf32, #tpu.memory_space<vmem>>, %arg7: memref<1x4xf32, #tpu.memory_space<vmem>>, %arg8: memref<4x48xf32, #tpu.memory_space<vmem>>, %arg9: memref<1x48xf32, #tpu.memory_space<vmem>>, %arg10: memref<1x3x16xf32, #tpu.memory_space<vmem>>) attributes {dimension_semantics = [#tpu.dimension_semantics<parallel>], iteration_bounds = array<i64: 2>, scalar_prefetch = 0 : i64, scratch_operands = 0 : i64, tpu.core_type = #tpu.core_type<tc>, window_params = [{transform_indices = @transform_0, window_bounds = array<i64: 1, 1, 16>}, {transform_indices = @transform_1, window_bounds = array<i64: 1, 1, 16>}, {transform_indices = @transform_2, window_bounds = array<i64: 1, 1, 16>}, {pipeline_mode = #tpu.pipeline_mode<synchronous>, transform_indices = @transform_3, window_bounds = array<i64: 16, 16>}, {pipeline_mode = #tpu.pipeline_mode<synchronous>, transform_indices = @transform_4, window_bounds = array<i64: 1, 16>}, {pipeline_mode = #tpu.pipeline_mode<synchronous>, transform_indices = @transform_5, window_bounds = array<i64: 16, 4>}, {pipeline_mode = #tpu.pipeline_mode<synchronous>, transform_indices = @transform_6, window_bounds = array<i64: 1, 4>}, {pipeline_mode = #tpu.pipeline_mode<synchronous>, transform_indices = @transform_7, window_bounds = array<i64: 4, 48>}, {pipeline_mode = #tpu.pipeline_mode<synchronous>, transform_indices = @transform_8, window_bounds = array<i64: 1, 48>}, {transform_indices = @transform_9, window_bounds = array<i64: 1, 3, 16>}]} {
    %c0 = arith.constant 0 : index
    %c0_0 = arith.constant 0 : index
    %c0_1 = arith.constant 0 : index
    %0 = vector.load %arg1[%c0, %c0_0, %c0_1] : memref<1x1x16xf32, #tpu.memory_space<vmem>>, vector<1x1x16xf32>
    %1 = vector.shape_cast %0 : vector<1x1x16xf32> to vector<1x16xf32>
    %c0_2 = arith.constant 0 : index
    %c0_3 = arith.constant 0 : index
    %c0_4 = arith.constant 0 : index
    %2 = vector.load %arg2[%c0_2, %c0_3, %c0_4] : memref<1x1x16xf32, #tpu.memory_space<vmem>>, vector<1x1x16xf32>
    %3 = vector.shape_cast %2 : vector<1x1x16xf32> to vector<1x16xf32>
    %c0_5 = arith.constant 0 : index
    %c0_6 = arith.constant 0 : index
    %c0_7 = arith.constant 0 : index
    %4 = vector.load %arg3[%c0_5, %c0_6, %c0_7] : memref<1x1x16xf32, #tpu.memory_space<vmem>>, vector<1x1x16xf32>
    %5 = vector.shape_cast %4 : vector<1x1x16xf32> to vector<1x16xf32>
    %c0_8 = arith.constant 0 : index
    %c0_9 = arith.constant 0 : index
    %6 = vector.load %arg4[%c0_8, %c0_9] : memref<16x16xf32, #tpu.memory_space<vmem>>, vector<16x16xf32>
    %cst = arith.constant dense<0.000000e+00> : vector<1x16xf32>
    %7 = tpu.matmul %5, %6, %cst {dimension_numbers = #tpu.dot_dimension_numbers<[1], [0], [0], [1], [0, 0, 1, 1], [], []>} : vector<1x16xf32>, vector<16x16xf32>, vector<1x16xf32> -> vector<1x16xf32>
    %c0_10 = arith.constant 0 : index
    %c0_11 = arith.constant 0 : index
    %8 = vector.load %arg5[%c0_10, %c0_11] : memref<1x16xf32, #tpu.memory_space<vmem>>, vector<1x16xf32>
    %9 = arith.addf %7, %8 : vector<1x16xf32>
    %10 = arith.addf %1, %3 : vector<1x16xf32>
    %11 = arith.addf %10, %9 : vector<1x16xf32>
    %c0_12 = arith.constant 0 : index
    %c0_13 = arith.constant 0 : index
    %12 = vector.load %arg6[%c0_12, %c0_13] : memref<16x4xf32, #tpu.memory_space<vmem>>, vector<16x4xf32>
    %cst_14 = arith.constant dense<0.000000e+00> : vector<1x4xf32>
    %13 = tpu.matmul %11, %12, %cst_14 {dimension_numbers = #tpu.dot_dimension_numbers<[1], [0], [0], [1], [0, 0, 1, 1], [], []>} : vector<1x16xf32>, vector<16x4xf32>, vector<1x4xf32> -> vector<1x4xf32>
    %c0_15 = arith.constant 0 : index
    %c0_16 = arith.constant 0 : index
    %14 = vector.load %arg7[%c0_15, %c0_16] : memref<1x4xf32, #tpu.memory_space<vmem>>, vector<1x4xf32>
    %15 = arith.addf %13, %14 : vector<1x4xf32>
    %cst_17 = arith.constant 5.000000e-01 : f32
    %16 = vector.broadcast %cst_17 : f32 to vector<1x4xf32>
    %17 = arith.mulf %16, %15 : vector<1x4xf32>
    %cst_18 = arith.constant 4.471500e-02 : f32
    %18 = vector.broadcast %cst_18 : f32 to vector<1x4xf32>
    %19 = arith.mulf %18, %15 : vector<1x4xf32>
    %20 = arith.mulf %19, %15 : vector<1x4xf32>
    %21 = arith.mulf %20, %15 : vector<1x4xf32>
    %22 = arith.addf %15, %21 : vector<1x4xf32>
    %cst_19 = arith.constant 0.797884583 : f32
    %23 = vector.broadcast %cst_19 : f32 to vector<1x4xf32>
    %24 = arith.mulf %23, %22 : vector<1x4xf32>
    %25 = math.tanh %24 : vector<1x4xf32>
    %cst_20 = arith.constant 1.000000e+00 : f32
    %26 = vector.broadcast %cst_20 : f32 to vector<1x4xf32>
    %27 = arith.addf %26, %25 : vector<1x4xf32>
    %28 = arith.mulf %17, %27 : vector<1x4xf32>
    %c0_21 = arith.constant 0 : index
    %c0_22 = arith.constant 0 : index
    %29 = vector.load %arg8[%c0_21, %c0_22] : memref<4x48xf32, #tpu.memory_space<vmem>>, vector<4x48xf32>
    %cst_23 = arith.constant dense<0.000000e+00> : vector<1x48xf32>
    %30 = tpu.matmul %28, %29, %cst_23 {dimension_numbers = #tpu.dot_dimension_numbers<[1], [0], [0], [1], [0, 0, 1, 1], [], []>} : vector<1x4xf32>, vector<4x48xf32>, vector<1x48xf32> -> vector<1x48xf32>
    %c0_24 = arith.constant 0 : index
    %c0_25 = arith.constant 0 : index
    %31 = vector.load %arg9[%c0_24, %c0_25] : memref<1x48xf32, #tpu.memory_space<vmem>>, vector<1x48xf32>
    %32 = arith.addf %30, %31 : vector<1x48xf32>
    %33 = vector.extract_strided_slice %32 {offsets = [0, 0], sizes = [1, 16], strides = [1, 1]} : vector<1x48xf32> to vector<1x16xf32>
    %34 = vector.extract_strided_slice %32 {offsets = [0, 16], sizes = [1, 16], strides = [1, 1]} : vector<1x48xf32> to vector<1x16xf32>
    %35 = vector.extract_strided_slice %32 {offsets = [0, 32], sizes = [1, 16], strides = [1, 1]} : vector<1x48xf32> to vector<1x16xf32>
    %36 = arith.maximumf %33, %34 : vector<1x16xf32>
    %37 = arith.maximumf %36, %35 : vector<1x16xf32>
    %38 = arith.subf %33, %37 : vector<1x16xf32>
    %39 = math.exp %38 : vector<1x16xf32>
    %40 = arith.subf %34, %37 : vector<1x16xf32>
    %41 = math.exp %40 : vector<1x16xf32>
    %42 = arith.subf %35, %37 : vector<1x16xf32>
    %43 = math.exp %42 : vector<1x16xf32>
    %44 = arith.addf %39, %41 : vector<1x16xf32>
    %45 = arith.addf %44, %43 : vector<1x16xf32>
    %cst_26 = arith.constant 1.000000e+00 : f32
    %46 = vector.broadcast %cst_26 : f32 to vector<1x16xf32>
    %47 = arith.divf %46, %45 : vector<1x16xf32>
    %48 = arith.mulf %39, %47 : vector<1x16xf32>
    %49 = arith.mulf %41, %47 : vector<1x16xf32>
    %50 = arith.mulf %43, %47 : vector<1x16xf32>
    %51 = tpu.concatenate %48, %49, %50 in 0 : vector<1x16xf32>, vector<1x16xf32>, vector<1x16xf32> -> vector<3x16xf32>
    %c0_27 = arith.constant 0 : index
    %c0_28 = arith.constant 0 : index
    %c0_29 = arith.constant 0 : index
    %52 = vector.load %arg10[%c0_27, %c0_28, %c0_29] : memref<1x3x16xf32, #tpu.memory_space<vmem>>, vector<1x3x16xf32>
    %53 = vector.shape_cast %52 : vector<1x3x16xf32> to vector<3x16xf32>
    %54 = vector.shape_cast %51 : vector<3x16xf32> to vector<1x3x16xf32>
    tpu.vector_store %arg10[%c0_27, %c0_28, %c0_29], %54 {strides = array<i32>} : memref<1x3x16xf32, #tpu.memory_space<vmem>>, vector<1x3x16xf32>,
    return
  }
  func.func @transform_0(%arg0: i32) -> (i32, i32, i32) {
    %c0_i32 = arith.constant 0 : i32
    %c0_i32_0 = arith.constant 0 : i32
    %c0_i32_1 = arith.constant 0 : i32
    return %arg0, %c0_i32, %c0_i32_0 : i32, i32, i32
  }
  func.func @transform_1(%arg0: i32) -> (i32, i32, i32) {
    %c0_i32 = arith.constant 0 : i32
    %c0_i32_0 = arith.constant 0 : i32
    %c0_i32_1 = arith.constant 0 : i32
    return %arg0, %c0_i32, %c0_i32_0 : i32, i32, i32
  }
  func.func @transform_2(%arg0: i32) -> (i32, i32, i32) {
    %c0_i32 = arith.constant 0 : i32
    %c0_i32_0 = arith.constant 0 : i32
    %c0_i32_1 = arith.constant 0 : i32
    return %arg0, %c0_i32, %c0_i32_0 : i32, i32, i32
  }
  func.func @transform_3(%arg0: i32) -> (i32, i32) {
    %c0_i32 = arith.constant 0 : i32
    %c0_i32_0 = arith.constant 0 : i32
    %c0_i32_1 = arith.constant 0 : i32
    return %c0_i32, %c0_i32_0 : i32, i32
  }
  func.func @transform_4(%arg0: i32) -> (i32, i32) {
    %c0_i32 = arith.constant 0 : i32
    %c0_i32_0 = arith.constant 0 : i32
    %c0_i32_1 = arith.constant 0 : i32
    return %c0_i32, %c0_i32_0 : i32, i32
  }
  func.func @transform_5(%arg0: i32) -> (i32, i32) {
    %c0_i32 = arith.constant 0 : i32
    %c0_i32_0 = arith.constant 0 : i32
    %c0_i32_1 = arith.constant 0 : i32
    return %c0_i32, %c0_i32_0 : i32, i32
  }
  func.func @transform_6(%arg0: i32) -> (i32, i32) {
    %c0_i32 = arith.constant 0 : i32
    %c0_i32_0 = arith.constant 0 : i32
    %c0_i32_1 = arith.constant 0 : i32
    return %c0_i32, %c0_i32_0 : i32, i32
  }
  func.func @transform_7(%arg0: i32) -> (i32, i32) {
    %c0_i32 = arith.constant 0 : i32
    %c0_i32_0 = arith.constant 0 : i32
    %c0_i32_1 = arith.constant 0 : i32
    return %c0_i32, %c0_i32_0 : i32, i32
  }
  func.func @transform_8(%arg0: i32) -> (i32, i32) {
    %c0_i32 = arith.constant 0 : i32
    %c0_i32_0 = arith.constant 0 : i32
    %c0_i32_1 = arith.constant 0 : i32
    return %c0_i32, %c0_i32_0 : i32, i32
  }
  func.func @transform_9(%arg0: i32) -> (i32, i32, i32) {
    %c0_i32 = arith.constant 0 : i32
    %c0_i32_0 = arith.constant 0 : i32
    %c0_i32_1 = arith.constant 0 : i32
    return %arg0, %c0_i32, %c0_i32_0 : i32, i32, i32
  }
}

module attributes {stable_mosaic.version = 11 : i64} {
  func.func @_combine_kernel(%arg0: i32, %arg1: i32, %arg2: memref<1x128x16xbf16, #tpu.memory_space<vmem>>, %arg3: memref<1x128x16xbf16, #tpu.memory_space<vmem>>, %arg4: memref<1x128x16xbf16, #tpu.memory_space<vmem>>, %arg5: memref<1x3x16xf32, #tpu.memory_space<vmem>>, %arg6: memref<16x16xbf16, #tpu.memory_space<vmem>>, %arg7: memref<1x16xf32, #tpu.memory_space<vmem>>, %arg8: memref<16x16xbf16, #tpu.memory_space<vmem>>, %arg9: memref<1x16xf32, #tpu.memory_space<vmem>>, %arg10: memref<1x128x16xbf16, #tpu.memory_space<vmem>>) attributes {dimension_semantics = [#tpu.dimension_semantics<parallel>, #tpu.dimension_semantics<parallel>], iteration_bounds = array<i64: 2, 2>, scalar_prefetch = 0 : i64, scratch_operands = 0 : i64, tpu.core_type = #tpu.core_type<tc>, window_params = [{transform_indices = @transform_0, window_bounds = array<i64: 1, 128, 16>}, {transform_indices = @transform_1, window_bounds = array<i64: 1, 128, 16>}, {transform_indices = @transform_2, window_bounds = array<i64: 1, 128, 16>}, {transform_indices = @transform_3, window_bounds = array<i64: 1, 3, 16>}, {pipeline_mode = #tpu.pipeline_mode<synchronous>, transform_indices = @transform_4, window_bounds = array<i64: 16, 16>}, {pipeline_mode = #tpu.pipeline_mode<synchronous>, transform_indices = @transform_5, window_bounds = array<i64: 1, 16>}, {pipeline_mode = #tpu.pipeline_mode<synchronous>, transform_indices = @transform_6, window_bounds = array<i64: 16, 16>}, {pipeline_mode = #tpu.pipeline_mode<synchronous>, transform_indices = @transform_7, window_bounds = array<i64: 1, 16>}, {transform_indices = @transform_8, window_bounds = array<i64: 1, 128, 16>}]} {
    %c0 = arith.constant 0 : index
    %c0_0 = arith.constant 0 : index
    %c0_1 = arith.constant 0 : index
    %0 = vector.load %arg4[%c0, %c0_0, %c0_1] : memref<1x128x16xbf16, #tpu.memory_space<vmem>>, vector<1x128x16xbf16>
    %1 = vector.shape_cast %0 : vector<1x128x16xbf16> to vector<128x16xbf16>
    %c0_2 = arith.constant 0 : index
    %c0_3 = arith.constant 0 : index
    %c0_4 = arith.constant 0 : index
    %2 = vector.load %arg5[%c0_2, %c0_3, %c0_4] : memref<1x3x16xf32, #tpu.memory_space<vmem>>, vector<1x3x16xf32>
    %3 = vector.shape_cast %2 : vector<1x3x16xf32> to vector<3x16xf32>
    %c0_5 = arith.constant 0 : index
    %c0_6 = arith.constant 0 : index
    %4 = vector.load %arg6[%c0_5, %c0_6] : memref<16x16xbf16, #tpu.memory_space<vmem>>, vector<16x16xbf16>
    %5 = arith.extf %4 : vector<16x16xbf16> to vector<16x16xf32>
    %6 = vector.extract_strided_slice %3 {offsets = [2, 0], sizes = [1, 16], strides = [1, 1]} : vector<3x16xf32> to vector<1x16xf32>
    %7 = vector.broadcast %6 : vector<1x16xf32> to vector<16x16xf32>
    %8 = arith.mulf %5, %7 : vector<16x16xf32>
    %9 = arith.truncf %8 : vector<16x16xf32> to vector<16x16xbf16>
    %c0_7 = arith.constant 0 : index
    %c0_8 = arith.constant 0 : index
    %10 = vector.load %arg7[%c0_7, %c0_8] : memref<1x16xf32, #tpu.memory_space<vmem>>, vector<1x16xf32>
    %11 = vector.extract_strided_slice %3 {offsets = [2, 0], sizes = [1, 16], strides = [1, 1]} : vector<3x16xf32> to vector<1x16xf32>
    %12 = arith.mulf %10, %11 : vector<1x16xf32>
    %c0_9 = arith.constant 0 : index
    %c0_10 = arith.constant 0 : index
    %c0_11 = arith.constant 0 : index
    %13 = vector.load %arg2[%c0_9, %c0_10, %c0_11] : memref<1x128x16xbf16, #tpu.memory_space<vmem>>, vector<1x128x16xbf16>
    %14 = vector.shape_cast %13 : vector<1x128x16xbf16> to vector<128x16xbf16>
    %15 = arith.extf %14 : vector<128x16xbf16> to vector<128x16xf32>
    %16 = vector.extract_strided_slice %3 {offsets = [0, 0], sizes = [1, 16], strides = [1, 1]} : vector<3x16xf32> to vector<1x16xf32>
    %17 = vector.broadcast %16 : vector<1x16xf32> to vector<128x16xf32>
    %18 = arith.mulf %15, %17 : vector<128x16xf32>
    %c0_12 = arith.constant 0 : index
    %c0_13 = arith.constant 0 : index
    %c0_14 = arith.constant 0 : index
    %19 = vector.load %arg3[%c0_12, %c0_13, %c0_14] : memref<1x128x16xbf16, #tpu.memory_space<vmem>>, vector<1x128x16xbf16>
    %20 = vector.shape_cast %19 : vector<1x128x16xbf16> to vector<128x16xbf16>
    %21 = arith.extf %20 : vector<128x16xbf16> to vector<128x16xf32>
    %22 = vector.extract_strided_slice %3 {offsets = [1, 0], sizes = [1, 16], strides = [1, 1]} : vector<3x16xf32> to vector<1x16xf32>
    %23 = vector.broadcast %22 : vector<1x16xf32> to vector<128x16xf32>
    %24 = arith.mulf %21, %23 : vector<128x16xf32>
    %25 = arith.addf %18, %24 : vector<128x16xf32>
    %cst = arith.constant dense<0.000000e+00> : vector<128x16xf32>
    %26 = tpu.matmul %1, %9, %cst {dimension_numbers = #tpu.dot_dimension_numbers<[1], [0], [0], [1], [0, 0, 1, 1], [], []>} : vector<128x16xbf16>, vector<16x16xbf16>, vector<128x16xf32> -> vector<128x16xf32>
    %27 = arith.addf %25, %26 : vector<128x16xf32>
    %28 = vector.broadcast %12 : vector<1x16xf32> to vector<128x16xf32>
    %29 = arith.addf %27, %28 : vector<128x16xf32>
    %30 = arith.truncf %29 : vector<128x16xf32> to vector<128x16xbf16>
    %c0_15 = arith.constant 0 : index
    %c0_16 = arith.constant 0 : index
    %31 = vector.load %arg8[%c0_15, %c0_16] : memref<16x16xbf16, #tpu.memory_space<vmem>>, vector<16x16xbf16>
    %cst_17 = arith.constant dense<0.000000e+00> : vector<128x16xf32>
    %32 = tpu.matmul %30, %31, %cst_17 {dimension_numbers = #tpu.dot_dimension_numbers<[1], [0], [0], [1], [0, 0, 1, 1], [], []>} : vector<128x16xbf16>, vector<16x16xbf16>, vector<128x16xf32> -> vector<128x16xf32>
    %c0_18 = arith.constant 0 : index
    %c0_19 = arith.constant 0 : index
    %33 = vector.load %arg9[%c0_18, %c0_19] : memref<1x16xf32, #tpu.memory_space<vmem>>, vector<1x16xf32>
    %34 = vector.broadcast %33 : vector<1x16xf32> to vector<128x16xf32>
    %35 = arith.addf %32, %34 : vector<128x16xf32>
    %36 = arith.extf %1 : vector<128x16xbf16> to vector<128x16xf32>
    %37 = arith.addf %36, %35 : vector<128x16xf32>
    %38 = arith.truncf %37 : vector<128x16xf32> to vector<128x16xbf16>
    %c0_20 = arith.constant 0 : index
    %c0_21 = arith.constant 0 : index
    %c0_22 = arith.constant 0 : index
    %39 = vector.load %arg10[%c0_20, %c0_21, %c0_22] : memref<1x128x16xbf16, #tpu.memory_space<vmem>>, vector<1x128x16xbf16>
    %40 = vector.shape_cast %39 : vector<1x128x16xbf16> to vector<128x16xbf16>
    %41 = vector.shape_cast %38 : vector<128x16xbf16> to vector<1x128x16xbf16>
    tpu.vector_store %arg10[%c0_20, %c0_21, %c0_22], %41 {strides = array<i32>} : memref<1x128x16xbf16, #tpu.memory_space<vmem>>, vector<1x128x16xbf16>,
    return
  }
  func.func @transform_0(%arg0: i32, %arg1: i32) -> (i32, i32, i32) {
    %c0_i32 = arith.constant 0 : i32
    %c0_i32_0 = arith.constant 0 : i32
    return %arg0, %arg1, %c0_i32 : i32, i32, i32
  }
  func.func @transform_1(%arg0: i32, %arg1: i32) -> (i32, i32, i32) {
    %c0_i32 = arith.constant 0 : i32
    %c0_i32_0 = arith.constant 0 : i32
    return %arg0, %arg1, %c0_i32 : i32, i32, i32
  }
  func.func @transform_2(%arg0: i32, %arg1: i32) -> (i32, i32, i32) {
    %c0_i32 = arith.constant 0 : i32
    %c0_i32_0 = arith.constant 0 : i32
    return %arg0, %arg1, %c0_i32 : i32, i32, i32
  }
  func.func @transform_3(%arg0: i32, %arg1: i32) -> (i32, i32, i32) {
    %c0_i32 = arith.constant 0 : i32
    %c0_i32_0 = arith.constant 0 : i32
    %c0_i32_1 = arith.constant 0 : i32
    return %arg0, %c0_i32, %c0_i32_0 : i32, i32, i32
  }
  func.func @transform_4(%arg0: i32, %arg1: i32) -> (i32, i32) {
    %c0_i32 = arith.constant 0 : i32
    %c0_i32_0 = arith.constant 0 : i32
    %c0_i32_1 = arith.constant 0 : i32
    return %c0_i32, %c0_i32_0 : i32, i32
  }
  func.func @transform_5(%arg0: i32, %arg1: i32) -> (i32, i32) {
    %c0_i32 = arith.constant 0 : i32
    %c0_i32_0 = arith.constant 0 : i32
    %c0_i32_1 = arith.constant 0 : i32
    return %c0_i32, %c0_i32_0 : i32, i32
  }
  func.func @transform_6(%arg0: i32, %arg1: i32) -> (i32, i32) {
    %c0_i32 = arith.constant 0 : i32
    %c0_i32_0 = arith.constant 0 : i32
    %c0_i32_1 = arith.constant 0 : i32
    return %c0_i32, %c0_i32_0 : i32, i32
  }
  func.func @transform_7(%arg0: i32, %arg1: i32) -> (i32, i32) {
    %c0_i32 = arith.constant 0 : i32
    %c0_i32_0 = arith.constant 0 : i32
    %c0_i32_1 = arith.constant 0 : i32
    return %c0_i32, %c0_i32_0 : i32, i32
  }
  func.func @transform_8(%arg0: i32, %arg1: i32) -> (i32, i32, i32) {
    %c0_i32 = arith.constant 0 : i32
    %c0_i32_0 = arith.constant 0 : i32
    return %arg0, %arg1, %c0_i32 : i32, i32, i32
  }
}

module attributes {stable_mosaic.version = 11 : i64} {
  func.func @_mlp_kernel(%arg0: i32, %arg1: memref<256x16xbf16, #tpu.memory_space<vmem>>, %arg2: memref<16x64xbf16, #tpu.memory_space<vmem>>, %arg3: memref<1x64xf32, #tpu.memory_space<vmem>>, %arg4: memref<64x16xbf16, #tpu.memory_space<vmem>>, %arg5: memref<1x16xf32, #tpu.memory_space<vmem>>, %arg6: memref<256x16xf32, #tpu.memory_space<vmem>>) attributes {dimension_semantics = [#tpu.dimension_semantics<parallel>], iteration_bounds = array<i64: 2>, scalar_prefetch = 0 : i64, scratch_operands = 0 : i64, tpu.core_type = #tpu.core_type<tc>, window_params = [{transform_indices = @transform_0, window_bounds = array<i64: 256, 16>}, {pipeline_mode = #tpu.pipeline_mode<synchronous>, transform_indices = @transform_1, window_bounds = array<i64: 16, 64>}, {pipeline_mode = #tpu.pipeline_mode<synchronous>, transform_indices = @transform_2, window_bounds = array<i64: 1, 64>}, {pipeline_mode = #tpu.pipeline_mode<synchronous>, transform_indices = @transform_3, window_bounds = array<i64: 64, 16>}, {pipeline_mode = #tpu.pipeline_mode<synchronous>, transform_indices = @transform_4, window_bounds = array<i64: 1, 16>}, {transform_indices = @transform_5, window_bounds = array<i64: 256, 16>}]} {
    %c0 = arith.constant 0 : index
    %c0_0 = arith.constant 0 : index
    %0 = vector.load %arg1[%c0, %c0_0] : memref<256x16xbf16, #tpu.memory_space<vmem>>, vector<256x16xbf16>
    %c0_1 = arith.constant 0 : index
    %c0_2 = arith.constant 0 : index
    %1 = vector.load %arg2[%c0_1, %c0_2] : memref<16x64xbf16, #tpu.memory_space<vmem>>, vector<16x64xbf16>
    %cst = arith.constant dense<0.000000e+00> : vector<256x64xf32>
    %2 = tpu.matmul %0, %1, %cst {dimension_numbers = #tpu.dot_dimension_numbers<[1], [0], [0], [1], [0, 0, 1, 1], [], []>} : vector<256x16xbf16>, vector<16x64xbf16>, vector<256x64xf32> -> vector<256x64xf32>
    %c0_3 = arith.constant 0 : index
    %c0_4 = arith.constant 0 : index
    %3 = vector.load %arg3[%c0_3, %c0_4] : memref<1x64xf32, #tpu.memory_space<vmem>>, vector<1x64xf32>
    %4 = vector.broadcast %3 : vector<1x64xf32> to vector<256x64xf32>
    %5 = arith.addf %2, %4 : vector<256x64xf32>
    %cst_5 = arith.constant 5.000000e-01 : f32
    %6 = vector.broadcast %cst_5 : f32 to vector<256x64xf32>
    %7 = arith.mulf %6, %5 : vector<256x64xf32>
    %cst_6 = arith.constant 4.471500e-02 : f32
    %8 = vector.broadcast %cst_6 : f32 to vector<256x64xf32>
    %9 = arith.mulf %8, %5 : vector<256x64xf32>
    %10 = arith.mulf %9, %5 : vector<256x64xf32>
    %11 = arith.mulf %10, %5 : vector<256x64xf32>
    %12 = arith.addf %5, %11 : vector<256x64xf32>
    %cst_7 = arith.constant 0.797884583 : f32
    %13 = vector.broadcast %cst_7 : f32 to vector<256x64xf32>
    %14 = arith.mulf %13, %12 : vector<256x64xf32>
    %15 = math.tanh %14 : vector<256x64xf32>
    %cst_8 = arith.constant 1.000000e+00 : f32
    %16 = vector.broadcast %cst_8 : f32 to vector<256x64xf32>
    %17 = arith.addf %16, %15 : vector<256x64xf32>
    %18 = arith.mulf %7, %17 : vector<256x64xf32>
    %19 = arith.truncf %18 : vector<256x64xf32> to vector<256x64xbf16>
    %c0_9 = arith.constant 0 : index
    %c0_10 = arith.constant 0 : index
    %20 = vector.load %arg4[%c0_9, %c0_10] : memref<64x16xbf16, #tpu.memory_space<vmem>>, vector<64x16xbf16>
    %cst_11 = arith.constant dense<0.000000e+00> : vector<256x16xf32>
    %21 = tpu.matmul %19, %20, %cst_11 {dimension_numbers = #tpu.dot_dimension_numbers<[1], [0], [0], [1], [0, 0, 1, 1], [], []>} : vector<256x64xbf16>, vector<64x16xbf16>, vector<256x16xf32> -> vector<256x16xf32>
    %c0_12 = arith.constant 0 : index
    %c0_13 = arith.constant 0 : index
    %22 = vector.load %arg5[%c0_12, %c0_13] : memref<1x16xf32, #tpu.memory_space<vmem>>, vector<1x16xf32>
    %23 = vector.broadcast %22 : vector<1x16xf32> to vector<256x16xf32>
    %24 = arith.addf %21, %23 : vector<256x16xf32>
    %25 = arith.extf %0 : vector<256x16xbf16> to vector<256x16xf32>
    %26 = arith.addf %25, %24 : vector<256x16xf32>
    %c0_14 = arith.constant 0 : index
    %c0_15 = arith.constant 0 : index
    %27 = vector.load %arg6[%c0_14, %c0_15] : memref<256x16xf32, #tpu.memory_space<vmem>>, vector<256x16xf32>
    tpu.vector_store %arg6[%c0_14, %c0_15], %26 {strides = array<i32>} : memref<256x16xf32, #tpu.memory_space<vmem>>, vector<256x16xf32>,
    return
  }
  func.func @transform_0(%arg0: i32) -> (i32, i32) {
    %c0_i32 = arith.constant 0 : i32
    %c0_i32_0 = arith.constant 0 : i32
    return %arg0, %c0_i32 : i32, i32
  }
  func.func @transform_1(%arg0: i32) -> (i32, i32) {
    %c0_i32 = arith.constant 0 : i32
    %c0_i32_0 = arith.constant 0 : i32
    %c0_i32_1 = arith.constant 0 : i32
    return %c0_i32, %c0_i32_0 : i32, i32
  }
  func.func @transform_2(%arg0: i32) -> (i32, i32) {
    %c0_i32 = arith.constant 0 : i32
    %c0_i32_0 = arith.constant 0 : i32
    %c0_i32_1 = arith.constant 0 : i32
    return %c0_i32, %c0_i32_0 : i32, i32
  }
  func.func @transform_3(%arg0: i32) -> (i32, i32) {
    %c0_i32 = arith.constant 0 : i32
    %c0_i32_0 = arith.constant 0 : i32
    %c0_i32_1 = arith.constant 0 : i32
    return %c0_i32, %c0_i32_0 : i32, i32
  }
  func.func @transform_4(%arg0: i32) -> (i32, i32) {
    %c0_i32 = arith.constant 0 : i32
    %c0_i32_0 = arith.constant 0 : i32
    %c0_i32_1 = arith.constant 0 : i32
    return %c0_i32, %c0_i32_0 : i32, i32
  }
  func.func @transform_5(%arg0: i32) -> (i32, i32) {
    %c0_i32 = arith.constant 0 : i32
    %c0_i32_0 = arith.constant 0 : i32
    return %arg0, %c0_i32 : i32, i32
  }
}

</mosaic_0001>

<llo_original>
// kernel: hire_block_forward.5
$region0: #{hire_block_forward.5}
  #allocation0 [shape = 'u32[]', space=smem, size = 0x4, offset = 0x4, fixed_abs, tag = 'smem constant byte address 0x4 - core index']
  #allocation1 [shape = 'u32[144,128]{1,0:T(1,128)}', space=vmem, size = 0x12000, scoped, tag = 'internal scratch']
  %s0 = inlined_call_operand.vmem [shape: bf16[2,128,32], index: 0, kind: input, shape index: {}, may-alias: {0,5}]
  %s1 = inlined_call_operand.vmem [shape: bf16[32,8], index: 1, kind: input, shape index: {}]
  %s2 = inlined_call_operand.vmem [shape: f32[1,8], index: 2, kind: input, shape index: {}]
  %s3 = inlined_call_operand.vmem [shape: bf16[8,32], index: 3, kind: input, shape index: {}]
  %s4 = inlined_call_operand.vmem [shape: f32[1,32], index: 4, kind: input, shape index: {}]
  %s5 = inlined_call_operand.vmem [shape: bf16[2,128,32], index: 5, kind: output, shape index: {0}, may-alias: {0,5}]
  %s6 = inlined_call_operand.vmem [shape: f32[2,1,32], index: 6, kind: output, shape index: {1}]
  %s7 = inlined_call_operand.vmem [shape: f32[2,1,32], index: 7, kind: output, shape index: {2}]
  %8 = xla_tuple %s5, %s6, %s7
  %s9 = sld [smem:[#allocation0]]
  $region73: #{hire_block_forward.5} parent=0
    _
  %s11 = ssub.s32 1, %s9
  %s12 = scalar_select 0, %s11, %s9
  loop: start=0, step=1, limit=6
  $region2: #{hire_block_forward.5} parent=0 // loop_pre_header
    _
  $region3: #{hire_block_forward.5} parent=0 // loop_header
    %s14 = sphi 0, %s18
    %p15 = scmp.ge.s32.totalorder %s14, 6
    %s21 = sphi 0, %s33
    %s22 = sphi 0, %s29
    %s23 = sphi 0, %s21
    %s24 = sphi 0, %s22
    %s25 = sphi 0, %s23
    %s26 = sphi 0, %s24
    %s38 = sphi 0, %s40
    %s41 = sphi 0, %s38
    %s42 = sphi 0, %s41
    %s58 = sphi 0, %s42
    %s62 = sphi 0, %s62
    %s64 = sphi 0, %s62
    %s65 = sphi 0, %s64
    %s79 = sphi 0, %s65
    %s83 = sphi 0, %s83
    %s85 = sphi 0, %s83
    %s86 = sphi 0, %s85
    %s100 = sphi 0, %s86
    %s104 = sphi 0, %s104
    %s106 = sphi 0, %s104
    %s107 = sphi 0, %s106
    %s121 = sphi 0, %s107
    %s125 = sphi 0, %s125
    %s127 = sphi 0, %s125
    %s128 = sphi 0, %s127
    %s142 = sphi 0, %s128
    %s150 = sphi 0, %s152
    %s153 = sphi 0, %s150
    %s154 = sphi 0, %s153
    %s170 = sphi 0, %s154
    %s176 = sphi 0, %s178
    %s179 = sphi 0, %s176
    %s180 = sphi 0, %s179
    %s196 = sphi 0, %s180
    %s202 = sphi 0, %s204
    %s205 = sphi 0, %s202
    %s206 = sphi 0, %s205
    %s222 = sphi 0, %s206
  $region4: #{hire_block_forward.5} parent=0 // loop_header_branch
    %17 = sbr.rel (%p15) target = $region8
  $region5: #{hire_block_forward.5} parent=0 // loop_body
    %s19 = ssub.s32 %s14, 1
    %s20 = ssub.s32 %s14, 2
    %s27 = sadd.s32 1, %s22
    %p28 = scmp.ge.s32.totalorder %s27, 2
    %s29 = scalar_select %p28, 0, %s27
    %s30 = sadd.s32 1, %s21
    %s31 = scalar_select %p28, %s30, %s21
    %p32 = scmp.ge.s32.totalorder %s31, 2
    %s33 = scalar_select %p32, 0, %s31
    %s34 = ssub.s32 %s21, %s33
    %s35 = ssub.s32 %s22, %s29
    %s36 = sor.u32 %s34, %s35
    %p37 = scmp.eq.s32.totalorder %s36, 0
    %s39 = sadd.s32 %s38, 1
    %s40 = scalar_select %p37, %s38, %s39
    %p43 = pneg %p37
    %p44 = scmp.eq.s32.totalorder %s14, 3
    %p45 = por %p43, %p44
    %p46 = scmp.ne.s32.totalorder %s38, %s41
    %p47 = scmp.eq.s32.totalorder %s14, 0
    %p48 = por %p46, %p47
    %p49 = scmp.ne.s32.totalorder %s38, %s41
    %p50 = scmp.eq.s32.totalorder %s19, 3
    %p51 = por %p49, %p50
    %p52 = scmp.ne.s32.totalorder %s41, %s42
    %p53 = scmp.eq.s32.totalorder %s19, 0
    %p54 = por %p52, %p53
    %p55 = scmp.ne.s32.totalorder %s41, %s42
    %p56 = scmp.eq.s32.totalorder %s20, 3
    %p57 = por %p55, %p56
    %p59 = scmp.ne.s32.totalorder %s42, %s58
    %p60 = scmp.eq.s32.totalorder %s20, 0
    %p61 = por %p59, %p60
    %s63 = sadd.s32 %s62, 1
    %p66 = scmp.eq.s32.totalorder %s14, 3
    %p67 = scmp.ne.s32.totalorder %s62, %s64
    %p68 = scmp.eq.s32.totalorder %s14, 0
    %p69 = por %p67, %p68
    %p70 = scmp.ne.s32.totalorder %s62, %s64
    %p71 = scmp.eq.s32.totalorder %s19, 3
    %p72 = por %p70, %p71
    %p73 = scmp.ne.s32.totalorder %s64, %s65
    %p74 = scmp.eq.s32.totalorder %s19, 0
    %p75 = por %p73, %p74
    %p76 = scmp.ne.s32.totalorder %s64, %s65
    %p77 = scmp.eq.s32.totalorder %s20, 3
    %p78 = por %p76, %p77
    %p80 = scmp.ne.s32.totalorder %s65, %s79
    %p81 = scmp.eq.s32.totalorder %s20, 0
    %p82 = por %p80, %p81
    %s84 = sadd.s32 %s83, 1
    %p87 = scmp.eq.s32.totalorder %s14, 3
    %p88 = scmp.ne.s32.totalorder %s83, %s85
    %p89 = scmp.eq.s32.totalorder %s14, 0
    %p90 = por %p88, %p89
    %p91 = scmp.ne.s32.totalorder %s83, %s85
    %p92 = scmp.eq.s32.totalorder %s19, 3
    %p93 = por %p91, %p92
    %p94 = scmp.ne.s32.totalorder %s85, %s86
    %p95 = scmp.eq.s32.totalorder %s19, 0
    %p96 = por %p94, %p95
    %p97 = scmp.ne.s32.totalorder %s85, %s86
    %p98 = scmp.eq.s32.totalorder %s20, 3
    %p99 = por %p97, %p98
    %p101 = scmp.ne.s32.totalorder %s86, %s100
    %p102 = scmp.eq.s32.totalorder %s20, 0
    %p103 = por %p101, %p102
    %s105 = sadd.s32 %s104, 1
    %p108 = scmp.eq.s32.totalorder %s14, 3
    %p109 = scmp.ne.s32.totalorder %s104, %s106
    %p110 = scmp.eq.s32.totalorder %s14, 0
    %p111 = por %p109, %p110
    %p112 = scmp.ne.s32.totalorder %s104, %s106
    %p113 = scmp.eq.s32.totalorder %s19, 3
    %p114 = por %p112, %p113
    %p115 = scmp.ne.s32.totalorder %s106, %s107
    %p116 = scmp.eq.s32.totalorder %s19, 0
    %p117 = por %p115, %p116
    %p118 = scmp.ne.s32.totalorder %s106, %s107
    %p119 = scmp.eq.s32.totalorder %s20, 3
    %p120 = por %p118, %p119
    %p122 = scmp.ne.s32.totalorder %s107, %s121
    %p123 = scmp.eq.s32.totalorder %s20, 0
    %p124 = por %p122, %p123
    %s126 = sadd.s32 %s125, 1
    %p129 = scmp.eq.s32.totalorder %s14, 3
    %p130 = scmp.ne.s32.totalorder %s125, %s127
    %p131 = scmp.eq.s32.totalorder %s14, 0
    %p132 = por %p130, %p131
    %p133 = scmp.ne.s32.totalorder %s125, %s127
    %p134 = scmp.eq.s32.totalorder %s19, 3
    %p135 = por %p133, %p134
    %p136 = scmp.ne.s32.totalorder %s127, %s128
    %p137 = scmp.eq.s32.totalorder %s19, 0
    %p138 = por %p136, %p137
    %p139 = scmp.ne.s32.totalorder %s127, %s128
    %p140 = scmp.eq.s32.totalorder %s20, 3
    %p141 = por %p139, %p140
    %p143 = scmp.ne.s32.totalorder %s128, %s142
    %p144 = scmp.eq.s32.totalorder %s20, 0
    %p145 = por %p143, %p144
    %s146 = ssub.s32 %s21, %s33
    %s147 = ssub.s32 %s22, %s29
    %s148 = sor.u32 %s146, %s147
    %p149 = scmp.eq.s32.totalorder %s148, 0
    %s151 = sadd.s32 %s150, 1
    %s152 = scalar_select %p149, %s150, %s151
    %p155 = pneg %p149
    %p156 = scmp.eq.s32.totalorder %s14, 3
    %p157 = por %p155, %p156
    %p158 = scmp.ne.s32.totalorder %s150, %s153
    %p159 = scmp.eq.s32.totalorder %s14, 0
    %p160 = por %p158, %p159
    %p161 = scmp.ne.s32.totalorder %s150, %s153
    %p162 = scmp.eq.s32.totalorder %s19, 3
    %p163 = por %p161, %p162
    %p164 = scmp.ne.s32.totalorder %s153, %s154
    %p165 = scmp.eq.s32.totalorder %s19, 0
    %p166 = por %p164, %p165
    %p167 = scmp.ne.s32.totalorder %s153, %s154
    %p168 = scmp.eq.s32.totalorder %s20, 3
    %p169 = por %p167, %p168
    %p171 = scmp.ne.s32.totalorder %s154, %s170
    %p172 = scmp.eq.s32.totalorder %s20, 0
    %p173 = por %p171, %p172
    %s174 = ssub.s32 %s21, %s33
    %p175 = scmp.eq.s32.totalorder %s174, 0
    %s177 = sadd.s32 %s176, 1
    %s178 = scalar_select %p175, %s176, %s177
    %p181 = pneg %p175
    %p182 = scmp.eq.s32.totalorder %s14, 3
    %p183 = por %p181, %p182
    %p184 = scmp.ne.s32.totalorder %s176, %s179
    %p185 = scmp.eq.s32.totalorder %s14, 0
    %p186 = por %p184, %p185
    %p187 = scmp.ne.s32.totalorder %s176, %s179
    %p188 = scmp.eq.s32.totalorder %s19, 3
    %p189 = por %p187, %p188
    %p190 = scmp.ne.s32.totalorder %s179, %s180
    %p191 = scmp.eq.s32.totalorder %s19, 0
    %p192 = por %p190, %p191
    %p193 = scmp.ne.s32.totalorder %s179, %s180
    %p194 = scmp.eq.s32.totalorder %s20, 3
    %p195 = por %p193, %p194
    %p197 = scmp.ne.s32.totalorder %s180, %s196
    %p198 = scmp.eq.s32.totalorder %s20, 0
    %p199 = por %p197, %p198
    %s200 = ssub.s32 %s21, %s33
    %p201 = scmp.eq.s32.totalorder %s200, 0
    %s203 = sadd.s32 %s202, 1
    %s204 = scalar_select %p201, %s202, %s203
    %p207 = pneg %p201
    %p208 = scmp.eq.s32.totalorder %s14, 3
    %p209 = por %p207, %p208
    %p210 = scmp.ne.s32.totalorder %s202, %s205
    %p211 = scmp.eq.s32.totalorder %s14, 0
    %p212 = por %p210, %p211
    %p213 = scmp.ne.s32.totalorder %s202, %s205
    %p214 = scmp.eq.s32.totalorder %s19, 3
    %p215 = por %p213, %p214
    %p216 = scmp.ne.s32.totalorder %s205, %s206
    %p217 = scmp.eq.s32.totalorder %s19, 0
    %p218 = por %p216, %p217
    %p219 = scmp.ne.s32.totalorder %s205, %s206
    %p220 = scmp.eq.s32.totalorder %s20, 3
    %p221 = por %p219, %p220
    %p223 = scmp.ne.s32.totalorder %s206, %s222
    %p224 = scmp.eq.s32.totalorder %s20, 0
    %p225 = por %p223, %p224
    %p226 = scmp.le.s32.totalorder 1, %s14
    %p227 = scmp.lt.s32.totalorder %s14, 5
    %p228 = pnand %p226, %p227
    %p229 = pneg %p228
    // Predicated region
    $region9: #{hire_block_forward.5} parent=5 // pred_check
      _
    $region10: #{hire_block_forward.5} parent=5 // pred_check_branch
      %231 = sbr.rel (%p228) target = $region12
    $region11: #{hire_block_forward.5} parent=5 // pred_region
      %s232 = ssub.s32 %s14, 1
      // Predicated region
      $region13: #{hire_block_forward.5} parent=11 // pred_check
        %p233 = pneg %p75
      $region14: #{hire_block_forward.5} parent=11 // pred_check_branch
        %235 = sbr.rel (%p233) target = $region16
      $region15: #{hire_block_forward.5} parent=11 // pred_region
        _
      $region16: #{hire_block_forward.5} parent=11 // pred_fallthru
        _
      // Predicated region
      $region17: #{hire_block_forward.5} parent=11 // pred_check
        %p236 = pneg %p96
      $region18: #{hire_block_forward.5} parent=11 // pred_check_branch
        %238 = sbr.rel (%p236) target = $region20
      $region19: #{hire_block_forward.5} parent=11 // pred_region
        _
      $region20: #{hire_block_forward.5} parent=11 // pred_fallthru
        _
      // Predicated region
      $region21: #{hire_block_forward.5} parent=11 // pred_check
        %p239 = pneg %p117
      $region22: #{hire_block_forward.5} parent=11 // pred_check_branch
        %241 = sbr.rel (%p239) target = $region24
      $region23: #{hire_block_forward.5} parent=11 // pred_region
        _
      $region24: #{hire_block_forward.5} parent=11 // pred_fallthru
        _
      // Predicated region
      $region25: #{hire_block_forward.5} parent=11 // pred_check
        %p242 = pneg %p138
      $region26: #{hire_block_forward.5} parent=11 // pred_check_branch
        %244 = sbr.rel (%p242) target = $region28
      $region27: #{hire_block_forward.5} parent=11 // pred_region
        _
      $region28: #{hire_block_forward.5} parent=11 // pred_fallthru
        _
    $region12: #{hire_block_forward.5} parent=5 // pred_fallthru
      _
    %p245 = scmp.lt.s32.totalorder %s14, 4
    // Predicated region
    $region29: #{hire_block_forward.5} parent=5 // pred_check
      %p246 = pneg %p245
    $region30: #{hire_block_forward.5} parent=5 // pred_check_branch
      %248 = sbr.rel (%p246) target = $region32
    $region31: #{hire_block_forward.5} parent=5 // pred_region
      // Predicated region
      $region33: #{hire_block_forward.5} parent=31 // pred_check
        %p249 = pneg %p48
      $region34: #{hire_block_forward.5} parent=31 // pred_check_branch
        %251 = sbr.rel (%p249) target = $region36
      $region35: #{hire_block_forward.5} parent=31 // pred_region
        %s252 = smul.u32 8, %s22
        %p253 = scmp.lt.s32.totalorder %s21, 1
        %s254 = scalar_select %p253, %s21, 1
        %p255 = scmp.lt.s32.totalorder %s252, 15
        %s256 = scalar_select %p255, %s252, 15
        %s257 = smul.addr %s254, 16
        %s258 = sadd.s32 %s256, %s257
        %s259 = smul.addr %s258, 4
        %s260 = scalar_lea.vmem %s0, %s259
        %s261 = smul.u32 8, %s22
      $region36: #{hire_block_forward.5} parent=31 // pred_fallthru
        _
    $region32: #{hire_block_forward.5} parent=5 // pred_fallthru
      _
    %p262 = scmp.le.s32.totalorder 1, %s14
    %p263 = scmp.lt.s32.totalorder %s14, 5
    %p264 = pnand %p262, %p263
    %p265 = pneg %p264
    // Predicated region
    $region37: #{hire_block_forward.5} parent=5 // pred_check
      _
    $region38: #{hire_block_forward.5} parent=5 // pred_check_branch
      %267 = sbr.rel (%p264) target = $region40
    $region39: #{hire_block_forward.5} parent=5 // pred_region
      %s268 = ssub.s32 %s14, 1
      %s269 = smul.u32 8, %s24
      %p270 = scmp.lt.s32.totalorder %s23, 1
      %s271 = scalar_select %p270, %s23, 1
      %p272 = scmp.lt.s32.totalorder %s269, 15
      %s273 = scalar_select %p272, %s269, 15
      %s274 = smul.addr %s271, 16
      %s275 = sadd.s32 %s273, %s274
      %s276 = smul.addr %s275, 4
      %s277 = scalar_lea.vmem %s0, %s276
      %p278 = pneg %p54
      %p279 = pneg %p51
      %p280 = pneg %p75
      %p281 = pneg %p72
      %p282 = pneg %p96
      %p283 = pneg %p93
      %p284 = pneg %p117
      %p285 = pneg %p114
      %p286 = pneg %p138
      %p287 = pneg %p135
      %p288 = pneg %p166
      %p289 = pneg %p163
      %s290 = smul.u32 8, %s24
      %p291 = scmp.lt.s32.totalorder %s23, 1
      %s292 = scalar_select %p291, %s23, 1
      %p293 = scmp.lt.s32.totalorder %s290, 15
      %s294 = scalar_select %p293, %s290, 15
      %s295 = smul.addr %s292, 16
      %s296 = sadd.s32 %s294, %s295
      %s297 = smul.addr %s296, 4
      %s298 = scalar_lea.vmem %s5, %s297
      %p299 = pneg %p192
      %p300 = pneg %p189
      %p301 = scmp.lt.s32.totalorder %s23, 1
      %s302 = scalar_select %p301, %s23, 1
      %s303 = scalar_lea.vmem %s6, %s302
      %p304 = pneg %p218
      %p305 = pneg %p215
      %p306 = scmp.lt.s32.totalorder %s23, 1
      %s307 = scalar_select %p306, %s23, 1
      %s308 = scalar_lea.vmem %s7, %s307
      %s309 = smul.u32 8, %s24
      %p310 = scmp.lt.s32.totalorder %s23, 1
      %s311 = scalar_select %p310, %s23, 1
      %p312 = scmp.lt.s32.totalorder %s309, 15
      %s313 = scalar_select %p312, %s309, 15
      %s314 = smul.addr %s311, 16
      %s315 = sadd.s32 %s313, %s314
      %s316 = smul.addr %s315, 4
      %s317 = scalar_lea.vmem %s0, %s316
      %s318 = smul.u32 8, %s24
      %s319 = smul.u32 8, %s24
      %p320 = scmp.lt.s32.totalorder %s23, 1
      %s321 = scalar_select %p320, %s23, 1
      %p322 = scmp.lt.s32.totalorder %s319, 15
      %s323 = scalar_select %p322, %s319, 15
      %s324 = smul.addr %s321, 16
      %s325 = sadd.s32 %s323, %s324
      %s326 = smul.addr %s325, 4
      %s327 = scalar_lea.vmem %s5, %s326
      %s328 = smul.u32 8, %s24
      %p329 = scmp.lt.s32.totalorder %s23, 1
      %s330 = scalar_select %p329, %s23, 1
      %s331 = scalar_lea.vmem %s6, %s330
      %p332 = scmp.lt.s32.totalorder %s23, 1
      %s333 = scalar_select %p332, %s23, 1
      %s334 = scalar_lea.vmem %s7, %s333
      %v336 = vld [vmem:[%s317] sm:$0xf]
      %v337 = vld [vmem:[%s317 + $0x4] sm:$0xf]
      %v338 = vld [vmem:[%s317 + $0x8] sm:$0xf]
      %v339 = vld [vmem:[%s317 + $0xc] sm:$0xf]
      %v340 = vld [vmem:[%s317 + $0x10] sm:$0xf]
      %v341 = vld [vmem:[%s317 + $0x14] sm:$0xf]
      %v342 = vld [vmem:[%s317 + $0x18] sm:$0xf]
      %v343 = vld [vmem:[%s317 + $0x1c] sm:$0xf]
      %v344 = vld [vmem:[%s1] sm:$0xf]
      %v345 = vld [vmem:[%s1 + $0x4] sm:$0xf]
      %v346 = vld [vmem:[%s1 + $0x8] sm:$0xf]
      %v347 = vld [vmem:[%s1 + $0xc] sm:$0xf]
      %v348 = vld [vmem:[%s2] sm:$0x1]
      %v350 = vlaneseq
      %v351 = vshrl.u32 %v350, 7
      %v352 = vsub.s32 0, %v351
      %v353 = vrot.slane %v348, %v352
      %v363 = vunpack.c.l.b16 %v336
      %v364 = vunpack.c.l.b16 %v337
      %v365 = vunpack.c.l.b16 %v338
      %v366 = vunpack.c.l.b16 %v339
      %v367 = vunpack.c.l.b16 %v340
      %v368 = vunpack.c.l.b16 %v341
      %v369 = vunpack.c.l.b16 %v342
      %v370 = vunpack.c.l.b16 %v343
      %v371 = vpack.c.b16 %v364, %v363
      %v372 = vpack.c.b16 %v366, %v365
      %v373 = vpack.c.b16 %v368, %v367
      %v374 = vpack.c.b16 %v370, %v369
      %v379 = vunpack.c.l.b16 %v344
      %v380 = vunpack.c.l.b16 %v345
      %v381 = vunpack.c.l.b16 %v346
      %v382 = vunpack.c.l.b16 %v347
      %v383 = vpack.c.b16 %v380, %v379
      %v384 = vpack.c.b16 %v382, %v381
      %vm387 = vcmask 261120
      %v389 = vsel %vm387, %v371, 0
      %v392 = vsel %vm387, %v372, 0
      %v395 = vsel %vm387, %v373, 0
      %v398 = vsel %vm387, %v374, 0
      %400 = vmatprep.subr.bf16.mxu0 0
      %401 = vmatpush1.bf16.msra.mxu0 0
      %402 = vmatprep.subr.bf16.mxu0 0
      %403 = vmatpush1.bf16.msra.mxu0 0
      %404 = vmatprep.subr.bf16.mxu0 0
      %405 = vmatpush1.bf16.msra.mxu0 0
      %406 = vmatprep.subr.bf16.mxu0 0
      %407 = vmatpush1.bf16.msra.mxu0 0
      %408 = vmatprep.subr.bf16.mxu0 0
      %409 = vmatpush1.bf16.msra.mxu0 0
      %410 = vmatprep.subr.bf16.mxu0 0
      %411 = vmatpush1.bf16.msra.mxu0 0
      %412 = vmatprep.subr.bf16.mxu0 0
      %413 = vmatpush1.bf16.msra.mxu0 %v384
      %414 = vmatprep.subr.bf16.mxu0 0
      %415 = vmatpush1.bf16.msra.mxu0 %v383
      %416 = vmatprep.subr.bf16.mxu0 0
      %417 = vmatpush2.bf16.msra.mxu0 0
      %418 = vmatprep.subr.bf16.mxu0 0
      %419 = vmatpush2.bf16.msra.mxu0 0
      %420 = vmatprep.subr.bf16.mxu0 0
      %421 = vmatpush2.bf16.msra.mxu0 0
      %422 = vmatprep.subr.bf16.mxu0 0
      %423 = vmatpush2.bf16.msra.mxu0 0
      %424 = vmatprep.subr.bf16.mxu0 0
      %425 = vmatpush2.bf16.msra.mxu0 0
      %426 = vmatprep.subr.bf16.mxu0 0
      %427 = vmatpush2.bf16.msra.mxu0 0
      %428 = vmatprep.subr.bf16.mxu0 0
      %429 = vmatpush2.bf16.msra.mxu0 0
      %430 = vmatprep.subr.bf16.mxu0 0
      %431 = vmatpush2.bf16.msra.mxu0 0
      %432 = vmatprep.mubr.bf16.mxu0 0
      %433 = vmatmul.mubr.bf16.gmra.mxu0 %v389
      %v434 = vpop.f32.mrf.mxu0
      %v435 = vadd.f32 %v353, %v434
      %v436 = vpop.f32.mrf.mxu0
      %v437 = vpop.f32.mrf.mxu0
      %v438 = vadd.f32 %v353, %v437
      %v439 = vpop.f32.mrf.mxu0
      %440 = vmatprep.mubr.bf16.mxu0 0
      %441 = vmatmul.mubr.bf16.gmra.mxu0 %v392
      %v442 = vpop.f32.mrf.mxu0
      %v443 = vadd.f32 %v353, %v442
      %v444 = vpop.f32.mrf.mxu0
      %v445 = vpop.f32.mrf.mxu0
      %v446 = vadd.f32 %v353, %v445
      %v447 = vpop.f32.mrf.mxu0
      %448 = vmatprep.mubr.bf16.mxu0 0
      %449 = vmatmul.mubr.bf16.gmra.mxu0 %v395
      %v450 = vpop.f32.mrf.mxu0
      %v451 = vadd.f32 %v353, %v450
      %v452 = vpop.f32.mrf.mxu0
      %v453 = vpop.f32.mrf.mxu0
      %v454 = vadd.f32 %v353, %v453
      %v455 = vpop.f32.mrf.mxu0
      %456 = vmatprep.mubr.bf16.mxu0 0
      %457 = vmatmul.mubr.bf16.gmra.mxu0 %v398
      %v458 = vpop.f32.mrf.mxu0
      %v459 = vadd.f32 %v353, %v458
      %v460 = vpop.f32.mrf.mxu0
      %v461 = vpop.f32.mrf.mxu0
      %v462 = vadd.f32 %v353, %v461
      %v463 = vpop.f32.mrf.mxu0
      %464 = vdwg.mxu0
      %v465 = vmax.f32 %v435, 0.0
      %v466 = vmax.f32 %v438, 0.0
      %v467 = vmax.f32 %v443, 0.0
      %v468 = vmax.f32 %v446, 0.0
      %v469 = vmax.f32 %v451, 0.0
      %v470 = vmax.f32 %v454, 0.0
      %v471 = vmax.f32 %v459, 0.0
      %v472 = vmax.f32 %v462, 0.0
      %v473 = vpack.c.bf16 %v466, %v465
      %v474 = vpack.c.bf16 %v468, %v467
      %v475 = vpack.c.bf16 %v470, %v469
      %v476 = vpack.c.bf16 %v472, %v471
      %v477 = vld [vmem:[%s3] sm:$0xf]
      %v478 = vld [vmem:[%s4] sm:$0x1]
      %v480 = vlaneseq
      %v481 = vshrl.u32 %v480, 7
      %v482 = vsub.s32 0, %v481
      %v483 = vrot.slane %v478, %v482
      %vm485 = vcmask 64512
      %v487 = vsel %vm485, %v473, 0
      %v490 = vsel %vm485, %v474, 0
      %v493 = vsel %vm485, %v475, 0
      %v496 = vsel %vm485, %v476, 0
      %vm498 = vcmask 1043456
      %v500 = vsel %vm498, %v477, 0
      %502 = vmatprep.subr.bf16.mxu0 0
      %503 = vmatpush1.bf16.msra.mxu0 0
      %504 = vmatprep.subr.bf16.mxu0 0
      %505 = vmatpush1.bf16.msra.mxu0 0
      %506 = vmatprep.subr.bf16.mxu0 0
      %507 = vmatpush1.bf16.msra.mxu0 0
      %508 = vmatprep.subr.bf16.mxu0 0
      %509 = vmatpush1.bf16.msra.mxu0 0
      %510 = vmatprep.subr.bf16.mxu0 0
      %511 = vmatpush1.bf16.msra.mxu0 0
      %512 = vmatprep.subr.bf16.mxu0 0
      %513 = vmatpush1.bf16.msra.mxu0 0
      %514 = vmatprep.subr.bf16.mxu0 0
      %515 = vmatpush1.bf16.msra.mxu0 0
      %516 = vmatprep.subr.bf16.mxu0 0
      %517 = vmatpush1.bf16.msra.mxu0 %v500
      %518 = vmatprep.subr.bf16.mxu0 0
      %519 = vmatpush2.bf16.msra.mxu0 0
      %520 = vmatprep.subr.bf16.mxu0 0
      %521 = vmatpush2.bf16.msra.mxu0 0
      %522 = vmatprep.subr.bf16.mxu0 0
      %523 = vmatpush2.bf16.msra.mxu0 0
      %524 = vmatprep.subr.bf16.mxu0 0
      %525 = vmatpush2.bf16.msra.mxu0 0
      %526 = vmatprep.subr.bf16.mxu0 0
      %527 = vmatpush2.bf16.msra.mxu0 0
      %528 = vmatprep.subr.bf16.mxu0 0
      %529 = vmatpush2.bf16.msra.mxu0 0
      %530 = vmatprep.subr.bf16.mxu0 0
      %531 = vmatpush2.bf16.msra.mxu0 0
      %532 = vmatprep.subr.bf16.mxu0 0
      %533 = vmatpush2.bf16.msra.mxu0 0
      %534 = vmatprep.mubr.bf16.mxu0 0
      %535 = vmatmul.mubr.bf16.gmra.mxu0 %v487
      %v536 = vpop.f32.mrf.mxu0
      %v537 = vadd.f32 %v483, %v536
      %v538 = vpop.f32.mrf.mxu0
      %v539 = vpop.f32.mrf.mxu0
      %v540 = vadd.f32 %v483, %v539
      %v541 = vpop.f32.mrf.mxu0
      %542 = vmatprep.mubr.bf16.mxu0 0
      %543 = vmatmul.mubr.bf16.gmra.mxu0 %v490
      %v544 = vpop.f32.mrf.mxu0
      %v545 = vadd.f32 %v483, %v544
      %v546 = vpop.f32.mrf.mxu0
      %v547 = vpop.f32.mrf.mxu0
      %v548 = vadd.f32 %v483, %v547
      %v549 = vpop.f32.mrf.mxu0
      %550 = vmatprep.mubr.bf16.mxu0 0
      %551 = vmatmul.mubr.bf16.gmra.mxu0 %v493
      %v552 = vpop.f32.mrf.mxu0
      %v553 = vadd.f32 %v483, %v552
      %v554 = vpop.f32.mrf.mxu0
      %v555 = vpop.f32.mrf.mxu0
      %v556 = vadd.f32 %v483, %v555
      %v557 = vpop.f32.mrf.mxu0
      %558 = vmatprep.mubr.bf16.mxu0 0
      %559 = vmatmul.mubr.bf16.gmra.mxu0 %v496
      %v560 = vpop.f32.mrf.mxu0
      %v561 = vadd.f32 %v483, %v560
      %v562 = vpop.f32.mrf.mxu0
      %v563 = vpop.f32.mrf.mxu0
      %v564 = vadd.f32 %v483, %v563
      %v565 = vpop.f32.mrf.mxu0
      %566 = vdwg.mxu0
      %v567 = vpack.c.bf16 %v540, %v537
      %v568 = vpack.c.bf16 %v548, %v545
      %v569 = vpack.c.bf16 %v556, %v553
      %v570 = vpack.c.bf16 %v564, %v561
      %v575 = vunpack.c.l.b16 %v567
      %v576 = vunpack.c.h.b16 %v567
      %v577 = vunpack.c.l.b16 %v568
      %v578 = vunpack.c.h.b16 %v568
      %v579 = vunpack.c.l.b16 %v569
      %v580 = vunpack.c.h.b16 %v569
      %v581 = vunpack.c.l.b16 %v570
      %v582 = vunpack.c.h.b16 %v570
      %v583 = vpack.c.b16 %v575, %v575
      %v584 = vpack.c.b16 %v576, %v576
      %v585 = vpack.c.b16 %v577, %v577
      %v586 = vpack.c.b16 %v578, %v578
      %v587 = vpack.c.b16 %v579, %v579
      %v588 = vpack.c.b16 %v580, %v580
      %v589 = vpack.c.b16 %v581, %v581
      %v590 = vpack.c.b16 %v582, %v582
      %vm599 = vcmask 257024
      %600 = vst.msk [vmem:[%s327] sm:$0xf] %vm599, %v583
      %601 = vst.msk [vmem:[%s327 + $0x4] sm:$0xf] %vm599, %v584
      %602 = vst.msk [vmem:[%s327 + $0x8] sm:$0xf] %vm599, %v585
      %603 = vst.msk [vmem:[%s327 + $0xc] sm:$0xf] %vm599, %v586
      %604 = vst.msk [vmem:[%s327 + $0x10] sm:$0xf] %vm599, %v587
      %605 = vst.msk [vmem:[%s327 + $0x14] sm:$0xf] %vm599, %v588
      %606 = vst.msk [vmem:[%s327 + $0x18] sm:$0xf] %vm599, %v589
      %607 = vst.msk [vmem:[%s327 + $0x1c] sm:$0xf] %vm599, %v590
      %p608 = scmp.eq.s32.totalorder %s24, 0
      // Predicated region
      $region41: #{hire_block_forward.5} parent=39 // pred_check
        %p609 = pneg %p608
      $region42: #{hire_block_forward.5} parent=39 // pred_check_branch
        %611 = sbr.rel (%p609) target = $region44
      $region43: #{hire_block_forward.5} parent=39 // pred_region
        %vm612 = vcmask 253952
        %613 = vst.msk [vmem:[%s331] sm:$0x1] %vm612, 0.0
        %614 = vst.msk [vmem:[%s334] sm:$0x1] %vm612, 0.0
      $region44: #{hire_block_forward.5} parent=39 // pred_fallthru
        _
      %v615 = vld [vmem:[%s331] sm:$0x1]
      %v616 = vsel %vm387, %v537, 0.0
      %v617 = vsel %vm387, %v540, 0.0
      %v618 = vadd.f32 %v616, %v617
      %v619 = vsel %vm387, %v545, 0.0
      %v620 = vadd.f32 %v618, %v619
      %v621 = vsel %vm387, %v548, 0.0
      %v622 = vadd.f32 %v620, %v621
      %v623 = vsel %vm387, %v553, 0.0
      %v624 = vadd.f32 %v622, %v623
      %v625 = vsel %vm387, %v556, 0.0
      %v626 = vadd.f32 %v624, %v625
      %v627 = vsel %vm387, %v561, 0.0
      %v628 = vadd.f32 %v626, %v627
      %v629 = vsel %vm387, %v564, 0.0
      %v630 = vadd.f32 %v628, %v629
      %v631 = vrot.slane %v630, 4
      %v632 = vadd.f32 %v630, %v631
      %v633 = vrot.slane %v632, 2
      %v634 = vadd.f32 %v632, %v633
      %v635 = vrot.slane %v634, 1
      %v636 = vadd.f32 %v634, %v635
      %v637 = vadd.f32 %v615, %v636
      %vm638 = vcmask 253952
      %639 = vst.msk [vmem:[%s331] sm:$0x1] %vm638, %v637
      %v640 = vld [vmem:[%s334] sm:$0x1]
      %v641 = vunpack.c.l.bf16 %v336
      %v642 = vunpack.c.l.bf16 %v337
      %v643 = vunpack.c.l.bf16 %v338
      %v644 = vunpack.c.l.bf16 %v339
      %v645 = vunpack.c.l.bf16 %v340
      %v646 = vunpack.c.l.bf16 %v341
      %v647 = vunpack.c.l.bf16 %v342
      %v648 = vunpack.c.l.bf16 %v343
      %v649 = vsel %vm387, %v641, 0.0
      %v650 = vsel %vm387, %v642, 0.0
      %v651 = vadd.f32 %v649, %v650
      %v652 = vsel %vm387, %v643, 0.0
      %v653 = vadd.f32 %v651, %v652
      %v654 = vsel %vm387, %v644, 0.0
      %v655 = vadd.f32 %v653, %v654
      %v656 = vsel %vm387, %v645, 0.0
      %v657 = vadd.f32 %v655, %v656
      %v658 = vsel %vm387, %v646, 0.0
      %v659 = vadd.f32 %v657, %v658
      %v660 = vsel %vm387, %v647, 0.0
      %v661 = vadd.f32 %v659, %v660
      %v662 = vsel %vm387, %v648, 0.0
      %v663 = vadd.f32 %v661, %v662
      %v664 = vrot.slane %v663, 4
      %v665 = vadd.f32 %v663, %v664
      %v666 = vrot.slane %v665, 2
      %v667 = vadd.f32 %v665, %v666
      %v668 = vrot.slane %v667, 1
      %v669 = vadd.f32 %v667, %v668
      %v670 = vadd.f32 %v640, %v669
      %671 = vst.msk [vmem:[%s334] sm:$0x1] %vm638, %v670
      %s672 = smul.u32 8, %s24
      %p673 = scmp.lt.s32.totalorder %s23, 1
      %s674 = scalar_select %p673, %s23, 1
      %p675 = scmp.lt.s32.totalorder %s672, 15
      %s676 = scalar_select %p675, %s672, 15
      %s677 = smul.addr %s674, 16
      %s678 = sadd.s32 %s676, %s677
      %s679 = smul.addr %s678, 4
      %s680 = scalar_lea.vmem %s5, %s679
      %p681 = scmp.lt.s32.totalorder %s23, 1
      %s682 = scalar_select %p681, %s23, 1
      %s683 = scalar_lea.vmem %s6, %s682
      %p684 = scmp.lt.s32.totalorder %s23, 1
      %s685 = scalar_select %p684, %s23, 1
      %s686 = scalar_lea.vmem %s7, %s685
      // Predicated region
      $region45: #{hire_block_forward.5} parent=39 // pred_check
        %p687 = pneg %p163
      $region46: #{hire_block_forward.5} parent=39 // pred_check_branch
        %689 = sbr.rel (%p687) target = $region48
      $region47: #{hire_block_forward.5} parent=39 // pred_region
        %s690 = smul.u32 8, %s24
      $region48: #{hire_block_forward.5} parent=39 // pred_fallthru
        _
      // Predicated region
      $region49: #{hire_block_forward.5} parent=39 // pred_check
        %p691 = pneg %p189
      $region50: #{hire_block_forward.5} parent=39 // pred_check_branch
        %693 = sbr.rel (%p691) target = $region52
      $region51: #{hire_block_forward.5} parent=39 // pred_region
        _
      $region52: #{hire_block_forward.5} parent=39 // pred_fallthru
        _
      // Predicated region
      $region53: #{hire_block_forward.5} parent=39 // pred_check
        %p694 = pneg %p215
      $region54: #{hire_block_forward.5} parent=39 // pred_check_branch
        %696 = sbr.rel (%p694) target = $region56
      $region55: #{hire_block_forward.5} parent=39 // pred_region
        _
      $region56: #{hire_block_forward.5} parent=39 // pred_fallthru
        _
    $region40: #{hire_block_forward.5} parent=5 // pred_fallthru
      _
    %p697 = scmp.le.s32.totalorder 2, %s14
    // Predicated region
    $region57: #{hire_block_forward.5} parent=5 // pred_check
      %p698 = pneg %p697
    $region58: #{hire_block_forward.5} parent=5 // pred_check_branch
      %700 = sbr.rel (%p698) target = $region60
    $region59: #{hire_block_forward.5} parent=5 // pred_region
      %s701 = ssub.s32 %s14, 2
      // Predicated region
      $region61: #{hire_block_forward.5} parent=59 // pred_check
        %p702 = pneg %p169
      $region62: #{hire_block_forward.5} parent=59 // pred_check_branch
        %704 = sbr.rel (%p702) target = $region64
      $region63: #{hire_block_forward.5} parent=59 // pred_region
        %s705 = smul.u32 8, %s26
        %p706 = scmp.lt.s32.totalorder %s25, 1
        %s707 = scalar_select %p706, %s25, 1
        %p708 = scmp.lt.s32.totalorder %s705, 15
        %s709 = scalar_select %p708, %s705, 15
        %s710 = smul.addr %s707, 16
        %s711 = sadd.s32 %s709, %s710
        %s712 = smul.addr %s711, 4
        %s713 = scalar_lea.vmem %s5, %s712
      $region64: #{hire_block_forward.5} parent=59 // pred_fallthru
        _
      // Predicated region
      $region65: #{hire_block_forward.5} parent=59 // pred_check
        %p714 = pneg %p195
      $region66: #{hire_block_forward.5} parent=59 // pred_check_branch
        %716 = sbr.rel (%p714) target = $region68
      $region67: #{hire_block_forward.5} parent=59 // pred_region
        %p717 = scmp.lt.s32.totalorder %s25, 1
        %s718 = scalar_select %p717, %s25, 1
        %s719 = scalar_lea.vmem %s6, %s718
      $region68: #{hire_block_forward.5} parent=59 // pred_fallthru
        _
      // Predicated region
      $region69: #{hire_block_forward.5} parent=59 // pred_check
        %p720 = pneg %p221
      $region70: #{hire_block_forward.5} parent=59 // pred_check_branch
        %722 = sbr.rel (%p720) target = $region72
      $region71: #{hire_block_forward.5} parent=59 // pred_region
        %p723 = scmp.lt.s32.totalorder %s25, 1
        %s724 = scalar_select %p723, %s25, 1
        %s725 = scalar_lea.vmem %s7, %s724
      $region72: #{hire_block_forward.5} parent=59 // pred_fallthru
        _
    $region60: #{hire_block_forward.5} parent=5 // pred_fallthru
      _
  $region6: #{hire_block_forward.5} parent=0 // loop_footer
    %s18 = sadd.s32 1, %s14
  $region7: #{hire_block_forward.5} parent=0 // loop_footer_branch
    %13 = sbr.rel target = $region3
  $region8: #{hire_block_forward.5} parent=0 // loop_exit
    _

// kernel: hire_block_forward.6
$region0: #{hire_block_forward.6}
  #allocation0 [shape = 'u32[]', space=smem, size = 0x4, offset = 0x4, fixed_abs, tag = 'smem constant byte address 0x4 - core index']
  #allocation1 [shape = 'u32[144,128]{1,0:T(1,128)}', space=vmem, size = 0x12000, scoped, tag = 'internal scratch']
  %s0 = inlined_call_operand.vmem [shape: bf16[2,128,32], index: 0, kind: input, shape index: {}, may-alias: {0,5}]
  %s1 = inlined_call_operand.vmem [shape: bf16[32,8], index: 1, kind: input, shape index: {}]
  %s2 = inlined_call_operand.vmem [shape: f32[1,8], index: 2, kind: input, shape index: {}]
  %s3 = inlined_call_operand.vmem [shape: bf16[8,32], index: 3, kind: input, shape index: {}]
  %s4 = inlined_call_operand.vmem [shape: f32[1,32], index: 4, kind: input, shape index: {}]
  %s5 = inlined_call_operand.vmem [shape: bf16[2,128,32], index: 5, kind: output, shape index: {0}, may-alias: {0,5}]
  %s6 = inlined_call_operand.vmem [shape: f32[2,1,32], index: 6, kind: output, shape index: {1}]
  %s7 = inlined_call_operand.hbm [shape: f32[2,1,32], index: 7, kind: output, shape index: {2}]
  %8 = xla_tuple %s5, %s6, %s7
  %s9 = sld [smem:[#allocation0]]
  $region73: #{hire_block_forward.6} parent=0
    _
  %s11 = ssub.s32 1, %s9
  %s12 = scalar_select 0, %s11, %s9
  $region1: #{hire_block_forward.6} parent=0
    #allocation2 [shape = 'u8[1024]{0}', space=vmem, size = 0x400, scoped, tag = 'output window, operand 2']
    #allocation3 [shape = 's32[2]{0}', space=sflag, size = 0x8, scoped, tag = 'scoped memory for hire_block_forward.6']
    %13 = vsyncpa [#allocation3], 0
    %s14 = scalar_lea.sflag [#allocation3], 1
    %15 = vsyncpa %s14, 0
    loop: start=0, step=1, limit=6
    $region2: #{hire_block_forward.6} parent=1 // loop_pre_header
      _
    $region3: #{hire_block_forward.6} parent=1 // loop_header
      %s17 = sphi 0, %s21
      %p18 = scmp.ge.s32.totalorder %s17, 6
      %s24 = sphi 0, %s36
      %s25 = sphi 0, %s32
      %s26 = sphi 0, %s24
      %s27 = sphi 0, %s25
      %s28 = sphi 0, %s26
      %s29 = sphi 0, %s27
      %s41 = sphi 0, %s43
      %s44 = sphi 0, %s41
      %s45 = sphi 0, %s44
      %s61 = sphi 0, %s45
      %s65 = sphi 0, %s65
      %s67 = sphi 0, %s65
      %s68 = sphi 0, %s67
      %s82 = sphi 0, %s68
      %s86 = sphi 0, %s86
      %s88 = sphi 0, %s86
      %s89 = sphi 0, %s88
      %s103 = sphi 0, %s89
      %s107 = sphi 0, %s107
      %s109 = sphi 0, %s107
      %s110 = sphi 0, %s109
      %s124 = sphi 0, %s110
      %s128 = sphi 0, %s128
      %s130 = sphi 0, %s128
      %s131 = sphi 0, %s130
      %s145 = sphi 0, %s131
      %s153 = sphi 0, %s155
      %s156 = sphi 0, %s153
      %s157 = sphi 0, %s156
      %s173 = sphi 0, %s157
      %s179 = sphi 0, %s181
      %s182 = sphi 0, %s179
      %s183 = sphi 0, %s182
      %s199 = sphi 0, %s183
      %s205 = sphi 0, %s207
      %s208 = sphi 0, %s205
      %s209 = sphi 0, %s208
      %s225 = sphi 0, %s209
    $region4: #{hire_block_forward.6} parent=1 // loop_header_branch
      %20 = sbr.rel (%p18) target = $region8
    $region5: #{hire_block_forward.6} parent=1 // loop_body
      %s22 = ssub.s32 %s17, 1
      %s23 = ssub.s32 %s17, 2
      %s30 = sadd.s32 1, %s25
      %p31 = scmp.ge.s32.totalorder %s30, 2
      %s32 = scalar_select %p31, 0, %s30
      %s33 = sadd.s32 1, %s24
      %s34 = scalar_select %p31, %s33, %s24
      %p35 = scmp.ge.s32.totalorder %s34, 2
      %s36 = scalar_select %p35, 0, %s34
      %s37 = ssub.s32 %s24, %s36
      %s38 = ssub.s32 %s25, %s32
      %s39 = sor.u32 %s37, %s38
      %p40 = scmp.eq.s32.totalorder %s39, 0
      %s42 = sadd.s32 %s41, 1
      %s43 = scalar_select %p40, %s41, %s42
      %p46 = pneg %p40
      %p47 = scmp.eq.s32.totalorder %s17, 3
      %p48 = por %p46, %p47
      %p49 = scmp.ne.s32.totalorder %s41, %s44
      %p50 = scmp.eq.s32.totalorder %s17, 0
      %p51 = por %p49, %p50
      %p52 = scmp.ne.s32.totalorder %s41, %s44
      %p53 = scmp.eq.s32.totalorder %s22, 3
      %p54 = por %p52, %p53
      %p55 = scmp.ne.s32.totalorder %s44, %s45
      %p56 = scmp.eq.s32.totalorder %s22, 0
      %p57 = por %p55, %p56
      %p58 = scmp.ne.s32.totalorder %s44, %s45
      %p59 = scmp.eq.s32.totalorder %s23, 3
      %p60 = por %p58, %p59
      %p62 = scmp.ne.s32.totalorder %s45, %s61
      %p63 = scmp.eq.s32.totalorder %s23, 0
      %p64 = por %p62, %p63
      %s66 = sadd.s32 %s65, 1
      %p69 = scmp.eq.s32.totalorder %s17, 3
      %p70 = scmp.ne.s32.totalorder %s65, %s67
      %p71 = scmp.eq.s32.totalorder %s17, 0
      %p72 = por %p70, %p71
      %p73 = scmp.ne.s32.totalorder %s65, %s67
      %p74 = scmp.eq.s32.totalorder %s22, 3
      %p75 = por %p73, %p74
      %p76 = scmp.ne.s32.totalorder %s67, %s68
      %p77 = scmp.eq.s32.totalorder %s22, 0
      %p78 = por %p76, %p77
      %p79 = scmp.ne.s32.totalorder %s67, %s68
      %p80 = scmp.eq.s32.totalorder %s23, 3
      %p81 = por %p79, %p80
      %p83 = scmp.ne.s32.totalorder %s68, %s82
      %p84 = scmp.eq.s32.totalorder %s23, 0
      %p85 = por %p83, %p84
      %s87 = sadd.s32 %s86, 1
      %p90 = scmp.eq.s32.totalorder %s17, 3
      %p91 = scmp.ne.s32.totalorder %s86, %s88
      %p92 = scmp.eq.s32.totalorder %s17, 0
      %p93 = por %p91, %p92
      %p94 = scmp.ne.s32.totalorder %s86, %s88
      %p95 = scmp.eq.s32.totalorder %s22, 3
      %p96 = por %p94, %p95
      %p97 = scmp.ne.s32.totalorder %s88, %s89
      %p98 = scmp.eq.s32.totalorder %s22, 0
      %p99 = por %p97, %p98
      %p100 = scmp.ne.s32.totalorder %s88, %s89
      %p101 = scmp.eq.s32.totalorder %s23, 3
      %p102 = por %p100, %p101
      %p104 = scmp.ne.s32.totalorder %s89, %s103
      %p105 = scmp.eq.s32.totalorder %s23, 0
      %p106 = por %p104, %p105
      %s108 = sadd.s32 %s107, 1
      %p111 = scmp.eq.s32.totalorder %s17, 3
      %p112 = scmp.ne.s32.totalorder %s107, %s109
      %p113 = scmp.eq.s32.totalorder %s17, 0
      %p114 = por %p112, %p113
      %p115 = scmp.ne.s32.totalorder %s107, %s109
      %p116 = scmp.eq.s32.totalorder %s22, 3
      %p117 = por %p115, %p116
      %p118 = scmp.ne.s32.totalorder %s109, %s110
      %p119 = scmp.eq.s32.totalorder %s22, 0
      %p120 = por %p118, %p119
      %p121 = scmp.ne.s32.totalorder %s109, %s110
      %p122 = scmp.eq.s32.totalorder %s23, 3
      %p123 = por %p121, %p122
      %p125 = scmp.ne.s32.totalorder %s110, %s124
      %p126 = scmp.eq.s32.totalorder %s23, 0
      %p127 = por %p125, %p126
      %s129 = sadd.s32 %s128, 1
      %p132 = scmp.eq.s32.totalorder %s17, 3
      %p133 = scmp.ne.s32.totalorder %s128, %s130
      %p134 = scmp.eq.s32.totalorder %s17, 0
      %p135 = por %p133, %p134
      %p136 = scmp.ne.s32.totalorder %s128, %s130
      %p137 = scmp.eq.s32.totalorder %s22, 3
      %p138 = por %p136, %p137
      %p139 = scmp.ne.s32.totalorder %s130, %s131
      %p140 = scmp.eq.s32.totalorder %s22, 0
      %p141 = por %p139, %p140
      %p142 = scmp.ne.s32.totalorder %s130, %s131
      %p143 = scmp.eq.s32.totalorder %s23, 3
      %p144 = por %p142, %p143
      %p146 = scmp.ne.s32.totalorder %s131, %s145
      %p147 = scmp.eq.s32.totalorder %s23, 0
      %p148 = por %p146, %p147
      %s149 = ssub.s32 %s24, %s36
      %s150 = ssub.s32 %s25, %s32
      %s151 = sor.u32 %s149, %s150
      %p152 = scmp.eq.s32.totalorder %s151, 0
      %s154 = sadd.s32 %s153, 1
      %s155 = scalar_select %p152, %s153, %s154
      %p158 = pneg %p152
      %p159 = scmp.eq.s32.totalorder %s17, 3
      %p160 = por %p158, %p159
      %p161 = scmp.ne.s32.totalorder %s153, %s156
      %p162 = scmp.eq.s32.totalorder %s17, 0
      %p163 = por %p161, %p162
      %p164 = scmp.ne.s32.totalorder %s153, %s156
      %p165 = scmp.eq.s32.totalorder %s22, 3
      %p166 = por %p164, %p165
      %p167 = scmp.ne.s32.totalorder %s156, %s157
      %p168 = scmp.eq.s32.totalorder %s22, 0
      %p169 = por %p167, %p168
      %p170 = scmp.ne.s32.totalorder %s156, %s157
      %p171 = scmp.eq.s32.totalorder %s23, 3
      %p172 = por %p170, %p171
      %p174 = scmp.ne.s32.totalorder %s157, %s173
      %p175 = scmp.eq.s32.totalorder %s23, 0
      %p176 = por %p174, %p175
      %s177 = ssub.s32 %s24, %s36
      %p178 = scmp.eq.s32.totalorder %s177, 0
      %s180 = sadd.s32 %s179, 1
      %s181 = scalar_select %p178, %s179, %s180
      %p184 = pneg %p178
      %p185 = scmp.eq.s32.totalorder %s17, 3
      %p186 = por %p184, %p185
      %p187 = scmp.ne.s32.totalorder %s179, %s182
      %p188 = scmp.eq.s32.totalorder %s17, 0
      %p189 = por %p187, %p188
      %p190 = scmp.ne.s32.totalorder %s179, %s182
      %p191 = scmp.eq.s32.totalorder %s22, 3
      %p192 = por %p190, %p191
      %p193 = scmp.ne.s32.totalorder %s182, %s183
      %p194 = scmp.eq.s32.totalorder %s22, 0
      %p195 = por %p193, %p194
      %p196 = scmp.ne.s32.totalorder %s182, %s183
      %p197 = scmp.eq.s32.totalorder %s23, 3
      %p198 = por %p196, %p197
      %p200 = scmp.ne.s32.totalorder %s183, %s199
      %p201 = scmp.eq.s32.totalorder %s23, 0
      %p202 = por %p200, %p201
      %s203 = ssub.s32 %s24, %s36
      %p204 = scmp.eq.s32.totalorder %s203, 0
      %s206 = sadd.s32 %s205, 1
      %s207 = scalar_select %p204, %s205, %s206
      %p210 = pneg %p204
      %p211 = scmp.eq.s32.totalorder %s17, 3
      %p212 = por %p210, %p211
      %p213 = scmp.ne.s32.totalorder %s205, %s208
      %p214 = scmp.eq.s32.totalorder %s17, 0
      %p215 = por %p213, %p214
      %p216 = scmp.ne.s32.totalorder %s205, %s208
      %p217 = scmp.eq.s32.totalorder %s22, 3
      %p218 = por %p216, %p217
      %p219 = scmp.ne.s32.totalorder %s208, %s209
      %p220 = scmp.eq.s32.totalorder %s22, 0
      %p221 = por %p219, %p220
      %p222 = scmp.ne.s32.totalorder %s208, %s209
      %p223 = scmp.eq.s32.totalorder %s23, 3
      %p224 = por %p222, %p223
      %p226 = scmp.ne.s32.totalorder %s209, %s225
      %p227 = scmp.eq.s32.totalorder %s23, 0
      %p228 = por %p226, %p227
      %p229 = scmp.le.s32.totalorder 1, %s17
      %p230 = scmp.lt.s32.totalorder %s17, 5
      %p231 = pnand %p229, %p230
      %p232 = pneg %p231
      // Predicated region
      $region9: #{hire_block_forward.6} parent=5 // pred_check
        _
      $region10: #{hire_block_forward.6} parent=5 // pred_check_branch
        %234 = sbr.rel (%p231) target = $region12
      $region11: #{hire_block_forward.6} parent=5 // pred_region
        %s235 = ssub.s32 %s17, 1
        // Predicated region
        $region13: #{hire_block_forward.6} parent=11 // pred_check
          %p236 = pneg %p78
        $region14: #{hire_block_forward.6} parent=11 // pred_check_branch
          %238 = sbr.rel (%p236) target = $region16
        $region15: #{hire_block_forward.6} parent=11 // pred_region
          _
        $region16: #{hire_block_forward.6} parent=11 // pred_fallthru
          _
        // Predicated region
        $region17: #{hire_block_forward.6} parent=11 // pred_check
          %p239 = pneg %p99
        $region18: #{hire_block_forward.6} parent=11 // pred_check_branch
          %241 = sbr.rel (%p239) target = $region20
        $region19: #{hire_block_forward.6} parent=11 // pred_region
          _
        $region20: #{hire_block_forward.6} parent=11 // pred_fallthru
          _
        // Predicated region
        $region21: #{hire_block_forward.6} parent=11 // pred_check
          %p242 = pneg %p120
        $region22: #{hire_block_forward.6} parent=11 // pred_check_branch
          %244 = sbr.rel (%p242) target = $region24
        $region23: #{hire_block_forward.6} parent=11 // pred_region
          _
        $region24: #{hire_block_forward.6} parent=11 // pred_fallthru
          _
        // Predicated region
        $region25: #{hire_block_forward.6} parent=11 // pred_check
          %p245 = pneg %p141
        $region26: #{hire_block_forward.6} parent=11 // pred_check_branch
          %247 = sbr.rel (%p245) target = $region28
        $region27: #{hire_block_forward.6} parent=11 // pred_region
          _
        $region28: #{hire_block_forward.6} parent=11 // pred_fallthru
          _
      $region12: #{hire_block_forward.6} parent=5 // pred_fallthru
        _
      %p248 = scmp.lt.s32.totalorder %s17, 4
      // Predicated region
      $region29: #{hire_block_forward.6} parent=5 // pred_check
        %p249 = pneg %p248
      $region30: #{hire_block_forward.6} parent=5 // pred_check_branch
        %251 = sbr.rel (%p249) target = $region32
      $region31: #{hire_block_forward.6} parent=5 // pred_region
        // Predicated region
        $region33: #{hire_block_forward.6} parent=31 // pred_check
          %p252 = pneg %p51
        $region34: #{hire_block_forward.6} parent=31 // pred_check_branch
          %254 = sbr.rel (%p252) target = $region36
        $region35: #{hire_block_forward.6} parent=31 // pred_region
          %s255 = smul.u32 8, %s25
          %p256 = scmp.lt.s32.totalorder %s24, 1
          %s257 = scalar_select %p256, %s24, 1
          %p258 = scmp.lt.s32.totalorder %s255, 15
          %s259 = scalar_select %p258, %s255, 15
          %s260 = smul.addr %s257, 16
          %s261 = sadd.s32 %s259, %s260
          %s262 = smul.addr %s261, 4
          %s263 = scalar_lea.vmem %s0, %s262
          %s264 = smul.u32 8, %s25
        $region36: #{hire_block_forward.6} parent=31 // pred_fallthru
          _
      $region32: #{hire_block_forward.6} parent=5 // pred_fallthru
        _
      %p265 = scmp.le.s32.totalorder 1, %s17
      %p266 = scmp.lt.s32.totalorder %s17, 5
      %p267 = pnand %p265, %p266
      %p268 = pneg %p267
      // Predicated region
      $region37: #{hire_block_forward.6} parent=5 // pred_check
        _
      $region38: #{hire_block_forward.6} parent=5 // pred_check_branch
        %270 = sbr.rel (%p267) target = $region40
      $region39: #{hire_block_forward.6} parent=5 // pred_region
        %s271 = ssub.s32 %s17, 1
        %s272 = smul.u32 8, %s27
        %p273 = scmp.lt.s32.totalorder %s26, 1
        %s274 = scalar_select %p273, %s26, 1
        %p275 = scmp.lt.s32.totalorder %s272, 15
        %s276 = scalar_select %p275, %s272, 15
        %s277 = smul.addr %s274, 16
        %s278 = sadd.s32 %s276, %s277
        %s279 = smul.addr %s278, 4
        %s280 = scalar_lea.vmem %s0, %s279
        %p281 = pneg %p57
        %p282 = pneg %p54
        %p283 = pneg %p78
        %p284 = pneg %p75
        %p285 = pneg %p99
        %p286 = pneg %p96
        %p287 = pneg %p120
        %p288 = pneg %p117
        %p289 = pneg %p141
        %p290 = pneg %p138
        %p291 = pneg %p169
        %p292 = pneg %p166
        %s293 = smul.u32 8, %s27
        %p294 = scmp.lt.s32.totalorder %s26, 1
        %s295 = scalar_select %p294, %s26, 1
        %p296 = scmp.lt.s32.totalorder %s293, 15
        %s297 = scalar_select %p296, %s293, 15
        %s298 = smul.addr %s295, 16
        %s299 = sadd.s32 %s297, %s298
        %s300 = smul.addr %s299, 4
        %s301 = scalar_lea.vmem %s5, %s300
        %p302 = pneg %p195
        %p303 = pneg %p192
        %p304 = scmp.lt.s32.totalorder %s26, 1
        %s305 = scalar_select %p304, %s26, 1
        %s306 = scalar_lea.vmem %s6, %s305
        %p307 = pneg %p221
        %p308 = pneg %p218
        %s309 = sand.u32 %s208, 1
        %s310 = scalar_lea.sflag [#allocation3], %s309
        %s311 = sand.u32 %s208, 1
        %s312 = scalar_lea.vmem [#allocation2], %s311
        %s313 = smul.u32 8, %s27
        %p314 = scmp.lt.s32.totalorder %s26, 1
        %s315 = scalar_select %p314, %s26, 1
        %p316 = scmp.lt.s32.totalorder %s313, 15
        %s317 = scalar_select %p316, %s313, 15
        %s318 = smul.addr %s315, 16
        %s319 = sadd.s32 %s317, %s318
        %s320 = smul.addr %s319, 4
        %s321 = scalar_lea.vmem %s0, %s320
        %s322 = smul.u32 8, %s27
        %s323 = smul.u32 8, %s27
        %p324 = scmp.lt.s32.totalorder %s26, 1
        %s325 = scalar_select %p324, %s26, 1
        %p326 = scmp.lt.s32.totalorder %s323, 15
        %s327 = scalar_select %p326, %s323, 15
        %s328 = smul.addr %s325, 16
        %s329 = sadd.s32 %s327, %s328
        %s330 = smul.addr %s329, 4
        %s331 = scalar_lea.vmem %s5, %s330
        %s332 = smul.u32 8, %s27
        %p333 = scmp.lt.s32.totalorder %s26, 1
        %s334 = scalar_select %p333, %s26, 1
        %s335 = scalar_lea.vmem %s6, %s334
        %v337 = vld [vmem:[%s321] sm:$0xf]
        %v338 = vld [vmem:[%s321 + $0x4] sm:$0xf]
        %v339 = vld [vmem:[%s321 + $0x8] sm:$0xf]
        %v340 = vld [vmem:[%s321 + $0xc] sm:$0xf]
        %v341 = vld [vmem:[%s321 + $0x10] sm:$0xf]
        %v342 = vld [vmem:[%s321 + $0x14] sm:$0xf]
        %v343 = vld [vmem:[%s321 + $0x18] sm:$0xf]
        %v344 = vld [vmem:[%s321 + $0x1c] sm:$0xf]
        %v345 = vld [vmem:[%s1] sm:$0xf]
        %v346 = vld [vmem:[%s1 + $0x4] sm:$0xf]
        %v347 = vld [vmem:[%s1 + $0x8] sm:$0xf]
        %v348 = vld [vmem:[%s1 + $0xc] sm:$0xf]
        %v349 = vld [vmem:[%s2] sm:$0x1]
        %v351 = vlaneseq
        %v352 = vshrl.u32 %v351, 7
        %v353 = vsub.s32 0, %v352
        %v354 = vrot.slane %v349, %v353
        %v364 = vunpack.c.l.b16 %v337
        %v365 = vunpack.c.l.b16 %v338
        %v366 = vunpack.c.l.b16 %v339
        %v367 = vunpack.c.l.b16 %v340
        %v368 = vunpack.c.l.b16 %v341
        %v369 = vunpack.c.l.b16 %v342
        %v370 = vunpack.c.l.b16 %v343
        %v371 = vunpack.c.l.b16 %v344
        %v372 = vpack.c.b16 %v365, %v364
        %v373 = vpack.c.b16 %v367, %v366
        %v374 = vpack.c.b16 %v369, %v368
        %v375 = vpack.c.b16 %v371, %v370
        %v380 = vunpack.c.l.b16 %v345
        %v381 = vunpack.c.l.b16 %v346
        %v382 = vunpack.c.l.b16 %v347
        %v383 = vunpack.c.l.b16 %v348
        %v384 = vpack.c.b16 %v381, %v380
        %v385 = vpack.c.b16 %v383, %v382
        %vm388 = vcmask 261120
        %v390 = vsel %vm388, %v372, 0
        %v393 = vsel %vm388, %v373, 0
        %v396 = vsel %vm388, %v374, 0
        %v399 = vsel %vm388, %v375, 0
        %401 = vmatprep.subr.bf16.mxu0 0
        %402 = vmatpush1.bf16.msra.mxu0 0
        %403 = vmatprep.subr.bf16.mxu0 0
        %404 = vmatpush1.bf16.msra.mxu0 0
        %405 = vmatprep.subr.bf16.mxu0 0
        %406 = vmatpush1.bf16.msra.mxu0 0
        %407 = vmatprep.subr.bf16.mxu0 0
        %408 = vmatpush1.bf16.msra.mxu0 0
        %409 = vmatprep.subr.bf16.mxu0 0
        %410 = vmatpush1.bf16.msra.mxu0 0
        %411 = vmatprep.subr.bf16.mxu0 0
        %412 = vmatpush1.bf16.msra.mxu0 0
        %413 = vmatprep.subr.bf16.mxu0 0
        %414 = vmatpush1.bf16.msra.mxu0 %v385
        %415 = vmatprep.subr.bf16.mxu0 0
        %416 = vmatpush1.bf16.msra.mxu0 %v384
        %417 = vmatprep.subr.bf16.mxu0 0
        %418 = vmatpush2.bf16.msra.mxu0 0
        %419 = vmatprep.subr.bf16.mxu0 0
        %420 = vmatpush2.bf16.msra.mxu0 0
        %421 = vmatprep.subr.bf16.mxu0 0
        %422 = vmatpush2.bf16.msra.mxu0 0
        %423 = vmatprep.subr.bf16.mxu0 0
        %424 = vmatpush2.bf16.msra.mxu0 0
        %425 = vmatprep.subr.bf16.mxu0 0
        %426 = vmatpush2.bf16.msra.mxu0 0
        %427 = vmatprep.subr.bf16.mxu0 0
        %428 = vmatpush2.bf16.msra.mxu0 0
        %429 = vmatprep.subr.bf16.mxu0 0
        %430 = vmatpush2.bf16.msra.mxu0 0
        %431 = vmatprep.subr.bf16.mxu0 0
        %432 = vmatpush2.bf16.msra.mxu0 0
        %433 = vmatprep.mubr.bf16.mxu0 0
        %434 = vmatmul.mubr.bf16.gmra.mxu0 %v390
        %v435 = vpop.f32.mrf.mxu0
        %v436 = vadd.f32 %v354, %v435
        %v437 = vpop.f32.mrf.mxu0
        %v438 = vpop.f32.mrf.mxu0
        %v439 = vadd.f32 %v354, %v438
        %v440 = vpop.f32.mrf.mxu0
        %441 = vmatprep.mubr.bf16.mxu0 0
        %442 = vmatmul.mubr.bf16.gmra.mxu0 %v393
        %v443 = vpop.f32.mrf.mxu0
        %v444 = vadd.f32 %v354, %v443
        %v445 = vpop.f32.mrf.mxu0
        %v446 = vpop.f32.mrf.mxu0
        %v447 = vadd.f32 %v354, %v446
        %v448 = vpop.f32.mrf.mxu0
        %449 = vmatprep.mubr.bf16.mxu0 0
        %450 = vmatmul.mubr.bf16.gmra.mxu0 %v396
        %v451 = vpop.f32.mrf.mxu0
        %v452 = vadd.f32 %v354, %v451
        %v453 = vpop.f32.mrf.mxu0
        %v454 = vpop.f32.mrf.mxu0
        %v455 = vadd.f32 %v354, %v454
        %v456 = vpop.f32.mrf.mxu0
        %457 = vmatprep.mubr.bf16.mxu0 0
        %458 = vmatmul.mubr.bf16.gmra.mxu0 %v399
        %v459 = vpop.f32.mrf.mxu0
        %v460 = vadd.f32 %v354, %v459
        %v461 = vpop.f32.mrf.mxu0
        %v462 = vpop.f32.mrf.mxu0
        %v463 = vadd.f32 %v354, %v462
        %v464 = vpop.f32.mrf.mxu0
        %465 = vdwg.mxu0
        %v466 = vmax.f32 %v436, 0.0
        %v467 = vmax.f32 %v439, 0.0
        %v468 = vmax.f32 %v444, 0.0
        %v469 = vmax.f32 %v447, 0.0
        %v470 = vmax.f32 %v452, 0.0
        %v471 = vmax.f32 %v455, 0.0
        %v472 = vmax.f32 %v460, 0.0
        %v473 = vmax.f32 %v463, 0.0
        %v474 = vpack.c.bf16 %v467, %v466
        %v475 = vpack.c.bf16 %v469, %v468
        %v476 = vpack.c.bf16 %v471, %v470
        %v477 = vpack.c.bf16 %v473, %v472
        %v478 = vld [vmem:[%s3] sm:$0xf]
        %v479 = vld [vmem:[%s4] sm:$0x1]
        %v481 = vlaneseq
        %v482 = vshrl.u32 %v481, 7
        %v483 = vsub.s32 0, %v482
        %v484 = vrot.slane %v479, %v483
        %vm486 = vcmask 64512
        %v488 = vsel %vm486, %v474, 0
        %v491 = vsel %vm486, %v475, 0
        %v494 = vsel %vm486, %v476, 0
        %v497 = vsel %vm486, %v477, 0
        %vm499 = vcmask 1043456
        %v501 = vsel %vm499, %v478, 0
        %503 = vmatprep.subr.bf16.mxu0 0
        %504 = vmatpush1.bf16.msra.mxu0 0
        %505 = vmatprep.subr.bf16.mxu0 0
        %506 = vmatpush1.bf16.msra.mxu0 0
        %507 = vmatprep.subr.bf16.mxu0 0
        %508 = vmatpush1.bf16.msra.mxu0 0
        %509 = vmatprep.subr.bf16.mxu0 0
        %510 = vmatpush1.bf16.msra.mxu0 0
        %511 = vmatprep.subr.bf16.mxu0 0
        %512 = vmatpush1.bf16.msra.mxu0 0
        %513 = vmatprep.subr.bf16.mxu0 0
        %514 = vmatpush1.bf16.msra.mxu0 0
        %515 = vmatprep.subr.bf16.mxu0 0
        %516 = vmatpush1.bf16.msra.mxu0 0
        %517 = vmatprep.subr.bf16.mxu0 0
        %518 = vmatpush1.bf16.msra.mxu0 %v501
        %519 = vmatprep.subr.bf16.mxu0 0
        %520 = vmatpush2.bf16.msra.mxu0 0
        %521 = vmatprep.subr.bf16.mxu0 0
        %522 = vmatpush2.bf16.msra.mxu0 0
        %523 = vmatprep.subr.bf16.mxu0 0
        %524 = vmatpush2.bf16.msra.mxu0 0
        %525 = vmatprep.subr.bf16.mxu0 0
        %526 = vmatpush2.bf16.msra.mxu0 0
        %527 = vmatprep.subr.bf16.mxu0 0
        %528 = vmatpush2.bf16.msra.mxu0 0
        %529 = vmatprep.subr.bf16.mxu0 0
        %530 = vmatpush2.bf16.msra.mxu0 0
        %531 = vmatprep.subr.bf16.mxu0 0
        %532 = vmatpush2.bf16.msra.mxu0 0
        %533 = vmatprep.subr.bf16.mxu0 0
        %534 = vmatpush2.bf16.msra.mxu0 0
        %535 = vmatprep.mubr.bf16.mxu0 0
        %536 = vmatmul.mubr.bf16.gmra.mxu0 %v488
        %v537 = vpop.f32.mrf.mxu0
        %v538 = vadd.f32 %v484, %v537
        %v539 = vpop.f32.mrf.mxu0
        %v540 = vpop.f32.mrf.mxu0
        %v541 = vadd.f32 %v484, %v540
        %v542 = vpop.f32.mrf.mxu0
        %543 = vmatprep.mubr.bf16.mxu0 0
        %544 = vmatmul.mubr.bf16.gmra.mxu0 %v491
        %v545 = vpop.f32.mrf.mxu0
        %v546 = vadd.f32 %v484, %v545
        %v547 = vpop.f32.mrf.mxu0
        %v548 = vpop.f32.mrf.mxu0
        %v549 = vadd.f32 %v484, %v548
        %v550 = vpop.f32.mrf.mxu0
        %551 = vmatprep.mubr.bf16.mxu0 0
        %552 = vmatmul.mubr.bf16.gmra.mxu0 %v494
        %v553 = vpop.f32.mrf.mxu0
        %v554 = vadd.f32 %v484, %v553
        %v555 = vpop.f32.mrf.mxu0
        %v556 = vpop.f32.mrf.mxu0
        %v557 = vadd.f32 %v484, %v556
        %v558 = vpop.f32.mrf.mxu0
        %559 = vmatprep.mubr.bf16.mxu0 0
        %560 = vmatmul.mubr.bf16.gmra.mxu0 %v497
        %v561 = vpop.f32.mrf.mxu0
        %v562 = vadd.f32 %v484, %v561
        %v563 = vpop.f32.mrf.mxu0
        %v564 = vpop.f32.mrf.mxu0
        %v565 = vadd.f32 %v484, %v564
        %v566 = vpop.f32.mrf.mxu0
        %567 = vdwg.mxu0
        %v568 = vpack.c.bf16 %v541, %v538
        %v569 = vpack.c.bf16 %v549, %v546
        %v570 = vpack.c.bf16 %v557, %v554
        %v571 = vpack.c.bf16 %v565, %v562
        %v576 = vunpack.c.l.b16 %v568
        %v577 = vunpack.c.h.b16 %v568
        %v578 = vunpack.c.l.b16 %v569
        %v579 = vunpack.c.h.b16 %v569
        %v580 = vunpack.c.l.b16 %v570
        %v581 = vunpack.c.h.b16 %v570
        %v582 = vunpack.c.l.b16 %v571
        %v583 = vunpack.c.h.b16 %v571
        %v584 = vpack.c.b16 %v576, %v576
        %v585 = vpack.c.b16 %v577, %v577
        %v586 = vpack.c.b16 %v578, %v578
        %v587 = vpack.c.b16 %v579, %v579
        %v588 = vpack.c.b16 %v580, %v580
        %v589 = vpack.c.b16 %v581, %v581
        %v590 = vpack.c.b16 %v582, %v582
        %v591 = vpack.c.b16 %v583, %v583
        %vm600 = vcmask 257024
        %601 = vst.msk [vmem:[%s331] sm:$0xf] %vm600, %v584
        %602 = vst.msk [vmem:[%s331 + $0x4] sm:$0xf] %vm600, %v585
        %603 = vst.msk [vmem:[%s331 + $0x8] sm:$0xf] %vm600, %v586
        %604 = vst.msk [vmem:[%s331 + $0xc] sm:$0xf] %vm600, %v587
        %605 = vst.msk [vmem:[%s331 + $0x10] sm:$0xf] %vm600, %v588
        %606 = vst.msk [vmem:[%s331 + $0x14] sm:$0xf] %vm600, %v589
        %607 = vst.msk [vmem:[%s331 + $0x18] sm:$0xf] %vm600, %v590
        %608 = vst.msk [vmem:[%s331 + $0x1c] sm:$0xf] %vm600, %v591
        %p609 = scmp.eq.s32.totalorder %s27, 0
        // Predicated region
        $region41: #{hire_block_forward.6} parent=39 // pred_check
          %p610 = pneg %p609
        $region42: #{hire_block_forward.6} parent=39 // pred_check_branch
          %612 = sbr.rel (%p610) target = $region44
        $region43: #{hire_block_forward.6} parent=39 // pred_region
          %vm613 = vcmask 253952
          %614 = vst.msk [vmem:[%s335] sm:$0x1] %vm613, 0.0
          %615 = vst.msk [vmem:[%s312] sm:$0x1] %vm613, 0.0
        $region44: #{hire_block_forward.6} parent=39 // pred_fallthru
          _
        %v616 = vld [vmem:[%s335] sm:$0x1]
        %v617 = vsel %vm388, %v538, 0.0
        %v618 = vsel %vm388, %v541, 0.0
        %v619 = vadd.f32 %v617, %v618
        %v620 = vsel %vm388, %v546, 0.0
        %v621 = vadd.f32 %v619, %v620
        %v622 = vsel %vm388, %v549, 0.0
        %v623 = vadd.f32 %v621, %v622
        %v624 = vsel %vm388, %v554, 0.0
        %v625 = vadd.f32 %v623, %v624
        %v626 = vsel %vm388, %v557, 0.0
        %v627 = vadd.f32 %v625, %v626
        %v628 = vsel %vm388, %v562, 0.0
        %v629 = vadd.f32 %v627, %v628
        %v630 = vsel %vm388, %v565, 0.0
        %v631 = vadd.f32 %v629, %v630
        %v632 = vrot.slane %v631, 4
        %v633 = vadd.f32 %v631, %v632
        %v634 = vrot.slane %v633, 2
        %v635 = vadd.f32 %v633, %v634
        %v636 = vrot.slane %v635, 1
        %v637 = vadd.f32 %v635, %v636
        %v638 = vadd.f32 %v616, %v637
        %vm639 = vcmask 253952
        %640 = vst.msk [vmem:[%s335] sm:$0x1] %vm639, %v638
        %v641 = vld [vmem:[%s312] sm:$0x1]
        %v642 = vunpack.c.l.bf16 %v337
        %v643 = vunpack.c.l.bf16 %v338
        %v644 = vunpack.c.l.bf16 %v339
        %v645 = vunpack.c.l.bf16 %v340
        %v646 = vunpack.c.l.bf16 %v341
        %v647 = vunpack.c.l.bf16 %v342
        %v648 = vunpack.c.l.bf16 %v343
        %v649 = vunpack.c.l.bf16 %v344
        %v650 = vsel %vm388, %v642, 0.0
        %v651 = vsel %vm388, %v643, 0.0
        %v652 = vadd.f32 %v650, %v651
        %v653 = vsel %vm388, %v644, 0.0
        %v654 = vadd.f32 %v652, %v653
        %v655 = vsel %vm388, %v645, 0.0
        %v656 = vadd.f32 %v654, %v655
        %v657 = vsel %vm388, %v646, 0.0
        %v658 = vadd.f32 %v656, %v657
        %v659 = vsel %vm388, %v647, 0.0
        %v660 = vadd.f32 %v658, %v659
        %v661 = vsel %vm388, %v648, 0.0
        %v662 = vadd.f32 %v660, %v661
        %v663 = vsel %vm388, %v649, 0.0
        %v664 = vadd.f32 %v662, %v663
        %v665 = vrot.slane %v664, 4
        %v666 = vadd.f32 %v664, %v665
        %v667 = vrot.slane %v666, 2
        %v668 = vadd.f32 %v666, %v667
        %v669 = vrot.slane %v668, 1
        %v670 = vadd.f32 %v668, %v669
        %v671 = vadd.f32 %v641, %v670
        %672 = vst.msk [vmem:[%s312] sm:$0x1] %vm639, %v671
        %s673 = smul.u32 8, %s27
        %p674 = scmp.lt.s32.totalorder %s26, 1
        %s675 = scalar_select %p674, %s26, 1
        %p676 = scmp.lt.s32.totalorder %s673, 15
        %s677 = scalar_select %p676, %s673, 15
        %s678 = smul.addr %s675, 16
        %s679 = sadd.s32 %s677, %s678
        %s680 = smul.addr %s679, 4
        %s681 = scalar_lea.vmem %s5, %s680
        %p682 = scmp.lt.s32.totalorder %s26, 1
        %s683 = scalar_select %p682, %s26, 1
        %s684 = scalar_lea.vmem %s6, %s683
        %s685 = sand.u32 %s208, 1
        %s686 = scalar_lea.sflag [#allocation3], %s685
        %s687 = sand.u32 %s208, 1
        %s688 = scalar_lea.vmem [#allocation2], %s687
        // Predicated region
        $region45: #{hire_block_forward.6} parent=39 // pred_check
          %p689 = pneg %p166
        $region46: #{hire_block_forward.6} parent=39 // pred_check_branch
          %691 = sbr.rel (%p689) target = $region48
        $region47: #{hire_block_forward.6} parent=39 // pred_region
          %s692 = smul.u32 8, %s27
        $region48: #{hire_block_forward.6} parent=39 // pred_fallthru
          _
        // Predicated region
        $region49: #{hire_block_forward.6} parent=39 // pred_check
          %p693 = pneg %p192
        $region50: #{hire_block_forward.6} parent=39 // pred_check_branch
          %695 = sbr.rel (%p693) target = $region52
        $region51: #{hire_block_forward.6} parent=39 // pred_region
          _
        $region52: #{hire_block_forward.6} parent=39 // pred_fallthru
          _
        // Predicated region
        $region53: #{hire_block_forward.6} parent=39 // pred_check
          %p696 = pneg %p218
        $region54: #{hire_block_forward.6} parent=39 // pred_check_branch
          %698 = sbr.rel (%p696) target = $region56
        $region55: #{hire_block_forward.6} parent=39 // pred_region
          %s700 = ssub.s32 16, 16
          %701 = vsyncadd %s686, %s700
          %s702 = smul.addr %s26, 16
          %s703 = scalar_lea.hbm %s7, %s702
          %s705 = sshll.u32 %s688, 4
          %s706 = int_to_ptr.vmem [resolvable:$true] %s705
          %708 = dma.vmem_to_hbm [thread:$0]  %s706, 16, %s703, %s686
        $region56: #{hire_block_forward.6} parent=39 // pred_fallthru
          _
      $region40: #{hire_block_forward.6} parent=5 // pred_fallthru
        _
      %p709 = scmp.le.s32.totalorder 2, %s17
      // Predicated region
      $region57: #{hire_block_forward.6} parent=5 // pred_check
        %p710 = pneg %p709
      $region58: #{hire_block_forward.6} parent=5 // pred_check_branch
        %712 = sbr.rel (%p710) target = $region60
      $region59: #{hire_block_forward.6} parent=5 // pred_region
        %s713 = ssub.s32 %s17, 2
        // Predicated region
        $region61: #{hire_block_forward.6} parent=59 // pred_check
          %p714 = pneg %p172
        $region62: #{hire_block_forward.6} parent=59 // pred_check_branch
          %716 = sbr.rel (%p714) target = $region64
        $region63: #{hire_block_forward.6} parent=59 // pred_region
          %s717 = smul.u32 8, %s29
          %p718 = scmp.lt.s32.totalorder %s28, 1
          %s719 = scalar_select %p718, %s28, 1
          %p720 = scmp.lt.s32.totalorder %s717, 15
          %s721 = scalar_select %p720, %s717, 15
          %s722 = smul.addr %s719, 16
          %s723 = sadd.s32 %s721, %s722
          %s724 = smul.addr %s723, 4
          %s725 = scalar_lea.vmem %s5, %s724
        $region64: #{hire_block_forward.6} parent=59 // pred_fallthru
          _
        // Predicated region
        $region65: #{hire_block_forward.6} parent=59 // pred_check
          %p726 = pneg %p198
        $region66: #{hire_block_forward.6} parent=59 // pred_check_branch
          %728 = sbr.rel (%p726) target = $region68
        $region67: #{hire_block_forward.6} parent=59 // pred_region
          %p729 = scmp.lt.s32.totalorder %s28, 1
          %s730 = scalar_select %p729, %s28, 1
          %s731 = scalar_lea.vmem %s6, %s730
        $region68: #{hire_block_forward.6} parent=59 // pred_fallthru
          _
        // Predicated region
        $region69: #{hire_block_forward.6} parent=59 // pred_check
          %p732 = pneg %p224
        $region70: #{hire_block_forward.6} parent=59 // pred_check_branch
          %734 = sbr.rel (%p732) target = $region72
        $region71: #{hire_block_forward.6} parent=59 // pred_region
          %s735 = sand.u32 %s209, 1
          %s736 = scalar_lea.sflag [#allocation3], %s735
          %s737 = sand.u32 %s209, 1
          %s738 = scalar_lea.vmem [#allocation2], %s737
          %739 = dma.done %s736, 16
        $region72: #{hire_block_forward.6} parent=59 // pred_fallthru
          _
      $region60: #{hire_block_forward.6} parent=5 // pred_fallthru
        _
    $region6: #{hire_block_forward.6} parent=1 // loop_footer
      %s21 = sadd.s32 1, %s17
    $region7: #{hire_block_forward.6} parent=1 // loop_footer_branch
      %16 = sbr.rel target = $region3
    $region8: #{hire_block_forward.6} parent=1 // loop_exit
      _
    %740 = vsyncpa [#allocation3], 1
    %s741 = scalar_lea.sflag [#allocation3], 1
    %742 = vsyncpa %s741, 1

// kernel: hire_block_forward.7
$region0: #{hire_block_forward.7}
  #allocation0 [shape = 'u32[]', space=smem, size = 0x4, offset = 0x4, fixed_abs, tag = 'smem constant byte address 0x4 - core index']
  #allocation1 [shape = 'u32[144,128]{1,0:T(1,128)}', space=vmem, size = 0x12000, scoped, tag = 'internal scratch']
  %s0 = inlined_call_operand.vmem [shape: f32[2,1,16], index: 0, kind: input, shape index: {}]
  %s1 = inlined_call_operand.vmem [shape: f32[2,1,16], index: 1, kind: input, shape index: {}]
  %s2 = inlined_call_operand.vmem [shape: f32[2,1,16], index: 2, kind: input, shape index: {}]
  %s3 = inlined_call_operand.vmem [shape: f32[16,16], index: 3, kind: input, shape index: {}]
  %s4 = inlined_call_operand.vmem [shape: f32[1,16], index: 4, kind: input, shape index: {}]
  %s5 = inlined_call_operand.vmem [shape: f32[16,4], index: 5, kind: input, shape index: {}]
  %s6 = inlined_call_operand.vmem [shape: f32[1,4], index: 6, kind: input, shape index: {}]
  %s7 = inlined_call_operand.vmem [shape: f32[4,48], index: 7, kind: input, shape index: {}]
  %s8 = inlined_call_operand.vmem [shape: f32[1,48], index: 8, kind: input, shape index: {}]
  %s9 = inlined_call_operand.vmem [shape: f32[2,3,16], index: 9, kind: output, shape index: {}]
  %s10 = sld [smem:[#allocation0]]
  $region69: #{hire_block_forward.7} parent=0
    _
  %s12 = ssub.s32 1, %s10
  %s13 = scalar_select 0, %s12, %s10
  loop: start=0, step=1, limit=4
  $region2: #{hire_block_forward.7} parent=0 // loop_pre_header
    _
  $region3: #{hire_block_forward.7} parent=0 // loop_header
    %s15 = sphi 0, %s19
    %p16 = scmp.ge.s32.totalorder %s15, 4
    %s25 = sphi 0, %s27
    %s28 = sphi 0, %s25
    %s29 = sphi 0, %s28
    %s45 = sphi 0, %s29
    %s51 = sphi 0, %s53
    %s54 = sphi 0, %s51
    %s55 = sphi 0, %s54
    %s71 = sphi 0, %s55
    %s77 = sphi 0, %s79
    %s80 = sphi 0, %s77
    %s81 = sphi 0, %s80
    %s97 = sphi 0, %s81
    %s101 = sphi 0, %s101
    %s103 = sphi 0, %s101
    %s104 = sphi 0, %s103
    %s118 = sphi 0, %s104
    %s122 = sphi 0, %s122
    %s124 = sphi 0, %s122
    %s125 = sphi 0, %s124
    %s139 = sphi 0, %s125
    %s143 = sphi 0, %s143
    %s145 = sphi 0, %s143
    %s146 = sphi 0, %s145
    %s160 = sphi 0, %s146
    %s164 = sphi 0, %s164
    %s166 = sphi 0, %s164
    %s167 = sphi 0, %s166
    %s181 = sphi 0, %s167
    %s185 = sphi 0, %s185
    %s187 = sphi 0, %s185
    %s188 = sphi 0, %s187
    %s202 = sphi 0, %s188
    %s206 = sphi 0, %s206
    %s208 = sphi 0, %s206
    %s209 = sphi 0, %s208
    %s223 = sphi 0, %s209
    %s229 = sphi 0, %s231
    %s232 = sphi 0, %s229
    %s233 = sphi 0, %s232
    %s249 = sphi 0, %s233
  $region4: #{hire_block_forward.7} parent=0 // loop_header_branch
    %18 = sbr.rel (%p16) target = $region8
  $region5: #{hire_block_forward.7} parent=0 // loop_body
    %s20 = ssub.s32 %s15, 1
    %s21 = ssub.s32 %s15, 2
    %s22 = sadd.s32 %s15, 1
    %s23 = ssub.s32 %s15, %s22
    %p24 = scmp.eq.s32.totalorder %s23, 0
    %s26 = sadd.s32 %s25, 1
    %s27 = scalar_select %p24, %s25, %s26
    %p30 = pneg %p24
    %p31 = scmp.eq.s32.totalorder %s15, 1
    %p32 = por %p30, %p31
    %p33 = scmp.ne.s32.totalorder %s25, %s28
    %p34 = scmp.eq.s32.totalorder %s15, 0
    %p35 = por %p33, %p34
    %p36 = scmp.ne.s32.totalorder %s25, %s28
    %p37 = scmp.eq.s32.totalorder %s20, 1
    %p38 = por %p36, %p37
    %p39 = scmp.ne.s32.totalorder %s28, %s29
    %p40 = scmp.eq.s32.totalorder %s20, 0
    %p41 = por %p39, %p40
    %p42 = scmp.ne.s32.totalorder %s28, %s29
    %p43 = scmp.eq.s32.totalorder %s21, 1
    %p44 = por %p42, %p43
    %p46 = scmp.ne.s32.totalorder %s29, %s45
    %p47 = scmp.eq.s32.totalorder %s21, 0
    %p48 = por %p46, %p47
    %s49 = ssub.s32 %s15, %s22
    %p50 = scmp.eq.s32.totalorder %s49, 0
    %s52 = sadd.s32 %s51, 1
    %s53 = scalar_select %p50, %s51, %s52
    %p56 = pneg %p50
    %p57 = scmp.eq.s32.totalorder %s15, 1
    %p58 = por %p56, %p57
    %p59 = scmp.ne.s32.totalorder %s51, %s54
    %p60 = scmp.eq.s32.totalorder %s15, 0
    %p61 = por %p59, %p60
    %p62 = scmp.ne.s32.totalorder %s51, %s54
    %p63 = scmp.eq.s32.totalorder %s20, 1
    %p64 = por %p62, %p63
    %p65 = scmp.ne.s32.totalorder %s54, %s55
    %p66 = scmp.eq.s32.totalorder %s20, 0
    %p67 = por %p65, %p66
    %p68 = scmp.ne.s32.totalorder %s54, %s55
    %p69 = scmp.eq.s32.totalorder %s21, 1
    %p70 = por %p68, %p69
    %p72 = scmp.ne.s32.totalorder %s55, %s71
    %p73 = scmp.eq.s32.totalorder %s21, 0
    %p74 = por %p72, %p73
    %s75 = ssub.s32 %s15, %s22
    %p76 = scmp.eq.s32.totalorder %s75, 0
    %s78 = sadd.s32 %s77, 1
    %s79 = scalar_select %p76, %s77, %s78
    %p82 = pneg %p76
    %p83 = scmp.eq.s32.totalorder %s15, 1
    %p84 = por %p82, %p83
    %p85 = scmp.ne.s32.totalorder %s77, %s80
    %p86 = scmp.eq.s32.totalorder %s15, 0
    %p87 = por %p85, %p86
    %p88 = scmp.ne.s32.totalorder %s77, %s80
    %p89 = scmp.eq.s32.totalorder %s20, 1
    %p90 = por %p88, %p89
    %p91 = scmp.ne.s32.totalorder %s80, %s81
    %p92 = scmp.eq.s32.totalorder %s20, 0
    %p93 = por %p91, %p92
    %p94 = scmp.ne.s32.totalorder %s80, %s81
    %p95 = scmp.eq.s32.totalorder %s21, 1
    %p96 = por %p94, %p95
    %p98 = scmp.ne.s32.totalorder %s81, %s97
    %p99 = scmp.eq.s32.totalorder %s21, 0
    %p100 = por %p98, %p99
    %s102 = sadd.s32 %s101, 1
    %p105 = scmp.eq.s32.totalorder %s15, 1
    %p106 = scmp.ne.s32.totalorder %s101, %s103
    %p107 = scmp.eq.s32.totalorder %s15, 0
    %p108 = por %p106, %p107
    %p109 = scmp.ne.s32.totalorder %s101, %s103
    %p110 = scmp.eq.s32.totalorder %s20, 1
    %p111 = por %p109, %p110
    %p112 = scmp.ne.s32.totalorder %s103, %s104
    %p113 = scmp.eq.s32.totalorder %s20, 0
    %p114 = por %p112, %p113
    %p115 = scmp.ne.s32.totalorder %s103, %s104
    %p116 = scmp.eq.s32.totalorder %s21, 1
    %p117 = por %p115, %p116
    %p119 = scmp.ne.s32.totalorder %s104, %s118
    %p120 = scmp.eq.s32.totalorder %s21, 0
    %p121 = por %p119, %p120
    %s123 = sadd.s32 %s122, 1
    %p126 = scmp.eq.s32.totalorder %s15, 1
    %p127 = scmp.ne.s32.totalorder %s122, %s124
    %p128 = scmp.eq.s32.totalorder %s15, 0
    %p129 = por %p127, %p128
    %p130 = scmp.ne.s32.totalorder %s122, %s124
    %p131 = scmp.eq.s32.totalorder %s20, 1
    %p132 = por %p130, %p131
    %p133 = scmp.ne.s32.totalorder %s124, %s125
    %p134 = scmp.eq.s32.totalorder %s20, 0
    %p135 = por %p133, %p134
    %p136 = scmp.ne.s32.totalorder %s124, %s125
    %p137 = scmp.eq.s32.totalorder %s21, 1
    %p138 = por %p136, %p137
    %p140 = scmp.ne.s32.totalorder %s125, %s139
    %p141 = scmp.eq.s32.totalorder %s21, 0
    %p142 = por %p140, %p141
    %s144 = sadd.s32 %s143, 1
    %p147 = scmp.eq.s32.totalorder %s15, 1
    %p148 = scmp.ne.s32.totalorder %s143, %s145
    %p149 = scmp.eq.s32.totalorder %s15, 0
    %p150 = por %p148, %p149
    %p151 = scmp.ne.s32.totalorder %s143, %s145
    %p152 = scmp.eq.s32.totalorder %s20, 1
    %p153 = por %p151, %p152
    %p154 = scmp.ne.s32.totalorder %s145, %s146
    %p155 = scmp.eq.s32.totalorder %s20, 0
    %p156 = por %p154, %p155
    %p157 = scmp.ne.s32.totalorder %s145, %s146
    %p158 = scmp.eq.s32.totalorder %s21, 1
    %p159 = por %p157, %p158
    %p161 = scmp.ne.s32.totalorder %s146, %s160
    %p162 = scmp.eq.s32.totalorder %s21, 0
    %p163 = por %p161, %p162
    %s165 = sadd.s32 %s164, 1
    %p168 = scmp.eq.s32.totalorder %s15, 1
    %p169 = scmp.ne.s32.totalorder %s164, %s166
    %p170 = scmp.eq.s32.totalorder %s15, 0
    %p171 = por %p169, %p170
    %p172 = scmp.ne.s32.totalorder %s164, %s166
    %p173 = scmp.eq.s32.totalorder %s20, 1
    %p174 = por %p172, %p173
    %p175 = scmp.ne.s32.totalorder %s166, %s167
    %p176 = scmp.eq.s32.totalorder %s20, 0
    %p177 = por %p175, %p176
    %p178 = scmp.ne.s32.totalorder %s166, %s167
    %p179 = scmp.eq.s32.totalorder %s21, 1
    %p180 = por %p178, %p179
    %p182 = scmp.ne.s32.totalorder %s167, %s181
    %p183 = scmp.eq.s32.totalorder %s21, 0
    %p184 = por %p182, %p183
    %s186 = sadd.s32 %s185, 1
    %p189 = scmp.eq.s32.totalorder %s15, 1
    %p190 = scmp.ne.s32.totalorder %s185, %s187
    %p191 = scmp.eq.s32.totalorder %s15, 0
    %p192 = por %p190, %p191
    %p193 = scmp.ne.s32.totalorder %s185, %s187
    %p194 = scmp.eq.s32.totalorder %s20, 1
    %p195 = por %p193, %p194
    %p196 = scmp.ne.s32.totalorder %s187, %s188
    %p197 = scmp.eq.s32.totalorder %s20, 0
    %p198 = por %p196, %p197
    %p199 = scmp.ne.s32.totalorder %s187, %s188
    %p200 = scmp.eq.s32.totalorder %s21, 1
    %p201 = por %p199, %p200
    %p203 = scmp.ne.s32.totalorder %s188, %s202
    %p204 = scmp.eq.s32.totalorder %s21, 0
    %p205 = por %p203, %p204
    %s207 = sadd.s32 %s206, 1
    %p210 = scmp.eq.s32.totalorder %s15, 1
    %p211 = scmp.ne.s32.totalorder %s206, %s208
    %p212 = scmp.eq.s32.totalorder %s15, 0
    %p213 = por %p211, %p212
    %p214 = scmp.ne.s32.totalorder %s206, %s208
    %p215 = scmp.eq.s32.totalorder %s20, 1
    %p216 = por %p214, %p215
    %p217 = scmp.ne.s32.totalorder %s208, %s209
    %p218 = scmp.eq.s32.totalorder %s20, 0
    %p219 = por %p217, %p218
    %p220 = scmp.ne.s32.totalorder %s208, %s209
    %p221 = scmp.eq.s32.totalorder %s21, 1
    %p222 = por %p220, %p221
    %p224 = scmp.ne.s32.totalorder %s209, %s223
    %p225 = scmp.eq.s32.totalorder %s21, 0
    %p226 = por %p224, %p225
    %s227 = ssub.s32 %s15, %s22
    %p228 = scmp.eq.s32.totalorder %s227, 0
    %s230 = sadd.s32 %s229, 1
    %s231 = scalar_select %p228, %s229, %s230
    %p234 = pneg %p228
    %p235 = scmp.eq.s32.totalorder %s15, 1
    %p236 = por %p234, %p235
    %p237 = scmp.ne.s32.totalorder %s229, %s232
    %p238 = scmp.eq.s32.totalorder %s15, 0
    %p239 = por %p237, %p238
    %p240 = scmp.ne.s32.totalorder %s229, %s232
    %p241 = scmp.eq.s32.totalorder %s20, 1
    %p242 = por %p240, %p241
    %p243 = scmp.ne.s32.totalorder %s232, %s233
    %p244 = scmp.eq.s32.totalorder %s20, 0
    %p245 = por %p243, %p244
    %p246 = scmp.ne.s32.totalorder %s232, %s233
    %p247 = scmp.eq.s32.totalorder %s21, 1
    %p248 = por %p246, %p247
    %p250 = scmp.ne.s32.totalorder %s233, %s249
    %p251 = scmp.eq.s32.totalorder %s21, 0
    %p252 = por %p250, %p251
    %p253 = scmp.le.s32.totalorder 1, %s15
    %p254 = scmp.lt.s32.totalorder %s15, 3
    %p255 = pnand %p253, %p254
    %p256 = pneg %p255
    // Predicated region
    $region9: #{hire_block_forward.7} parent=5 // pred_check
      _
    $region10: #{hire_block_forward.7} parent=5 // pred_check_branch
      %258 = sbr.rel (%p255) target = $region12
    $region11: #{hire_block_forward.7} parent=5 // pred_region
      %s259 = ssub.s32 %s15, 1
      // Predicated region
      $region13: #{hire_block_forward.7} parent=11 // pred_check
        %p260 = pneg %p114
      $region14: #{hire_block_forward.7} parent=11 // pred_check_branch
        %262 = sbr.rel (%p260) target = $region16
      $region15: #{hire_block_forward.7} parent=11 // pred_region
        _
      $region16: #{hire_block_forward.7} parent=11 // pred_fallthru
        _
      // Predicated region
      $region17: #{hire_block_forward.7} parent=11 // pred_check
        %p263 = pneg %p135
      $region18: #{hire_block_forward.7} parent=11 // pred_check_branch
        %265 = sbr.rel (%p263) target = $region20
      $region19: #{hire_block_forward.7} parent=11 // pred_region
        _
      $region20: #{hire_block_forward.7} parent=11 // pred_fallthru
        _
      // Predicated region
      $region21: #{hire_block_forward.7} parent=11 // pred_check
        %p266 = pneg %p156
      $region22: #{hire_block_forward.7} parent=11 // pred_check_branch
        %268 = sbr.rel (%p266) target = $region24
      $region23: #{hire_block_forward.7} parent=11 // pred_region
        _
      $region24: #{hire_block_forward.7} parent=11 // pred_fallthru
        _
      // Predicated region
      $region25: #{hire_block_forward.7} parent=11 // pred_check
        %p269 = pneg %p177
      $region26: #{hire_block_forward.7} parent=11 // pred_check_branch
        %271 = sbr.rel (%p269) target = $region28
      $region27: #{hire_block_forward.7} parent=11 // pred_region
        _
      $region28: #{hire_block_forward.7} parent=11 // pred_fallthru
        _
      // Predicated region
      $region29: #{hire_block_forward.7} parent=11 // pred_check
        %p272 = pneg %p198
      $region30: #{hire_block_forward.7} parent=11 // pred_check_branch
        %274 = sbr.rel (%p272) target = $region32
      $region31: #{hire_block_forward.7} parent=11 // pred_region
        _
      $region32: #{hire_block_forward.7} parent=11 // pred_fallthru
        _
      // Predicated region
      $region33: #{hire_block_forward.7} parent=11 // pred_check
        %p275 = pneg %p219
      $region34: #{hire_block_forward.7} parent=11 // pred_check_branch
        %277 = sbr.rel (%p275) target = $region36
      $region35: #{hire_block_forward.7} parent=11 // pred_region
        _
      $region36: #{hire_block_forward.7} parent=11 // pred_fallthru
        _
    $region12: #{hire_block_forward.7} parent=5 // pred_fallthru
      _
    %p278 = scmp.lt.s32.totalorder %s15, 2
    // Predicated region
    $region37: #{hire_block_forward.7} parent=5 // pred_check
      %p279 = pneg %p278
    $region38: #{hire_block_forward.7} parent=5 // pred_check_branch
      %281 = sbr.rel (%p279) target = $region40
    $region39: #{hire_block_forward.7} parent=5 // pred_region
      // Predicated region
      $region41: #{hire_block_forward.7} parent=39 // pred_check
        %p282 = pneg %p35
      $region42: #{hire_block_forward.7} parent=39 // pred_check_branch
        %284 = sbr.rel (%p282) target = $region44
      $region43: #{hire_block_forward.7} parent=39 // pred_region
        %p285 = scmp.lt.s32.totalorder %s15, 1
        %s286 = scalar_select %p285, %s15, 1
        %s287 = scalar_lea.vmem %s0, %s286
      $region44: #{hire_block_forward.7} parent=39 // pred_fallthru
        _
      // Predicated region
      $region45: #{hire_block_forward.7} parent=39 // pred_check
        %p288 = pneg %p61
      $region46: #{hire_block_forward.7} parent=39 // pred_check_branch
        %290 = sbr.rel (%p288) target = $region48
      $region47: #{hire_block_forward.7} parent=39 // pred_region
        %p291 = scmp.lt.s32.totalorder %s15, 1
        %s292 = scalar_select %p291, %s15, 1
        %s293 = scalar_lea.vmem %s1, %s292
      $region48: #{hire_block_forward.7} parent=39 // pred_fallthru
        _
      // Predicated region
      $region49: #{hire_block_forward.7} parent=39 // pred_check
        %p294 = pneg %p87
      $region50: #{hire_block_forward.7} parent=39 // pred_check_branch
        %296 = sbr.rel (%p294) target = $region52
      $region51: #{hire_block_forward.7} parent=39 // pred_region
        %p297 = scmp.lt.s32.totalorder %s15, 1
        %s298 = scalar_select %p297, %s15, 1
        %s299 = scalar_lea.vmem %s2, %s298
      $region52: #{hire_block_forward.7} parent=39 // pred_fallthru
        _
    $region40: #{hire_block_forward.7} parent=5 // pred_fallthru
      _
    %p300 = scmp.le.s32.totalorder 1, %s15
    %p301 = scmp.lt.s32.totalorder %s15, 3
    %p302 = pnand %p300, %p301
    %p303 = pneg %p302
    // Predicated region
    $region53: #{hire_block_forward.7} parent=5 // pred_check
      _
    $region54: #{hire_block_forward.7} parent=5 // pred_check_branch
      %305 = sbr.rel (%p302) target = $region56
    $region55: #{hire_block_forward.7} parent=5 // pred_region
      %s306 = ssub.s32 %s15, 1
      %p307 = scmp.lt.s32.totalorder %s20, 1
      %s308 = scalar_select %p307, %s20, 1
      %s309 = scalar_lea.vmem %s0, %s308
      %p310 = pneg %p41
      %p311 = pneg %p38
      %p312 = scmp.lt.s32.totalorder %s20, 1
      %s313 = scalar_select %p312, %s20, 1
      %s314 = scalar_lea.vmem %s1, %s313
      %p315 = pneg %p67
      %p316 = pneg %p64
      %p317 = scmp.lt.s32.totalorder %s20, 1
      %s318 = scalar_select %p317, %s20, 1
      %s319 = scalar_lea.vmem %s2, %s318
      %p320 = pneg %p93
      %p321 = pneg %p90
      %p322 = pneg %p114
      %p323 = pneg %p111
      %p324 = pneg %p135
      %p325 = pneg %p132
      %p326 = pneg %p156
      %p327 = pneg %p153
      %p328 = pneg %p177
      %p329 = pneg %p174
      %p330 = pneg %p198
      %p331 = pneg %p195
      %p332 = pneg %p219
      %p333 = pneg %p216
      %p334 = pneg %p245
      %p335 = pneg %p242
      %p336 = scmp.lt.s32.totalorder %s20, 1
      %s337 = scalar_select %p336, %s20, 1
      %s338 = smul.addr %s337, 4
      %s339 = scalar_lea.vmem %s9, %s338
      %p340 = scmp.lt.s32.totalorder %s20, 1
      %s341 = scalar_select %p340, %s20, 1
      %s342 = scalar_lea.vmem %s0, %s341
      %p343 = scmp.lt.s32.totalorder %s20, 1
      %s344 = scalar_select %p343, %s20, 1
      %s345 = scalar_lea.vmem %s1, %s344
      %p346 = scmp.lt.s32.totalorder %s20, 1
      %s347 = scalar_select %p346, %s20, 1
      %s348 = scalar_lea.vmem %s2, %s347
      %p349 = scmp.lt.s32.totalorder %s20, 1
      %s350 = scalar_select %p349, %s20, 1
      %s351 = smul.addr %s350, 4
      %s352 = scalar_lea.vmem %s9, %s351
      %v353 = vld [vmem:[%s342] sm:$0x1]
      %v354 = vld [vmem:[%s345] sm:$0x1]
      %v355 = vld [vmem:[%s348] sm:$0x1]
      %v356 = vld [vmem:[%s3] sm:$0xff]
      %v357 = vld [vmem:[%s3 + $0x8] sm:$0xff]
      %v358 = vld [vmem:[%s4] sm:$0x1]
      %vm359 = vcmask 130048
      %v361 = vsel %vm359, %v355, 0
      %363 = vmatprep.subr.mxu0 0.0
      %364 = vmatpush1.msra.mxu0 0.0
      %365 = vmatprep.subr.mxu0 0.0
      %366 = vmatpush1.msra.mxu0 0.0
      %367 = vmatprep.subr.mxu0 0.0
      %368 = vmatpush1.msra.mxu0 0.0
      %369 = vmatprep.subr.mxu0 0.0
      %370 = vmatpush1.msra.mxu0 0.0
      %371 = vmatprep.subr.mxu0 0.0
      %372 = vmatpush1.msra.mxu0 0.0
      %373 = vmatprep.subr.mxu0 0.0
      %374 = vmatpush1.msra.mxu0 0.0
      %375 = vmatprep.subr.mxu0 0.0
      %376 = vmatpush1.msra.mxu0 0.0
      %377 = vmatprep.subr.mxu0 0.0
      %378 = vmatpush1.msra.mxu0 0.0
      %379 = vmatprep.subr.mxu0 0.0
      %380 = vmatpush1.msra.mxu0 0.0
      %381 = vmatprep.subr.mxu0 0.0
      %382 = vmatpush1.msra.mxu0 0.0
      %383 = vmatprep.subr.mxu0 0.0
      %384 = vmatpush1.msra.mxu0 0.0
      %385 = vmatprep.subr.mxu0 0.0
      %386 = vmatpush1.msra.mxu0 0.0
      %387 = vmatprep.subr.mxu0 0.0
      %388 = vmatpush1.msra.mxu0 0.0
      %389 = vmatprep.subr.mxu0 0.0
      %390 = vmatpush1.msra.mxu0 0.0
      %391 = vmatprep.subr.mxu0 0.0
      %392 = vmatpush1.msra.mxu0 %v357
      %393 = vmatprep.subr.mxu0 0.0
      %394 = vmatpush1.msra.mxu0 %v356
      %395 = vmatprep.subr.mxu0 0.0
      %396 = vmatpush2.msra.mxu0 0.0
      %397 = vmatprep.subr.mxu0 0.0
      %398 = vmatpush2.msra.mxu0 0.0
      %399 = vmatprep.subr.mxu0 0.0
      %400 = vmatpush2.msra.mxu0 0.0
      %401 = vmatprep.subr.mxu0 0.0
      %402 = vmatpush2.msra.mxu0 0.0
      %403 = vmatprep.subr.mxu0 0.0
      %404 = vmatpush2.msra.mxu0 0.0
      %405 = vmatprep.subr.mxu0 0.0
      %406 = vmatpush2.msra.mxu0 0.0
      %407 = vmatprep.subr.mxu0 0.0
      %408 = vmatpush2.msra.mxu0 0.0
      %409 = vmatprep.subr.mxu0 0.0
      %410 = vmatpush2.msra.mxu0 0.0
      %411 = vmatprep.subr.mxu0 0.0
      %412 = vmatpush2.msra.mxu0 0.0
      %413 = vmatprep.subr.mxu0 0.0
      %414 = vmatpush2.msra.mxu0 0.0
      %415 = vmatprep.subr.mxu0 0.0
      %416 = vmatpush2.msra.mxu0 0.0
      %417 = vmatprep.subr.mxu0 0.0
      %418 = vmatpush2.msra.mxu0 0.0
      %419 = vmatprep.subr.mxu0 0.0
      %420 = vmatpush2.msra.mxu0 0.0
      %421 = vmatprep.subr.mxu0 0.0
      %422 = vmatpush2.msra.mxu0 0.0
      %423 = vmatprep.subr.mxu0 0.0
      %424 = vmatpush2.msra.mxu0 0.0
      %425 = vmatprep.subr.mxu0 0.0
      %426 = vmatpush2.msra.mxu0 0.0
      %427 = vmatprep.mubr.f32.mxu0 0.0
      %428 = vmatmul.mubr.f32.gmra.mxu0 %v361
      %v429 = vpop.f32.mrf.mxu0
      %v430 = vadd.f32 %v358, %v429
      %v431 = vpop.f32.mrf.mxu0
      %432 = vdwg.mxu0
      %v433 = vadd.f32 %v353, %v354
      %v434 = vadd.f32 %v433, %v430
      %v435 = vld [vmem:[%s5] sm:$0xff]
      %v436 = vld [vmem:[%s5 + $0x8] sm:$0xff]
      %v437 = vld [vmem:[%s6] sm:$0x1]
      %v439 = vsel %vm359, %v434, 0
      %441 = vmatprep.subr.mxu0 0.0
      %442 = vmatpush1.msra.mxu0 0.0
      %443 = vmatprep.subr.mxu0 0.0
      %444 = vmatpush1.msra.mxu0 0.0
      %445 = vmatprep.subr.mxu0 0.0
      %446 = vmatpush1.msra.mxu0 0.0
      %447 = vmatprep.subr.mxu0 0.0
      %448 = vmatpush1.msra.mxu0 0.0
      %449 = vmatprep.subr.mxu0 0.0
      %450 = vmatpush1.msra.mxu0 0.0
      %451 = vmatprep.subr.mxu0 0.0
      %452 = vmatpush1.msra.mxu0 0.0
      %453 = vmatprep.subr.mxu0 0.0
      %454 = vmatpush1.msra.mxu0 0.0
      %455 = vmatprep.subr.mxu0 0.0
      %456 = vmatpush1.msra.mxu0 0.0
      %457 = vmatprep.subr.mxu0 0.0
      %458 = vmatpush1.msra.mxu0 0.0
      %459 = vmatprep.subr.mxu0 0.0
      %460 = vmatpush1.msra.mxu0 0.0
      %461 = vmatprep.subr.mxu0 0.0
      %462 = vmatpush1.msra.mxu0 0.0
      %463 = vmatprep.subr.mxu0 0.0
      %464 = vmatpush1.msra.mxu0 0.0
      %465 = vmatprep.subr.mxu0 0.0
      %466 = vmatpush1.msra.mxu0 0.0
      %467 = vmatprep.subr.mxu0 0.0
      %468 = vmatpush1.msra.mxu0 0.0
      %469 = vmatprep.subr.mxu0 0.0
      %470 = vmatpush1.msra.mxu0 %v436
      %471 = vmatprep.subr.mxu0 0.0
      %472 = vmatpush1.msra.mxu0 %v435
      %473 = vmatprep.subr.mxu0 0.0
      %474 = vmatpush2.msra.mxu0 0.0
      %475 = vmatprep.subr.mxu0 0.0
      %476 = vmatpush2.msra.mxu0 0.0
      %477 = vmatprep.subr.mxu0 0.0
      %478 = vmatpush2.msra.mxu0 0.0
      %479 = vmatprep.subr.mxu0 0.0
      %480 = vmatpush2.msra.mxu0 0.0
      %481 = vmatprep.subr.mxu0 0.0
      %482 = vmatpush2.msra.mxu0 0.0
      %483 = vmatprep.subr.mxu0 0.0
      %484 = vmatpush2.msra.mxu0 0.0
      %485 = vmatprep.subr.mxu0 0.0
      %486 = vmatpush2.msra.mxu0 0.0
      %487 = vmatprep.subr.mxu0 0.0
      %488 = vmatpush2.msra.mxu0 0.0
      %489 = vmatprep.subr.mxu0 0.0
      %490 = vmatpush2.msra.mxu0 0.0
      %491 = vmatprep.subr.mxu0 0.0
      %492 = vmatpush2.msra.mxu0 0.0
      %493 = vmatprep.subr.mxu0 0.0
      %494 = vmatpush2.msra.mxu0 0.0
      %495 = vmatprep.subr.mxu0 0.0
      %496 = vmatpush2.msra.mxu0 0.0
      %497 = vmatprep.subr.mxu0 0.0
      %498 = vmatpush2.msra.mxu0 0.0
      %499 = vmatprep.subr.mxu0 0.0
      %500 = vmatpush2.msra.mxu0 0.0
      %501 = vmatprep.subr.mxu0 0.0
      %502 = vmatpush2.msra.mxu0 0.0
      %503 = vmatprep.subr.mxu0 0.0
      %504 = vmatpush2.msra.mxu0 0.0
      %505 = vmatprep.mubr.f32.mxu0 0.0
      %506 = vmatmul.mubr.f32.gmra.mxu0 %v439
      %v507 = vpop.f32.mrf.mxu0
      %v508 = vadd.f32 %v437, %v507
      %v509 = vpop.f32.mrf.mxu0
      %510 = vdwg.mxu0
      %v511 = vmul.f32 %v508, 0.5
      %v512 = vmul.f32 %v508, 0.044715
      %v513 = vmul.f32 %v512, %v508
      %v514 = vmul.f32 %v513, %v508
      %v515 = vadd.f32 %v508, %v514
      %v516 = vmul.f32 %v515, 0.7978846
      %v517 = vtanh.pop %v516
      %v518 = vadd.f32 %v517, 1.0
      %v519 = vmul.f32 %v511, %v518
      %v520 = vld [vmem:[%s7] sm:$0xf]
      %v521 = vld [vmem:[%s8] sm:$0x1]
      %vm522 = vcmask 31744
      %v524 = vsel %vm522, %v519, 0
      %vm526 = vcmask 1043456
      %v528 = vsel %vm526, %v520, 0
      %530 = vmatprep.subr.mxu0 0.0
      %531 = vmatpush1.msra.mxu0 0.0
      %532 = vmatprep.subr.mxu0 0.0
      %533 = vmatpush1.msra.mxu0 0.0
      %534 = vmatprep.subr.mxu0 0.0
      %535 = vmatpush1.msra.mxu0 0.0
      %536 = vmatprep.subr.mxu0 0.0
      %537 = vmatpush1.msra.mxu0 0.0
      %538 = vmatprep.subr.mxu0 0.0
      %539 = vmatpush1.msra.mxu0 0.0
      %540 = vmatprep.subr.mxu0 0.0
      %541 = vmatpush1.msra.mxu0 0.0
      %542 = vmatprep.subr.mxu0 0.0
      %543 = vmatpush1.msra.mxu0 0.0
      %544 = vmatprep.subr.mxu0 0.0
      %545 = vmatpush1.msra.mxu0 0.0
      %546 = vmatprep.subr.mxu0 0.0
      %547 = vmatpush1.msra.mxu0 0.0
      %548 = vmatprep.subr.mxu0 0.0
      %549 = vmatpush1.msra.mxu0 0.0
      %550 = vmatprep.subr.mxu0 0.0
      %551 = vmatpush1.msra.mxu0 0.0
      %552 = vmatprep.subr.mxu0 0.0
      %553 = vmatpush1.msra.mxu0 0.0
      %554 = vmatprep.subr.mxu0 0.0
      %555 = vmatpush1.msra.mxu0 0.0
      %556 = vmatprep.subr.mxu0 0.0
      %557 = vmatpush1.msra.mxu0 0.0
      %558 = vmatprep.subr.mxu0 0.0
      %559 = vmatpush1.msra.mxu0 0.0
      %560 = vmatprep.subr.mxu0 0.0
      %561 = vmatpush1.msra.mxu0 %v528
      %562 = vmatprep.subr.mxu0 0.0
      %563 = vmatpush2.msra.mxu0 0.0
      %564 = vmatprep.subr.mxu0 0.0
      %565 = vmatpush2.msra.mxu0 0.0
      %566 = vmatprep.subr.mxu0 0.0
      %567 = vmatpush2.msra.mxu0 0.0
      %568 = vmatprep.subr.mxu0 0.0
      %569 = vmatpush2.msra.mxu0 0.0
      %570 = vmatprep.subr.mxu0 0.0
      %571 = vmatpush2.msra.mxu0 0.0
      %572 = vmatprep.subr.mxu0 0.0
      %573 = vmatpush2.msra.mxu0 0.0
      %574 = vmatprep.subr.mxu0 0.0
      %575 = vmatpush2.msra.mxu0 0.0
      %576 = vmatprep.subr.mxu0 0.0
      %577 = vmatpush2.msra.mxu0 0.0
      %578 = vmatprep.subr.mxu0 0.0
      %579 = vmatpush2.msra.mxu0 0.0
      %580 = vmatprep.subr.mxu0 0.0
      %581 = vmatpush2.msra.mxu0 0.0
      %582 = vmatprep.subr.mxu0 0.0
      %583 = vmatpush2.msra.mxu0 0.0
      %584 = vmatprep.subr.mxu0 0.0
      %585 = vmatpush2.msra.mxu0 0.0
      %586 = vmatprep.subr.mxu0 0.0
      %587 = vmatpush2.msra.mxu0 0.0
      %588 = vmatprep.subr.mxu0 0.0
      %589 = vmatpush2.msra.mxu0 0.0
      %590 = vmatprep.subr.mxu0 0.0
      %591 = vmatpush2.msra.mxu0 0.0
      %592 = vmatprep.subr.mxu0 0.0
      %593 = vmatpush2.msra.mxu0 0.0
      %594 = vmatprep.mubr.f32.mxu0 0.0
      %595 = vmatmul.mubr.f32.gmra.mxu0 %v524
      %v596 = vpop.f32.mrf.mxu0
      %v597 = vadd.f32 %v521, %v596
      %v598 = vpop.f32.mrf.mxu0
      %599 = vdwg.mxu0
      %601 = vrot.lane.b32.xlu0 %v597, 112
      %v602 = vpop.permute.xlu0 %601
      %v604 = vmax.f32 %v597, %v602
      %605 = vrot.lane.b32.xlu0 %v597, 96
      %v606 = vpop.permute.xlu0 %605
      %v608 = vmax.f32 %v604, %v606
      %v609 = vsub.f32 %v597, %v608
      %v610 = vmul.f32 %v609, 1.442695
      %v611 = vpow.pop %v610
      %613 = vrot.lane.b32.xlu0 %v608, 16
      %v614 = vpop.permute.xlu0 %613
      %v616 = vsub.f32 %v597, %v614
      %v617 = vmul.f32 %v616, 1.442695
      %v618 = vpow.pop %v617
      %619 = vrot.lane.b32.xlu0 %v608, 32
      %v620 = vpop.permute.xlu0 %619
      %v622 = vsub.f32 %v597, %v620
      %v623 = vmul.f32 %v622, 1.442695
      %v624 = vpow.pop %v623
      %626 = vrot.lane.b32.xlu0 %v618, 112
      %v627 = vpop.permute.xlu0 %626
      %v629 = vadd.f32 %v611, %v627
      %631 = vrot.lane.b32.xlu0 %v624, 96
      %v632 = vpop.permute.xlu0 %631
      %v634 = vadd.f32 %v629, %v632
      %v635 = vrcp.pop %v634
      %v636 = vmul.f32 1.0, %v635
      %v637 = vmul.f32 %v611, %v636
      %639 = vrot.lane.b32.xlu0 %v636, 16
      %v640 = vpop.permute.xlu0 %639
      %v642 = vmul.f32 %v618, %v640
      %643 = vrot.lane.b32.xlu0 %v636, 32
      %v644 = vpop.permute.xlu0 %643
      %v646 = vmul.f32 %v624, %v644
      %v648 = vrot.slane %v642, 7
      %649 = vrot.lane.b32.xlu0 %v648, 112
      %v650 = vpop.permute.xlu0 %649
      %v653 = vrot.slane %v646, 6
      %654 = vrot.lane.b32.xlu0 %v653, 96
      %v655 = vpop.permute.xlu0 %654
      %vm657 = vcmask 1040384
      %v658 = vsel %vm657, %v637, %v650
      %vm659 = vcmask 1041408
      %v660 = vsel %vm659, %v658, %v655
      %vm661 = vcmask 124928
      %662 = vst.msk [vmem:[%s352] sm:$0x7] %vm661, %v660
      %p663 = scmp.lt.s32.totalorder %s20, 1
      %s664 = scalar_select %p663, %s20, 1
      %s665 = smul.addr %s664, 4
      %s666 = scalar_lea.vmem %s9, %s665
      // Predicated region
      $region57: #{hire_block_forward.7} parent=55 // pred_check
        %p667 = pneg %p242
      $region58: #{hire_block_forward.7} parent=55 // pred_check_branch
        %669 = sbr.rel (%p667) target = $region60
      $region59: #{hire_block_forward.7} parent=55 // pred_region
        _
      $region60: #{hire_block_forward.7} parent=55 // pred_fallthru
        _
    $region56: #{hire_block_forward.7} parent=5 // pred_fallthru
      _
    %p670 = scmp.le.s32.totalorder 2, %s15
    // Predicated region
    $region61: #{hire_block_forward.7} parent=5 // pred_check
      %p671 = pneg %p670
    $region62: #{hire_block_forward.7} parent=5 // pred_check_branch
      %673 = sbr.rel (%p671) target = $region64
    $region63: #{hire_block_forward.7} parent=5 // pred_region
      %s674 = ssub.s32 %s15, 2
      // Predicated region
      $region65: #{hire_block_forward.7} parent=63 // pred_check
        %p675 = pneg %p248
      $region66: #{hire_block_forward.7} parent=63 // pred_check_branch
        %677 = sbr.rel (%p675) target = $region68
      $region67: #{hire_block_forward.7} parent=63 // pred_region
        %p678 = scmp.lt.s32.totalorder %s21, 1
        %s679 = scalar_select %p678, %s21, 1
        %s680 = smul.addr %s679, 4
        %s681 = scalar_lea.vmem %s9, %s680
      $region68: #{hire_block_forward.7} parent=63 // pred_fallthru
        _
    $region64: #{hire_block_forward.7} parent=5 // pred_fallthru
      _
  $region6: #{hire_block_forward.7} parent=0 // loop_footer
    %s19 = sadd.s32 1, %s15
  $region7: #{hire_block_forward.7} parent=0 // loop_footer_branch
    %14 = sbr.rel target = $region3
  $region8: #{hire_block_forward.7} parent=0 // loop_exit
    _

// kernel: hire_block_forward.8
$region0: #{hire_block_forward.8}
  #allocation0 [shape = 'u32[]', space=smem, size = 0x4, offset = 0x4, fixed_abs, tag = 'smem constant byte address 0x4 - core index']
  #allocation1 [shape = 'u32[144,128]{1,0:T(1,128)}', space=vmem, size = 0x12000, scoped, tag = 'internal scratch']
  %s0 = inlined_call_operand.vmem [shape: bf16[2,256,16], index: 0, kind: input, shape index: {}]
  %s1 = inlined_call_operand.vmem [shape: bf16[2,256,16], index: 1, kind: input, shape index: {}]
  %s2 = inlined_call_operand.vmem [shape: bf16[2,256,16], index: 2, kind: input, shape index: {}, may-alias: {2,8}]
  %s3 = inlined_call_operand.vmem [shape: f32[2,3,16], index: 3, kind: input, shape index: {}]
  %s4 = inlined_call_operand.vmem [shape: bf16[16,16], index: 4, kind: input, shape index: {}]
  %s5 = inlined_call_operand.vmem [shape: f32[1,16], index: 5, kind: input, shape index: {}]
  %s6 = inlined_call_operand.vmem [shape: bf16[16,16], index: 6, kind: input, shape index: {}]
  %s7 = inlined_call_operand.vmem [shape: f32[1,16], index: 7, kind: input, shape index: {}]
  %s8 = inlined_call_operand.vmem [shape: bf16[2,256,16], index: 8, kind: output, shape index: {}, may-alias: {2,8}]
  %s9 = sld [smem:[#allocation0]]
  $region65: #{hire_block_forward.8} parent=0
    _
  %s11 = ssub.s32 1, %s9
  %s12 = scalar_select 0, %s11, %s9
  loop: start=0, step=1, limit=6
  $region2: #{hire_block_forward.8} parent=0 // loop_pre_header
    _
  $region3: #{hire_block_forward.8} parent=0 // loop_header
    %s14 = sphi 0, %s18
    %p15 = scmp.ge.s32.totalorder %s14, 6
    %s21 = sphi 0, %s33
    %s22 = sphi 0, %s29
    %s23 = sphi 0, %s21
    %s24 = sphi 0, %s22
    %s25 = sphi 0, %s23
    %s26 = sphi 0, %s24
    %s38 = sphi 0, %s40
    %s41 = sphi 0, %s38
    %s42 = sphi 0, %s41
    %s58 = sphi 0, %s42
    %s66 = sphi 0, %s68
    %s69 = sphi 0, %s66
    %s70 = sphi 0, %s69
    %s86 = sphi 0, %s70
    %s94 = sphi 0, %s96
    %s97 = sphi 0, %s94
    %s98 = sphi 0, %s97
    %s114 = sphi 0, %s98
    %s120 = sphi 0, %s122
    %s123 = sphi 0, %s120
    %s124 = sphi 0, %s123
    %s140 = sphi 0, %s124
    %s144 = sphi 0, %s144
    %s146 = sphi 0, %s144
    %s147 = sphi 0, %s146
    %s161 = sphi 0, %s147
    %s165 = sphi 0, %s165
    %s167 = sphi 0, %s165
    %s168 = sphi 0, %s167
    %s182 = sphi 0, %s168
    %s186 = sphi 0, %s186
    %s188 = sphi 0, %s186
    %s189 = sphi 0, %s188
    %s203 = sphi 0, %s189
    %s207 = sphi 0, %s207
    %s209 = sphi 0, %s207
    %s210 = sphi 0, %s209
    %s224 = sphi 0, %s210
    %s232 = sphi 0, %s234
    %s235 = sphi 0, %s232
    %s236 = sphi 0, %s235
    %s252 = sphi 0, %s236
  $region4: #{hire_block_forward.8} parent=0 // loop_header_branch
    %17 = sbr.rel (%p15) target = $region8
  $region5: #{hire_block_forward.8} parent=0 // loop_body
    %s19 = ssub.s32 %s14, 1
    %s20 = ssub.s32 %s14, 2
    %s27 = sadd.s32 1, %s22
    %p28 = scmp.ge.s32.totalorder %s27, 2
    %s29 = scalar_select %p28, 0, %s27
    %s30 = sadd.s32 1, %s21
    %s31 = scalar_select %p28, %s30, %s21
    %p32 = scmp.ge.s32.totalorder %s31, 2
    %s33 = scalar_select %p32, 0, %s31
    %s34 = ssub.s32 %s21, %s33
    %s35 = ssub.s32 %s22, %s29
    %s36 = sor.u32 %s34, %s35
    %p37 = scmp.eq.s32.totalorder %s36, 0
    %s39 = sadd.s32 %s38, 1
    %s40 = scalar_select %p37, %s38, %s39
    %p43 = pneg %p37
    %p44 = scmp.eq.s32.totalorder %s14, 3
    %p45 = por %p43, %p44
    %p46 = scmp.ne.s32.totalorder %s38, %s41
    %p47 = scmp.eq.s32.totalorder %s14, 0
    %p48 = por %p46, %p47
    %p49 = scmp.ne.s32.totalorder %s38, %s41
    %p50 = scmp.eq.s32.totalorder %s19, 3
    %p51 = por %p49, %p50
    %p52 = scmp.ne.s32.totalorder %s41, %s42
    %p53 = scmp.eq.s32.totalorder %s19, 0
    %p54 = por %p52, %p53
    %p55 = scmp.ne.s32.totalorder %s41, %s42
    %p56 = scmp.eq.s32.totalorder %s20, 3
    %p57 = por %p55, %p56
    %p59 = scmp.ne.s32.totalorder %s42, %s58
    %p60 = scmp.eq.s32.totalorder %s20, 0
    %p61 = por %p59, %p60
    %s62 = ssub.s32 %s21, %s33
    %s63 = ssub.s32 %s22, %s29
    %s64 = sor.u32 %s62, %s63
    %p65 = scmp.eq.s32.totalorder %s64, 0
    %s67 = sadd.s32 %s66, 1
    %s68 = scalar_select %p65, %s66, %s67
    %p71 = pneg %p65
    %p72 = scmp.eq.s32.totalorder %s14, 3
    %p73 = por %p71, %p72
    %p74 = scmp.ne.s32.totalorder %s66, %s69
    %p75 = scmp.eq.s32.totalorder %s14, 0
    %p76 = por %p74, %p75
    %p77 = scmp.ne.s32.totalorder %s66, %s69
    %p78 = scmp.eq.s32.totalorder %s19, 3
    %p79 = por %p77, %p78
    %p80 = scmp.ne.s32.totalorder %s69, %s70
    %p81 = scmp.eq.s32.totalorder %s19, 0
    %p82 = por %p80, %p81
    %p83 = scmp.ne.s32.totalorder %s69, %s70
    %p84 = scmp.eq.s32.totalorder %s20, 3
    %p85 = por %p83, %p84
    %p87 = scmp.ne.s32.totalorder %s70, %s86
    %p88 = scmp.eq.s32.totalorder %s20, 0
    %p89 = por %p87, %p88
    %s90 = ssub.s32 %s21, %s33
    %s91 = ssub.s32 %s22, %s29
    %s92 = sor.u32 %s90, %s91
    %p93 = scmp.eq.s32.totalorder %s92, 0
    %s95 = sadd.s32 %s94, 1
    %s96 = scalar_select %p93, %s94, %s95
    %p99 = pneg %p93
    %p100 = scmp.eq.s32.totalorder %s14, 3
    %p101 = por %p99, %p100
    %p102 = scmp.ne.s32.totalorder %s94, %s97
    %p103 = scmp.eq.s32.totalorder %s14, 0
    %p104 = por %p102, %p103
    %p105 = scmp.ne.s32.totalorder %s94, %s97
    %p106 = scmp.eq.s32.totalorder %s19, 3
    %p107 = por %p105, %p106
    %p108 = scmp.ne.s32.totalorder %s97, %s98
    %p109 = scmp.eq.s32.totalorder %s19, 0
    %p110 = por %p108, %p109
    %p111 = scmp.ne.s32.totalorder %s97, %s98
    %p112 = scmp.eq.s32.totalorder %s20, 3
    %p113 = por %p111, %p112
    %p115 = scmp.ne.s32.totalorder %s98, %s114
    %p116 = scmp.eq.s32.totalorder %s20, 0
    %p117 = por %p115, %p116
    %s118 = ssub.s32 %s21, %s33
    %p119 = scmp.eq.s32.totalorder %s118, 0
    %s121 = sadd.s32 %s120, 1
    %s122 = scalar_select %p119, %s120, %s121
    %p125 = pneg %p119
    %p126 = scmp.eq.s32.totalorder %s14, 3
    %p127 = por %p125, %p126
    %p128 = scmp.ne.s32.totalorder %s120, %s123
    %p129 = scmp.eq.s32.totalorder %s14, 0
    %p130 = por %p128, %p129
    %p131 = scmp.ne.s32.totalorder %s120, %s123
    %p132 = scmp.eq.s32.totalorder %s19, 3
    %p133 = por %p131, %p132
    %p134 = scmp.ne.s32.totalorder %s123, %s124
    %p135 = scmp.eq.s32.totalorder %s19, 0
    %p136 = por %p134, %p135
    %p137 = scmp.ne.s32.totalorder %s123, %s124
    %p138 = scmp.eq.s32.totalorder %s20, 3
    %p139 = por %p137, %p138
    %p141 = scmp.ne.s32.totalorder %s124, %s140
    %p142 = scmp.eq.s32.totalorder %s20, 0
    %p143 = por %p141, %p142
    %s145 = sadd.s32 %s144, 1
    %p148 = scmp.eq.s32.totalorder %s14, 3
    %p149 = scmp.ne.s32.totalorder %s144, %s146
    %p150 = scmp.eq.s32.totalorder %s14, 0
    %p151 = por %p149, %p150
    %p152 = scmp.ne.s32.totalorder %s144, %s146
    %p153 = scmp.eq.s32.totalorder %s19, 3
    %p154 = por %p152, %p153
    %p155 = scmp.ne.s32.totalorder %s146, %s147
    %p156 = scmp.eq.s32.totalorder %s19, 0
    %p157 = por %p155, %p156
    %p158 = scmp.ne.s32.totalorder %s146, %s147
    %p159 = scmp.eq.s32.totalorder %s20, 3
    %p160 = por %p158, %p159
    %p162 = scmp.ne.s32.totalorder %s147, %s161
    %p163 = scmp.eq.s32.totalorder %s20, 0
    %p164 = por %p162, %p163
    %s166 = sadd.s32 %s165, 1
    %p169 = scmp.eq.s32.totalorder %s14, 3
    %p170 = scmp.ne.s32.totalorder %s165, %s167
    %p171 = scmp.eq.s32.totalorder %s14, 0
    %p172 = por %p170, %p171
    %p173 = scmp.ne.s32.totalorder %s165, %s167
    %p174 = scmp.eq.s32.totalorder %s19, 3
    %p175 = por %p173, %p174
    %p176 = scmp.ne.s32.totalorder %s167, %s168
    %p177 = scmp.eq.s32.totalorder %s19, 0
    %p178 = por %p176, %p177
    %p179 = scmp.ne.s32.totalorder %s167, %s168
    %p180 = scmp.eq.s32.totalorder %s20, 3
    %p181 = por %p179, %p180
    %p183 = scmp.ne.s32.totalorder %s168, %s182
    %p184 = scmp.eq.s32.totalorder %s20, 0
    %p185 = por %p183, %p184
    %s187 = sadd.s32 %s186, 1
    %p190 = scmp.eq.s32.totalorder %s14, 3
    %p191 = scmp.ne.s32.totalorder %s186, %s188
    %p192 = scmp.eq.s32.totalorder %s14, 0
    %p193 = por %p191, %p192
    %p194 = scmp.ne.s32.totalorder %s186, %s188
    %p195 = scmp.eq.s32.totalorder %s19, 3
    %p196 = por %p194, %p195
    %p197 = scmp.ne.s32.totalorder %s188, %s189
    %p198 = scmp.eq.s32.totalorder %s19, 0
    %p199 = por %p197, %p198
    %p200 = scmp.ne.s32.totalorder %s188, %s189
    %p201 = scmp.eq.s32.totalorder %s20, 3
    %p202 = por %p200, %p201
    %p204 = scmp.ne.s32.totalorder %s189, %s203
    %p205 = scmp.eq.s32.totalorder %s20, 0
    %p206 = por %p204, %p205
    %s208 = sadd.s32 %s207, 1
    %p211 = scmp.eq.s32.totalorder %s14, 3
    %p212 = scmp.ne.s32.totalorder %s207, %s209
    %p213 = scmp.eq.s32.totalorder %s14, 0
    %p214 = por %p212, %p213
    %p215 = scmp.ne.s32.totalorder %s207, %s209
    %p216 = scmp.eq.s32.totalorder %s19, 3
    %p217 = por %p215, %p216
    %p218 = scmp.ne.s32.totalorder %s209, %s210
    %p219 = scmp.eq.s32.totalorder %s19, 0
    %p220 = por %p218, %p219
    %p221 = scmp.ne.s32.totalorder %s209, %s210
    %p222 = scmp.eq.s32.totalorder %s20, 3
    %p223 = por %p221, %p222
    %p225 = scmp.ne.s32.totalorder %s210, %s224
    %p226 = scmp.eq.s32.totalorder %s20, 0
    %p227 = por %p225, %p226
    %s228 = ssub.s32 %s21, %s33
    %s229 = ssub.s32 %s22, %s29
    %s230 = sor.u32 %s228, %s229
    %p231 = scmp.eq.s32.totalorder %s230, 0
    %s233 = sadd.s32 %s232, 1
    %s234 = scalar_select %p231, %s232, %s233
    %p237 = pneg %p231
    %p238 = scmp.eq.s32.totalorder %s14, 3
    %p239 = por %p237, %p238
    %p240 = scmp.ne.s32.totalorder %s232, %s235
    %p241 = scmp.eq.s32.totalorder %s14, 0
    %p242 = por %p240, %p241
    %p243 = scmp.ne.s32.totalorder %s232, %s235
    %p244 = scmp.eq.s32.totalorder %s19, 3
    %p245 = por %p243, %p244
    %p246 = scmp.ne.s32.totalorder %s235, %s236
    %p247 = scmp.eq.s32.totalorder %s19, 0
    %p248 = por %p246, %p247
    %p249 = scmp.ne.s32.totalorder %s235, %s236
    %p250 = scmp.eq.s32.totalorder %s20, 3
    %p251 = por %p249, %p250
    %p253 = scmp.ne.s32.totalorder %s236, %s252
    %p254 = scmp.eq.s32.totalorder %s20, 0
    %p255 = por %p253, %p254
    %p256 = scmp.le.s32.totalorder 1, %s14
    %p257 = scmp.lt.s32.totalorder %s14, 5
    %p258 = pnand %p256, %p257
    %p259 = pneg %p258
    // Predicated region
    $region9: #{hire_block_forward.8} parent=5 // pred_check
      _
    $region10: #{hire_block_forward.8} parent=5 // pred_check_branch
      %261 = sbr.rel (%p258) target = $region12
    $region11: #{hire_block_forward.8} parent=5 // pred_region
      %s262 = ssub.s32 %s14, 1
      // Predicated region
      $region13: #{hire_block_forward.8} parent=11 // pred_check
        %p263 = pneg %p157
      $region14: #{hire_block_forward.8} parent=11 // pred_check_branch
        %265 = sbr.rel (%p263) target = $region16
      $region15: #{hire_block_forward.8} parent=11 // pred_region
        _
      $region16: #{hire_block_forward.8} parent=11 // pred_fallthru
        _
      // Predicated region
      $region17: #{hire_block_forward.8} parent=11 // pred_check
        %p266 = pneg %p178
      $region18: #{hire_block_forward.8} parent=11 // pred_check_branch
        %268 = sbr.rel (%p266) target = $region20
      $region19: #{hire_block_forward.8} parent=11 // pred_region
        _
      $region20: #{hire_block_forward.8} parent=11 // pred_fallthru
        _
      // Predicated region
      $region21: #{hire_block_forward.8} parent=11 // pred_check
        %p269 = pneg %p199
      $region22: #{hire_block_forward.8} parent=11 // pred_check_branch
        %271 = sbr.rel (%p269) target = $region24
      $region23: #{hire_block_forward.8} parent=11 // pred_region
        _
      $region24: #{hire_block_forward.8} parent=11 // pred_fallthru
        _
      // Predicated region
      $region25: #{hire_block_forward.8} parent=11 // pred_check
        %p272 = pneg %p220
      $region26: #{hire_block_forward.8} parent=11 // pred_check_branch
        %274 = sbr.rel (%p272) target = $region28
      $region27: #{hire_block_forward.8} parent=11 // pred_region
        _
      $region28: #{hire_block_forward.8} parent=11 // pred_fallthru
        _
    $region12: #{hire_block_forward.8} parent=5 // pred_fallthru
      _
    %p275 = scmp.lt.s32.totalorder %s14, 4
    // Predicated region
    $region29: #{hire_block_forward.8} parent=5 // pred_check
      %p276 = pneg %p275
    $region30: #{hire_block_forward.8} parent=5 // pred_check_branch
      %278 = sbr.rel (%p276) target = $region32
    $region31: #{hire_block_forward.8} parent=5 // pred_region
      // Predicated region
      $region33: #{hire_block_forward.8} parent=31 // pred_check
        %p279 = pneg %p48
      $region34: #{hire_block_forward.8} parent=31 // pred_check_branch
        %281 = sbr.rel (%p279) target = $region36
      $region35: #{hire_block_forward.8} parent=31 // pred_region
        %s282 = smul.u32 16, %s22
        %p283 = scmp.lt.s32.totalorder %s21, 1
        %s284 = scalar_select %p283, %s21, 1
        %p285 = scmp.lt.s32.totalorder %s282, 31
        %s286 = scalar_select %p285, %s282, 31
        %s287 = smul.addr %s284, 32
        %s288 = sadd.s32 %s286, %s287
        %s289 = smul.addr %s288, 4
        %s290 = scalar_lea.vmem %s0, %s289
        %s291 = smul.u32 16, %s22
      $region36: #{hire_block_forward.8} parent=31 // pred_fallthru
        _
      // Predicated region
      $region37: #{hire_block_forward.8} parent=31 // pred_check
        %p292 = pneg %p76
      $region38: #{hire_block_forward.8} parent=31 // pred_check_branch
        %294 = sbr.rel (%p292) target = $region40
      $region39: #{hire_block_forward.8} parent=31 // pred_region
        %s295 = smul.u32 16, %s22
        %p296 = scmp.lt.s32.totalorder %s21, 1
        %s297 = scalar_select %p296, %s21, 1
        %p298 = scmp.lt.s32.totalorder %s295, 31
        %s299 = scalar_select %p298, %s295, 31
        %s300 = smul.addr %s297, 32
        %s301 = sadd.s32 %s299, %s300
        %s302 = smul.addr %s301, 4
        %s303 = scalar_lea.vmem %s1, %s302
        %s304 = smul.u32 16, %s22
      $region40: #{hire_block_forward.8} parent=31 // pred_fallthru
        _
      // Predicated region
      $region41: #{hire_block_forward.8} parent=31 // pred_check
        %p305 = pneg %p104
      $region42: #{hire_block_forward.8} parent=31 // pred_check_branch
        %307 = sbr.rel (%p305) target = $region44
      $region43: #{hire_block_forward.8} parent=31 // pred_region
        %s308 = smul.u32 16, %s22
        %p309 = scmp.lt.s32.totalorder %s21, 1
        %s310 = scalar_select %p309, %s21, 1
        %p311 = scmp.lt.s32.totalorder %s308, 31
        %s312 = scalar_select %p311, %s308, 31
        %s313 = smul.addr %s310, 32
        %s314 = sadd.s32 %s312, %s313
        %s315 = smul.addr %s314, 4
        %s316 = scalar_lea.vmem %s2, %s315
        %s317 = smul.u32 16, %s22
      $region44: #{hire_block_forward.8} parent=31 // pred_fallthru
        _
      // Predicated region
      $region45: #{hire_block_forward.8} parent=31 // pred_check
        %p318 = pneg %p130
      $region46: #{hire_block_forward.8} parent=31 // pred_check_branch
        %320 = sbr.rel (%p318) target = $region48
      $region47: #{hire_block_forward.8} parent=31 // pred_region
        %p321 = scmp.lt.s32.totalorder %s21, 1
        %s322 = scalar_select %p321, %s21, 1
        %s323 = smul.addr %s322, 4
        %s324 = scalar_lea.vmem %s3, %s323
      $region48: #{hire_block_forward.8} parent=31 // pred_fallthru
        _
    $region32: #{hire_block_forward.8} parent=5 // pred_fallthru
      _
    %p325 = scmp.le.s32.totalorder 1, %s14
    %p326 = scmp.lt.s32.totalorder %s14, 5
    %p327 = pnand %p325, %p326
    %p328 = pneg %p327
    // Predicated region
    $region49: #{hire_block_forward.8} parent=5 // pred_check
      _
    $region50: #{hire_block_forward.8} parent=5 // pred_check_branch
      %330 = sbr.rel (%p327) target = $region52
    $region51: #{hire_block_forward.8} parent=5 // pred_region
      %s331 = ssub.s32 %s14, 1
      %s332 = smul.u32 16, %s24
      %p333 = scmp.lt.s32.totalorder %s23, 1
      %s334 = scalar_select %p333, %s23, 1
      %p335 = scmp.lt.s32.totalorder %s332, 31
      %s336 = scalar_select %p335, %s332, 31
      %s337 = smul.addr %s334, 32
      %s338 = sadd.s32 %s336, %s337
      %s339 = smul.addr %s338, 4
      %s340 = scalar_lea.vmem %s0, %s339
      %p341 = pneg %p54
      %p342 = pneg %p51
      %s343 = smul.u32 16, %s24
      %p344 = scmp.lt.s32.totalorder %s23, 1
      %s345 = scalar_select %p344, %s23, 1
      %p346 = scmp.lt.s32.totalorder %s343, 31
      %s347 = scalar_select %p346, %s343, 31
      %s348 = smul.addr %s345, 32
      %s349 = sadd.s32 %s347, %s348
      %s350 = smul.addr %s349, 4
      %s351 = scalar_lea.vmem %s1, %s350
      %p352 = pneg %p82
      %p353 = pneg %p79
      %s354 = smul.u32 16, %s24
      %p355 = scmp.lt.s32.totalorder %s23, 1
      %s356 = scalar_select %p355, %s23, 1
      %p357 = scmp.lt.s32.totalorder %s354, 31
      %s358 = scalar_select %p357, %s354, 31
      %s359 = smul.addr %s356, 32
      %s360 = sadd.s32 %s358, %s359
      %s361 = smul.addr %s360, 4
      %s362 = scalar_lea.vmem %s2, %s361
      %p363 = pneg %p110
      %p364 = pneg %p107
      %p365 = scmp.lt.s32.totalorder %s23, 1
      %s366 = scalar_select %p365, %s23, 1
      %s367 = smul.addr %s366, 4
      %s368 = scalar_lea.vmem %s3, %s367
      %p369 = pneg %p136
      %p370 = pneg %p133
      %p371 = pneg %p157
      %p372 = pneg %p154
      %p373 = pneg %p178
      %p374 = pneg %p175
      %p375 = pneg %p199
      %p376 = pneg %p196
      %p377 = pneg %p220
      %p378 = pneg %p217
      %p379 = pneg %p248
      %p380 = pneg %p245
      %s381 = smul.u32 16, %s24
      %p382 = scmp.lt.s32.totalorder %s23, 1
      %s383 = scalar_select %p382, %s23, 1
      %p384 = scmp.lt.s32.totalorder %s381, 31
      %s385 = scalar_select %p384, %s381, 31
      %s386 = smul.addr %s383, 32
      %s387 = sadd.s32 %s385, %s386
      %s388 = smul.addr %s387, 4
      %s389 = scalar_lea.vmem %s8, %s388
      %s390 = smul.u32 16, %s24
      %p391 = scmp.lt.s32.totalorder %s23, 1
      %s392 = scalar_select %p391, %s23, 1
      %p393 = scmp.lt.s32.totalorder %s390, 31
      %s394 = scalar_select %p393, %s390, 31
      %s395 = smul.addr %s392, 32
      %s396 = sadd.s32 %s394, %s395
      %s397 = smul.addr %s396, 4
      %s398 = scalar_lea.vmem %s0, %s397
      %s399 = smul.u32 16, %s24
      %s400 = smul.u32 16, %s24
      %p401 = scmp.lt.s32.totalorder %s23, 1
      %s402 = scalar_select %p401, %s23, 1
      %p403 = scmp.lt.s32.totalorder %s400, 31
      %s404 = scalar_select %p403, %s400, 31
      %s405 = smul.addr %s402, 32
      %s406 = sadd.s32 %s404, %s405
      %s407 = smul.addr %s406, 4
      %s408 = scalar_lea.vmem %s1, %s407
      %s409 = smul.u32 16, %s24
      %s410 = smul.u32 16, %s24
      %p411 = scmp.lt.s32.totalorder %s23, 1
      %s412 = scalar_select %p411, %s23, 1
      %p413 = scmp.lt.s32.totalorder %s410, 31
      %s414 = scalar_select %p413, %s410, 31
      %s415 = smul.addr %s412, 32
      %s416 = sadd.s32 %s414, %s415
      %s417 = smul.addr %s416, 4
      %s418 = scalar_lea.vmem %s2, %s417
      %s419 = smul.u32 16, %s24
      %p420 = scmp.lt.s32.totalorder %s23, 1
      %s421 = scalar_select %p420, %s23, 1
      %s422 = smul.addr %s421, 4
      %s423 = scalar_lea.vmem %s3, %s422
      %s424 = smul.u32 16, %s24
      %p425 = scmp.lt.s32.totalorder %s23, 1
      %s426 = scalar_select %p425, %s23, 1
      %p427 = scmp.lt.s32.totalorder %s424, 31
      %s428 = scalar_select %p427, %s424, 31
      %s429 = smul.addr %s426, 32
      %s430 = sadd.s32 %s428, %s429
      %s431 = smul.addr %s430, 4
      %s432 = scalar_lea.vmem %s8, %s431
      %s433 = smul.u32 16, %s24
      %v435 = vld [vmem:[%s418] sm:$0xf]
      %v436 = vld [vmem:[%s418 + $0x4] sm:$0xf]
      %v437 = vld [vmem:[%s418 + $0x8] sm:$0xf]
      %v438 = vld [vmem:[%s418 + $0xc] sm:$0xf]
      %v439 = vld [vmem:[%s418 + $0x10] sm:$0xf]
      %v440 = vld [vmem:[%s418 + $0x14] sm:$0xf]
      %v441 = vld [vmem:[%s418 + $0x18] sm:$0xf]
      %v442 = vld [vmem:[%s418 + $0x1c] sm:$0xf]
      %v443 = vld [vmem:[%s418 + $0x20] sm:$0xf]
      %v444 = vld [vmem:[%s418 + $0x24] sm:$0xf]
      %v445 = vld [vmem:[%s418 + $0x28] sm:$0xf]
      %v446 = vld [vmem:[%s418 + $0x2c] sm:$0xf]
      %v447 = vld [vmem:[%s418 + $0x30] sm:$0xf]
      %v448 = vld [vmem:[%s418 + $0x34] sm:$0xf]
      %v449 = vld [vmem:[%s418 + $0x38] sm:$0xf]
      %v450 = vld [vmem:[%s418 + $0x3c] sm:$0xf]
      %v451 = vld [vmem:[%s423] sm:$0x7]
      %v452 = vld [vmem:[%s4] sm:$0xf]
      %v453 = vld [vmem:[%s4 + $0x4] sm:$0xf]
      %v454 = vunpack.c.l.bf16 %v452
      %v455 = vunpack.c.l.bf16 %v453
      %v456 = vlaneseq
      %v457 = vshrl.u32 %v456, 7
      %v458 = vsub.s32 2, %v457
      %v459 = vrot.slane %v451, %v458
      %v460 = vmul.f32 %v454, %v459
      %v461 = vmul.f32 %v455, %v459
      %v462 = vpack.c.bf16 %v461, %v460
      %v463 = vld [vmem:[%s5] sm:$0x1]
      %v466 = vunpack.c.l.s4 1966171168
      %v467 = vunpack.c.0.s8 %v466
      %v468 = vlaneseq
      %v469 = vshrl.u32 %v468, 7
      %v470 = vsub.s32 %v467, %v469
      %v471 = vrot.slane %v451, %v470
      %v473 = vunpack.c.l.s4 1966171168
      %v474 = vunpack.c.0.s8 %v473
      %v475 = vlaneseq
      %v476 = vshrl.u32 %v475, 7
      %v477 = vsub.s32 %v474, %v476
      %v478 = vrot.slane %v471, %v477
      %v479 = vcombine.high %v478, %v478
      %v481 = vmul.f32 %v463, %v479
      %v482 = vld [vmem:[%s398] sm:$0xf]
      %v483 = vld [vmem:[%s398 + $0x4] sm:$0xf]
      %v484 = vld [vmem:[%s398 + $0x8] sm:$0xf]
      %v485 = vld [vmem:[%s398 + $0xc] sm:$0xf]
      %v486 = vld [vmem:[%s398 + $0x10] sm:$0xf]
      %v487 = vld [vmem:[%s398 + $0x14] sm:$0xf]
      %v488 = vld [vmem:[%s398 + $0x18] sm:$0xf]
      %v489 = vld [vmem:[%s398 + $0x1c] sm:$0xf]
      %v490 = vld [vmem:[%s398 + $0x20] sm:$0xf]
      %v491 = vld [vmem:[%s398 + $0x24] sm:$0xf]
      %v492 = vld [vmem:[%s398 + $0x28] sm:$0xf]
      %v493 = vld [vmem:[%s398 + $0x2c] sm:$0xf]
      %v494 = vld [vmem:[%s398 + $0x30] sm:$0xf]
      %v495 = vld [vmem:[%s398 + $0x34] sm:$0xf]
      %v496 = vld [vmem:[%s398 + $0x38] sm:$0xf]
      %v497 = vld [vmem:[%s398 + $0x3c] sm:$0xf]
      %v498 = vunpack.c.l.bf16 %v482
      %v499 = vunpack.c.l.bf16 %v483
      %v500 = vunpack.c.l.bf16 %v484
      %v501 = vunpack.c.l.bf16 %v485
      %v502 = vunpack.c.l.bf16 %v486
      %v503 = vunpack.c.l.bf16 %v487
      %v504 = vunpack.c.l.bf16 %v488
      %v505 = vunpack.c.l.bf16 %v489
      %v506 = vunpack.c.l.bf16 %v490
      %v507 = vunpack.c.l.bf16 %v491
      %v508 = vunpack.c.l.bf16 %v492
      %v509 = vunpack.c.l.bf16 %v493
      %v510 = vunpack.c.l.bf16 %v494
      %v511 = vunpack.c.l.bf16 %v495
      %v512 = vunpack.c.l.bf16 %v496
      %v513 = vunpack.c.l.bf16 %v497
      %v514 = vlaneseq
      %v515 = vshrl.u32 %v514, 7
      %v516 = vsub.s32 0, %v515
      %v517 = vrot.slane %v451, %v516
      %v518 = vmul.f32 %v498, %v517
      %v519 = vmul.f32 %v499, %v517
      %v520 = vmul.f32 %v500, %v517
      %v521 = vmul.f32 %v501, %v517
      %v522 = vmul.f32 %v502, %v517
      %v523 = vmul.f32 %v503, %v517
      %v524 = vmul.f32 %v504, %v517
      %v525 = vmul.f32 %v505, %v517
      %v526 = vmul.f32 %v506, %v517
      %v527 = vmul.f32 %v507, %v517
      %v528 = vmul.f32 %v508, %v517
      %v529 = vmul.f32 %v509, %v517
      %v530 = vmul.f32 %v510, %v517
      %v531 = vmul.f32 %v511, %v517
      %v532 = vmul.f32 %v512, %v517
      %v533 = vmul.f32 %v513, %v517
      %v534 = vld [vmem:[%s408] sm:$0xf]
      %v535 = vld [vmem:[%s408 + $0x4] sm:$0xf]
      %v536 = vld [vmem:[%s408 + $0x8] sm:$0xf]
      %v537 = vld [vmem:[%s408 + $0xc] sm:$0xf]
      %v538 = vld [vmem:[%s408 + $0x10] sm:$0xf]
      %v539 = vld [vmem:[%s408 + $0x14] sm:$0xf]
      %v540 = vld [vmem:[%s408 + $0x18] sm:$0xf]
      %v541 = vld [vmem:[%s408 + $0x1c] sm:$0xf]
      %v542 = vld [vmem:[%s408 + $0x20] sm:$0xf]
      %v543 = vld [vmem:[%s408 + $0x24] sm:$0xf]
      %v544 = vld [vmem:[%s408 + $0x28] sm:$0xf]
      %v545 = vld [vmem:[%s408 + $0x2c] sm:$0xf]
      %v546 = vld [vmem:[%s408 + $0x30] sm:$0xf]
      %v547 = vld [vmem:[%s408 + $0x34] sm:$0xf]
      %v548 = vld [vmem:[%s408 + $0x38] sm:$0xf]
      %v549 = vld [vmem:[%s408 + $0x3c] sm:$0xf]
      %v550 = vunpack.c.l.bf16 %v534
      %v551 = vunpack.c.l.bf16 %v535
      %v552 = vunpack.c.l.bf16 %v536
      %v553 = vunpack.c.l.bf16 %v537
      %v554 = vunpack.c.l.bf16 %v538
      %v555 = vunpack.c.l.bf16 %v539
      %v556 = vunpack.c.l.bf16 %v540
      %v557 = vunpack.c.l.bf16 %v541
      %v558 = vunpack.c.l.bf16 %v542
      %v559 = vunpack.c.l.bf16 %v543
      %v560 = vunpack.c.l.bf16 %v544
      %v561 = vunpack.c.l.bf16 %v545
      %v562 = vunpack.c.l.bf16 %v546
      %v563 = vunpack.c.l.bf16 %v547
      %v564 = vunpack.c.l.bf16 %v548
      %v565 = vunpack.c.l.bf16 %v549
      %v566 = vlaneseq
      %v567 = vshrl.u32 %v566, 7
      %v568 = vsub.s32 1, %v567
      %v569 = vrot.slane %v451, %v568
      %v570 = vmul.f32 %v550, %v569
      %v571 = vmul.f32 %v551, %v569
      %v572 = vmul.f32 %v552, %v569
      %v573 = vmul.f32 %v553, %v569
      %v574 = vmul.f32 %v554, %v569
      %v575 = vmul.f32 %v555, %v569
      %v576 = vmul.f32 %v556, %v569
      %v577 = vmul.f32 %v557, %v569
      %v578 = vmul.f32 %v558, %v569
      %v579 = vmul.f32 %v559, %v569
      %v580 = vmul.f32 %v560, %v569
      %v581 = vmul.f32 %v561, %v569
      %v582 = vmul.f32 %v562, %v569
      %v583 = vmul.f32 %v563, %v569
      %v584 = vmul.f32 %v564, %v569
      %v585 = vmul.f32 %v565, %v569
      %v586 = vadd.f32 %v518, %v570
      %v587 = vadd.f32 %v519, %v571
      %v588 = vadd.f32 %v520, %v572
      %v589 = vadd.f32 %v521, %v573
      %v590 = vadd.f32 %v522, %v574
      %v591 = vadd.f32 %v523, %v575
      %v592 = vadd.f32 %v524, %v576
      %v593 = vadd.f32 %v525, %v577
      %v594 = vadd.f32 %v526, %v578
      %v595 = vadd.f32 %v527, %v579
      %v596 = vadd.f32 %v528, %v580
      %v597 = vadd.f32 %v529, %v581
      %v598 = vadd.f32 %v530, %v582
      %v599 = vadd.f32 %v531, %v583
      %v600 = vadd.f32 %v532, %v584
      %v601 = vadd.f32 %v533, %v585
      %v618 = vunpack.c.l.b16 %v435
      %v619 = vunpack.c.l.b16 %v436
      %v620 = vunpack.c.l.b16 %v437
      %v621 = vunpack.c.l.b16 %v438
      %v622 = vunpack.c.l.b16 %v439
      %v623 = vunpack.c.l.b16 %v440
      %v624 = vunpack.c.l.b16 %v441
      %v625 = vunpack.c.l.b16 %v442
      %v626 = vunpack.c.l.b16 %v443
      %v627 = vunpack.c.l.b16 %v444
      %v628 = vunpack.c.l.b16 %v445
      %v629 = vunpack.c.l.b16 %v446
      %v630 = vunpack.c.l.b16 %v447
      %v631 = vunpack.c.l.b16 %v448
      %v632 = vunpack.c.l.b16 %v449
      %v633 = vunpack.c.l.b16 %v450
      %v634 = vpack.c.b16 %v619, %v618
      %v635 = vpack.c.b16 %v621, %v620
      %v636 = vpack.c.b16 %v623, %v622
      %v637 = vpack.c.b16 %v625, %v624
      %v638 = vpack.c.b16 %v627, %v626
      %v639 = vpack.c.b16 %v629, %v628
      %v640 = vpack.c.b16 %v631, %v630
      %v641 = vpack.c.b16 %v633, %v632
      %vm642 = vcmask 130048
      %v644 = vsel %vm642, %v634, 0
      %v647 = vsel %vm642, %v635, 0
      %v650 = vsel %vm642, %v636, 0
      %v653 = vsel %vm642, %v637, 0
      %v656 = vsel %vm642, %v638, 0
      %v659 = vsel %vm642, %v639, 0
      %v662 = vsel %vm642, %v640, 0
      %v665 = vsel %vm642, %v641, 0
      %667 = vmatprep.subr.bf16.mxu0 0
      %668 = vmatpush1.bf16.msra.mxu0 0
      %669 = vmatprep.subr.bf16.mxu0 0
      %670 = vmatpush1.bf16.msra.mxu0 0
      %671 = vmatprep.subr.bf16.mxu0 0
      %672 = vmatpush1.bf16.msra.mxu0 0
      %673 = vmatprep.subr.bf16.mxu0 0
      %674 = vmatpush1.bf16.msra.mxu0 0
      %675 = vmatprep.subr.bf16.mxu0 0
      %676 = vmatpush1.bf16.msra.mxu0 0
      %677 = vmatprep.subr.bf16.mxu0 0
      %678 = vmatpush1.bf16.msra.mxu0 0
      %679 = vmatprep.subr.bf16.mxu0 0
      %680 = vmatpush1.bf16.msra.mxu0 0
      %681 = vmatprep.subr.bf16.mxu0 0
      %682 = vmatpush1.bf16.msra.mxu0 %v462
      %683 = vmatprep.subr.bf16.mxu0 0
      %684 = vmatpush2.bf16.msra.mxu0 0
      %685 = vmatprep.subr.bf16.mxu0 0
      %686 = vmatpush2.bf16.msra.mxu0 0
      %687 = vmatprep.subr.bf16.mxu0 0
      %688 = vmatpush2.bf16.msra.mxu0 0
      %689 = vmatprep.subr.bf16.mxu0 0
      %690 = vmatpush2.bf16.msra.mxu0 0
      %691 = vmatprep.subr.bf16.mxu0 0
      %692 = vmatpush2.bf16.msra.mxu0 0
      %693 = vmatprep.subr.bf16.mxu0 0
      %694 = vmatpush2.bf16.msra.mxu0 0
      %695 = vmatprep.subr.bf16.mxu0 0
      %696 = vmatpush2.bf16.msra.mxu0 0
      %697 = vmatprep.subr.bf16.mxu0 0
      %698 = vmatpush2.bf16.msra.mxu0 0
      %699 = vmatprep.mubr.bf16.mxu0 0
      %700 = vmatmul.mubr.bf16.gmra.mxu0 %v644
      %v701 = vpop.f32.mrf.mxu0
      %v702 = vadd.f32 0.0, %v701
      %v703 = vpop.f32.mrf.mxu0
      %v704 = vpop.f32.mrf.mxu0
      %v705 = vadd.f32 0.0, %v704
      %v706 = vpop.f32.mrf.mxu0
      %707 = vmatprep.mubr.bf16.mxu0 0
      %708 = vmatmul.mubr.bf16.gmra.mxu0 %v647
      %v709 = vpop.f32.mrf.mxu0
      %v710 = vadd.f32 0.0, %v709
      %v711 = vpop.f32.mrf.mxu0
      %v712 = vpop.f32.mrf.mxu0
      %v713 = vadd.f32 0.0, %v712
      %v714 = vpop.f32.mrf.mxu0
      %715 = vmatprep.mubr.bf16.mxu0 0
      %716 = vmatmul.mubr.bf16.gmra.mxu0 %v650
      %v717 = vpop.f32.mrf.mxu0
      %v718 = vadd.f32 0.0, %v717
      %v719 = vpop.f32.mrf.mxu0
      %v720 = vpop.f32.mrf.mxu0
      %v721 = vadd.f32 0.0, %v720
      %v722 = vpop.f32.mrf.mxu0
      %723 = vmatprep.mubr.bf16.mxu0 0
      %724 = vmatmul.mubr.bf16.gmra.mxu0 %v653
      %v725 = vpop.f32.mrf.mxu0
      %v726 = vadd.f32 0.0, %v725
      %v727 = vpop.f32.mrf.mxu0
      %v728 = vpop.f32.mrf.mxu0
      %v729 = vadd.f32 0.0, %v728
      %v730 = vpop.f32.mrf.mxu0
      %731 = vmatprep.mubr.bf16.mxu0 0
      %732 = vmatmul.mubr.bf16.gmra.mxu0 %v656
      %v733 = vpop.f32.mrf.mxu0
      %v734 = vadd.f32 0.0, %v733
      %v735 = vpop.f32.mrf.mxu0
      %v736 = vpop.f32.mrf.mxu0
      %v737 = vadd.f32 0.0, %v736
      %v738 = vpop.f32.mrf.mxu0
      %739 = vmatprep.mubr.bf16.mxu0 0
      %740 = vmatmul.mubr.bf16.gmra.mxu0 %v659
      %v741 = vpop.f32.mrf.mxu0
      %v742 = vadd.f32 0.0, %v741
      %v743 = vpop.f32.mrf.mxu0
      %v744 = vpop.f32.mrf.mxu0
      %v745 = vadd.f32 0.0, %v744
      %v746 = vpop.f32.mrf.mxu0
      %747 = vmatprep.mubr.bf16.mxu0 0
      %748 = vmatmul.mubr.bf16.gmra.mxu0 %v662
      %v749 = vpop.f32.mrf.mxu0
      %v750 = vadd.f32 0.0, %v749
      %v751 = vpop.f32.mrf.mxu0
      %v752 = vpop.f32.mrf.mxu0
      %v753 = vadd.f32 0.0, %v752
      %v754 = vpop.f32.mrf.mxu0
      %755 = vmatprep.mubr.bf16.mxu0 0
      %756 = vmatmul.mubr.bf16.gmra.mxu0 %v665
      %v757 = vpop.f32.mrf.mxu0
      %v758 = vadd.f32 0.0, %v757
      %v759 = vpop.f32.mrf.mxu0
      %v760 = vpop.f32.mrf.mxu0
      %v761 = vadd.f32 0.0, %v760
      %v762 = vpop.f32.mrf.mxu0
      %763 = vdwg.mxu0
      %v764 = vadd.f32 %v586, %v702
      %v765 = vadd.f32 %v587, %v705
      %v766 = vadd.f32 %v588, %v710
      %v767 = vadd.f32 %v589, %v713
      %v768 = vadd.f32 %v590, %v718
      %v769 = vadd.f32 %v591, %v721
      %v770 = vadd.f32 %v592, %v726
      %v771 = vadd.f32 %v593, %v729
      %v772 = vadd.f32 %v594, %v734
      %v773 = vadd.f32 %v595, %v737
      %v774 = vadd.f32 %v596, %v742
      %v775 = vadd.f32 %v597, %v745
      %v776 = vadd.f32 %v598, %v750
      %v777 = vadd.f32 %v599, %v753
      %v778 = vadd.f32 %v600, %v758
      %v779 = vadd.f32 %v601, %v761
      %v781 = vlaneseq
      %v782 = vshrl.u32 %v781, 7
      %v783 = vsub.s32 0, %v782
      %v784 = vrot.slane %v481, %v783
      %v786 = vadd.f32 %v764, %v784
      %v787 = vadd.f32 %v765, %v784
      %v788 = vadd.f32 %v766, %v784
      %v789 = vadd.f32 %v767, %v784
      %v790 = vadd.f32 %v768, %v784
      %v791 = vadd.f32 %v769, %v784
      %v792 = vadd.f32 %v770, %v784
      %v793 = vadd.f32 %v771, %v784
      %v794 = vadd.f32 %v772, %v784
      %v795 = vadd.f32 %v773, %v784
      %v796 = vadd.f32 %v774, %v784
      %v797 = vadd.f32 %v775, %v784
      %v798 = vadd.f32 %v776, %v784
      %v799 = vadd.f32 %v777, %v784
      %v800 = vadd.f32 %v778, %v784
      %v801 = vadd.f32 %v779, %v784
      %v802 = vpack.c.bf16 %v787, %v786
      %v803 = vpack.c.bf16 %v789, %v788
      %v804 = vpack.c.bf16 %v791, %v790
      %v805 = vpack.c.bf16 %v793, %v792
      %v806 = vpack.c.bf16 %v795, %v794
      %v807 = vpack.c.bf16 %v797, %v796
      %v808 = vpack.c.bf16 %v799, %v798
      %v809 = vpack.c.bf16 %v801, %v800
      %v810 = vld [vmem:[%s6] sm:$0xf]
      %v811 = vld [vmem:[%s6 + $0x4] sm:$0xf]
      %v812 = vld [vmem:[%s7] sm:$0x1]
      %v814 = vlaneseq
      %v815 = vshrl.u32 %v814, 7
      %v816 = vsub.s32 0, %v815
      %v817 = vrot.slane %v812, %v816
      %v821 = vunpack.c.l.b16 %v810
      %v822 = vunpack.c.l.b16 %v811
      %v823 = vpack.c.b16 %v822, %v821
      %v826 = vsel %vm642, %v802, 0
      %v829 = vsel %vm642, %v803, 0
      %v832 = vsel %vm642, %v804, 0
      %v835 = vsel %vm642, %v805, 0
      %v838 = vsel %vm642, %v806, 0
      %v841 = vsel %vm642, %v807, 0
      %v844 = vsel %vm642, %v808, 0
      %v847 = vsel %vm642, %v809, 0
      %849 = vmatprep.subr.bf16.mxu0 0
      %850 = vmatpush1.bf16.msra.mxu0 0
      %851 = vmatprep.subr.bf16.mxu0 0
      %852 = vmatpush1.bf16.msra.mxu0 0
      %853 = vmatprep.subr.bf16.mxu0 0
      %854 = vmatpush1.bf16.msra.mxu0 0
      %855 = vmatprep.subr.bf16.mxu0 0
      %856 = vmatpush1.bf16.msra.mxu0 0
      %857 = vmatprep.subr.bf16.mxu0 0
      %858 = vmatpush1.bf16.msra.mxu0 0
      %859 = vmatprep.subr.bf16.mxu0 0
      %860 = vmatpush1.bf16.msra.mxu0 0
      %861 = vmatprep.subr.bf16.mxu0 0
      %862 = vmatpush1.bf16.msra.mxu0 0
      %863 = vmatprep.subr.bf16.mxu0 0
      %864 = vmatpush1.bf16.msra.mxu0 %v823
      %865 = vmatprep.subr.bf16.mxu0 0
      %866 = vmatpush2.bf16.msra.mxu0 0
      %867 = vmatprep.subr.bf16.mxu0 0
      %868 = vmatpush2.bf16.msra.mxu0 0
      %869 = vmatprep.subr.bf16.mxu0 0
      %870 = vmatpush2.bf16.msra.mxu0 0
      %871 = vmatprep.subr.bf16.mxu0 0
      %872 = vmatpush2.bf16.msra.mxu0 0
      %873 = vmatprep.subr.bf16.mxu0 0
      %874 = vmatpush2.bf16.msra.mxu0 0
      %875 = vmatprep.subr.bf16.mxu0 0
      %876 = vmatpush2.bf16.msra.mxu0 0
      %877 = vmatprep.subr.bf16.mxu0 0
      %878 = vmatpush2.bf16.msra.mxu0 0
      %879 = vmatprep.subr.bf16.mxu0 0
      %880 = vmatpush2.bf16.msra.mxu0 0
      %881 = vmatprep.mubr.bf16.mxu0 0
      %882 = vmatmul.mubr.bf16.gmra.mxu0 %v826
      %v883 = vpop.f32.mrf.mxu0
      %v884 = vadd.f32 %v817, %v883
      %v885 = vpop.f32.mrf.mxu0
      %v886 = vpop.f32.mrf.mxu0
      %v887 = vadd.f32 %v817, %v886
      %v888 = vpop.f32.mrf.mxu0
      %889 = vmatprep.mubr.bf16.mxu0 0
      %890 = vmatmul.mubr.bf16.gmra.mxu0 %v829
      %v891 = vpop.f32.mrf.mxu0
      %v892 = vadd.f32 %v817, %v891
      %v893 = vpop.f32.mrf.mxu0
      %v894 = vpop.f32.mrf.mxu0
      %v895 = vadd.f32 %v817, %v894
      %v896 = vpop.f32.mrf.mxu0
      %897 = vmatprep.mubr.bf16.mxu0 0
      %898 = vmatmul.mubr.bf16.gmra.mxu0 %v832
      %v899 = vpop.f32.mrf.mxu0
      %v900 = vadd.f32 %v817, %v899
      %v901 = vpop.f32.mrf.mxu0
      %v902 = vpop.f32.mrf.mxu0
      %v903 = vadd.f32 %v817, %v902
      %v904 = vpop.f32.mrf.mxu0
      %905 = vmatprep.mubr.bf16.mxu0 0
      %906 = vmatmul.mubr.bf16.gmra.mxu0 %v835
      %v907 = vpop.f32.mrf.mxu0
      %v908 = vadd.f32 %v817, %v907
      %v909 = vpop.f32.mrf.mxu0
      %v910 = vpop.f32.mrf.mxu0
      %v911 = vadd.f32 %v817, %v910
      %v912 = vpop.f32.mrf.mxu0
      %913 = vmatprep.mubr.bf16.mxu0 0
      %914 = vmatmul.mubr.bf16.gmra.mxu0 %v838
      %v915 = vpop.f32.mrf.mxu0
      %v916 = vadd.f32 %v817, %v915
      %v917 = vpop.f32.mrf.mxu0
      %v918 = vpop.f32.mrf.mxu0
      %v919 = vadd.f32 %v817, %v918
      %v920 = vpop.f32.mrf.mxu0
      %921 = vmatprep.mubr.bf16.mxu0 0
      %922 = vmatmul.mubr.bf16.gmra.mxu0 %v841
      %v923 = vpop.f32.mrf.mxu0
      %v924 = vadd.f32 %v817, %v923
      %v925 = vpop.f32.mrf.mxu0
      %v926 = vpop.f32.mrf.mxu0
      %v927 = vadd.f32 %v817, %v926
      %v928 = vpop.f32.mrf.mxu0
      %929 = vmatprep.mubr.bf16.mxu0 0
      %930 = vmatmul.mubr.bf16.gmra.mxu0 %v844
      %v931 = vpop.f32.mrf.mxu0
      %v932 = vadd.f32 %v817, %v931
      %v933 = vpop.f32.mrf.mxu0
      %v934 = vpop.f32.mrf.mxu0
      %v935 = vadd.f32 %v817, %v934
      %v936 = vpop.f32.mrf.mxu0
      %937 = vmatprep.mubr.bf16.mxu0 0
      %938 = vmatmul.mubr.bf16.gmra.mxu0 %v847
      %v939 = vpop.f32.mrf.mxu0
      %v940 = vadd.f32 %v817, %v939
      %v941 = vpop.f32.mrf.mxu0
      %v942 = vpop.f32.mrf.mxu0
      %v943 = vadd.f32 %v817, %v942
      %v944 = vpop.f32.mrf.mxu0
      %945 = vdwg.mxu0
      %v946 = vunpack.c.l.bf16 %v435
      %v947 = vunpack.c.l.bf16 %v436
      %v948 = vunpack.c.l.bf16 %v437
      %v949 = vunpack.c.l.bf16 %v438
      %v950 = vunpack.c.l.bf16 %v439
      %v951 = vunpack.c.l.bf16 %v440
      %v952 = vunpack.c.l.bf16 %v441
      %v953 = vunpack.c.l.bf16 %v442
      %v954 = vunpack.c.l.bf16 %v443
      %v955 = vunpack.c.l.bf16 %v444
      %v956 = vunpack.c.l.bf16 %v445
      %v957 = vunpack.c.l.bf16 %v446
      %v958 = vunpack.c.l.bf16 %v447
      %v959 = vunpack.c.l.bf16 %v448
      %v960 = vunpack.c.l.bf16 %v449
      %v961 = vunpack.c.l.bf16 %v450
      %v962 = vadd.f32 %v946, %v884
      %v963 = vadd.f32 %v947, %v887
      %v964 = vadd.f32 %v948, %v892
      %v965 = vadd.f32 %v949, %v895
      %v966 = vadd.f32 %v950, %v900
      %v967 = vadd.f32 %v951, %v903
      %v968 = vadd.f32 %v952, %v908
      %v969 = vadd.f32 %v953, %v911
      %v970 = vadd.f32 %v954, %v916
      %v971 = vadd.f32 %v955, %v919
      %v972 = vadd.f32 %v956, %v924
      %v973 = vadd.f32 %v957, %v927
      %v974 = vadd.f32 %v958, %v932
      %v975 = vadd.f32 %v959, %v935
      %v976 = vadd.f32 %v960, %v940
      %v977 = vadd.f32 %v961, %v943
      %v978 = vpack.c.bf16 %v963, %v962
      %v979 = vpack.c.bf16 %v965, %v964
      %v980 = vpack.c.bf16 %v967, %v966
      %v981 = vpack.c.bf16 %v969, %v968
      %v982 = vpack.c.bf16 %v971, %v970
      %v983 = vpack.c.bf16 %v973, %v972
      %v984 = vpack.c.bf16 %v975, %v974
      %v985 = vpack.c.bf16 %v977, %v976
      %v994 = vunpack.c.l.b16 %v978
      %v995 = vunpack.c.h.b16 %v978
      %v996 = vunpack.c.l.b16 %v979
      %v997 = vunpack.c.h.b16 %v979
      %v998 = vunpack.c.l.b16 %v980
      %v999 = vunpack.c.h.b16 %v980
      %v1000 = vunpack.c.l.b16 %v981
      %v1001 = vunpack.c.h.b16 %v981
      %v1002 = vunpack.c.l.b16 %v982
      %v1003 = vunpack.c.h.b16 %v982
      %v1004 = vunpack.c.l.b16 %v983
      %v1005 = vunpack.c.h.b16 %v983
      %v1006 = vunpack.c.l.b16 %v984
      %v1007 = vunpack.c.h.b16 %v984
      %v1008 = vunpack.c.l.b16 %v985
      %v1009 = vunpack.c.h.b16 %v985
      %v1010 = vpack.c.b16 %v994, %v994
      %v1011 = vpack.c.b16 %v995, %v995
      %v1012 = vpack.c.b16 %v996, %v996
      %v1013 = vpack.c.b16 %v997, %v997
      %v1014 = vpack.c.b16 %v998, %v998
      %v1015 = vpack.c.b16 %v999, %v999
      %v1016 = vpack.c.b16 %v1000, %v1000
      %v1017 = vpack.c.b16 %v1001, %v1001
      %v1018 = vpack.c.b16 %v1002, %v1002
      %v1019 = vpack.c.b16 %v1003, %v1003
      %v1020 = vpack.c.b16 %v1004, %v1004
      %v1021 = vpack.c.b16 %v1005, %v1005
      %v1022 = vpack.c.b16 %v1006, %v1006
      %v1023 = vpack.c.b16 %v1007, %v1007
      %v1024 = vpack.c.b16 %v1008, %v1008
      %v1025 = vpack.c.b16 %v1009, %v1009
      %vm1042 = vcmask 125952
      %1043 = vst.msk [vmem:[%s432] sm:$0xf] %vm1042, %v1010
      %1044 = vst.msk [vmem:[%s432 + $0x4] sm:$0xf] %vm1042, %v1011
      %1045 = vst.msk [vmem:[%s432 + $0x8] sm:$0xf] %vm1042, %v1012
      %1046 = vst.msk [vmem:[%s432 + $0xc] sm:$0xf] %vm1042, %v1013
      %1047 = vst.msk [vmem:[%s432 + $0x10] sm:$0xf] %vm1042, %v1014
      %1048 = vst.msk [vmem:[%s432 + $0x14] sm:$0xf] %vm1042, %v1015
      %1049 = vst.msk [vmem:[%s432 + $0x18] sm:$0xf] %vm1042, %v1016
      %1050 = vst.msk [vmem:[%s432 + $0x1c] sm:$0xf] %vm1042, %v1017
      %1051 = vst.msk [vmem:[%s432 + $0x20] sm:$0xf] %vm1042, %v1018
      %1052 = vst.msk [vmem:[%s432 + $0x24] sm:$0xf] %vm1042, %v1019
      %1053 = vst.msk [vmem:[%s432 + $0x28] sm:$0xf] %vm1042, %v1020
      %1054 = vst.msk [vmem:[%s432 + $0x2c] sm:$0xf] %vm1042, %v1021
      %1055 = vst.msk [vmem:[%s432 + $0x30] sm:$0xf] %vm1042, %v1022
      %1056 = vst.msk [vmem:[%s432 + $0x34] sm:$0xf] %vm1042, %v1023
      %1057 = vst.msk [vmem:[%s432 + $0x38] sm:$0xf] %vm1042, %v1024
      %1058 = vst.msk [vmem:[%s432 + $0x3c] sm:$0xf] %vm1042, %v1025
      %s1059 = smul.u32 16, %s24
      %p1060 = scmp.lt.s32.totalorder %s23, 1
      %s1061 = scalar_select %p1060, %s23, 1
      %p1062 = scmp.lt.s32.totalorder %s1059, 31
      %s1063 = scalar_select %p1062, %s1059, 31
      %s1064 = smul.addr %s1061, 32
      %s1065 = sadd.s32 %s1063, %s1064
      %s1066 = smul.addr %s1065, 4
      %s1067 = scalar_lea.vmem %s8, %s1066
      // Predicated region
      $region53: #{hire_block_forward.8} parent=51 // pred_check
        %p1068 = pneg %p245
      $region54: #{hire_block_forward.8} parent=51 // pred_check_branch
        %1070 = sbr.rel (%p1068) target = $region56
      $region55: #{hire_block_forward.8} parent=51 // pred_region
        %s1071 = smul.u32 16, %s24
      $region56: #{hire_block_forward.8} parent=51 // pred_fallthru
        _
    $region52: #{hire_block_forward.8} parent=5 // pred_fallthru
      _
    %p1072 = scmp.le.s32.totalorder 2, %s14
    // Predicated region
    $region57: #{hire_block_forward.8} parent=5 // pred_check
      %p1073 = pneg %p1072
    $region58: #{hire_block_forward.8} parent=5 // pred_check_branch
      %1075 = sbr.rel (%p1073) target = $region60
    $region59: #{hire_block_forward.8} parent=5 // pred_region
      %s1076 = ssub.s32 %s14, 2
      // Predicated region
      $region61: #{hire_block_forward.8} parent=59 // pred_check
        %p1077 = pneg %p251
      $region62: #{hire_block_forward.8} parent=59 // pred_check_branch
        %1079 = sbr.rel (%p1077) target = $region64
      $region63: #{hire_block_forward.8} parent=59 // pred_region
        %s1080 = smul.u32 16, %s26
        %p1081 = scmp.lt.s32.totalorder %s25, 1
        %s1082 = scalar_select %p1081, %s25, 1
        %p1083 = scmp.lt.s32.totalorder %s1080, 31
        %s1084 = scalar_select %p1083, %s1080, 31
        %s1085 = smul.addr %s1082, 32
        %s1086 = sadd.s32 %s1084, %s1085
        %s1087 = smul.addr %s1086, 4
        %s1088 = scalar_lea.vmem %s8, %s1087
      $region64: #{hire_block_forward.8} parent=59 // pred_fallthru
        _
    $region60: #{hire_block_forward.8} parent=5 // pred_fallthru
      _
  $region6: #{hire_block_forward.8} parent=0 // loop_footer
    %s18 = sadd.s32 1, %s14
  $region7: #{hire_block_forward.8} parent=0 // loop_footer_branch
    %13 = sbr.rel target = $region3
  $region8: #{hire_block_forward.8} parent=0 // loop_exit
    _

// kernel: hire_block_forward.9
$region0: #{hire_block_forward.9}
  #allocation0 [shape = 'u32[]', space=smem, size = 0x4, offset = 0x4, fixed_abs, tag = 'smem constant byte address 0x4 - core index']
  #allocation1 [shape = 'u32[144,128]{1,0:T(1,128)}', space=vmem, size = 0x12000, scoped, tag = 'internal scratch']
  %s0 = inlined_call_operand.vmem [shape: bf16[512,16], index: 0, kind: input, shape index: {}]
  %s1 = inlined_call_operand.vmem [shape: bf16[16,64], index: 1, kind: input, shape index: {}]
  %s2 = inlined_call_operand.vmem [shape: f32[1,64], index: 2, kind: input, shape index: {}]
  %s3 = inlined_call_operand.vmem [shape: bf16[64,16], index: 3, kind: input, shape index: {}]
  %s4 = inlined_call_operand.vmem [shape: f32[1,16], index: 4, kind: input, shape index: {}]
  %s5 = inlined_call_operand.vmem [shape: f32[512,16], index: 5, kind: output, shape index: {}]
  %s6 = sld [smem:[#allocation0]]
  $region53: #{hire_block_forward.9} parent=0
    _
  %s8 = ssub.s32 1, %s6
  %s9 = scalar_select 0, %s8, %s6
  loop: start=0, step=1, limit=4
  $region2: #{hire_block_forward.9} parent=0 // loop_pre_header
    _
  $region3: #{hire_block_forward.9} parent=0 // loop_header
    %s11 = sphi 0, %s15
    %p12 = scmp.ge.s32.totalorder %s11, 4
    %s21 = sphi 0, %s23
    %s24 = sphi 0, %s21
    %s25 = sphi 0, %s24
    %s41 = sphi 0, %s25
    %s45 = sphi 0, %s45
    %s47 = sphi 0, %s45
    %s48 = sphi 0, %s47
    %s62 = sphi 0, %s48
    %s66 = sphi 0, %s66
    %s68 = sphi 0, %s66
    %s69 = sphi 0, %s68
    %s83 = sphi 0, %s69
    %s87 = sphi 0, %s87
    %s89 = sphi 0, %s87
    %s90 = sphi 0, %s89
    %s104 = sphi 0, %s90
    %s108 = sphi 0, %s108
    %s110 = sphi 0, %s108
    %s111 = sphi 0, %s110
    %s125 = sphi 0, %s111
    %s131 = sphi 0, %s133
    %s134 = sphi 0, %s131
    %s135 = sphi 0, %s134
    %s151 = sphi 0, %s135
  $region4: #{hire_block_forward.9} parent=0 // loop_header_branch
    %14 = sbr.rel (%p12) target = $region8
  $region5: #{hire_block_forward.9} parent=0 // loop_body
    %s16 = ssub.s32 %s11, 1
    %s17 = ssub.s32 %s11, 2
    %s18 = sadd.s32 %s11, 1
    %s19 = ssub.s32 %s11, %s18
    %p20 = scmp.eq.s32.totalorder %s19, 0
    %s22 = sadd.s32 %s21, 1
    %s23 = scalar_select %p20, %s21, %s22
    %p26 = pneg %p20
    %p27 = scmp.eq.s32.totalorder %s11, 1
    %p28 = por %p26, %p27
    %p29 = scmp.ne.s32.totalorder %s21, %s24
    %p30 = scmp.eq.s32.totalorder %s11, 0
    %p31 = por %p29, %p30
    %p32 = scmp.ne.s32.totalorder %s21, %s24
    %p33 = scmp.eq.s32.totalorder %s16, 1
    %p34 = por %p32, %p33
    %p35 = scmp.ne.s32.totalorder %s24, %s25
    %p36 = scmp.eq.s32.totalorder %s16, 0
    %p37 = por %p35, %p36
    %p38 = scmp.ne.s32.totalorder %s24, %s25
    %p39 = scmp.eq.s32.totalorder %s17, 1
    %p40 = por %p38, %p39
    %p42 = scmp.ne.s32.totalorder %s25, %s41
    %p43 = scmp.eq.s32.totalorder %s17, 0
    %p44 = por %p42, %p43
    %s46 = sadd.s32 %s45, 1
    %p49 = scmp.eq.s32.totalorder %s11, 1
    %p50 = scmp.ne.s32.totalorder %s45, %s47
    %p51 = scmp.eq.s32.totalorder %s11, 0
    %p52 = por %p50, %p51
    %p53 = scmp.ne.s32.totalorder %s45, %s47
    %p54 = scmp.eq.s32.totalorder %s16, 1
    %p55 = por %p53, %p54
    %p56 = scmp.ne.s32.totalorder %s47, %s48
    %p57 = scmp.eq.s32.totalorder %s16, 0
    %p58 = por %p56, %p57
    %p59 = scmp.ne.s32.totalorder %s47, %s48
    %p60 = scmp.eq.s32.totalorder %s17, 1
    %p61 = por %p59, %p60
    %p63 = scmp.ne.s32.totalorder %s48, %s62
    %p64 = scmp.eq.s32.totalorder %s17, 0
    %p65 = por %p63, %p64
    %s67 = sadd.s32 %s66, 1
    %p70 = scmp.eq.s32.totalorder %s11, 1
    %p71 = scmp.ne.s32.totalorder %s66, %s68
    %p72 = scmp.eq.s32.totalorder %s11, 0
    %p73 = por %p71, %p72
    %p74 = scmp.ne.s32.totalorder %s66, %s68
    %p75 = scmp.eq.s32.totalorder %s16, 1
    %p76 = por %p74, %p75
    %p77 = scmp.ne.s32.totalorder %s68, %s69
    %p78 = scmp.eq.s32.totalorder %s16, 0
    %p79 = por %p77, %p78
    %p80 = scmp.ne.s32.totalorder %s68, %s69
    %p81 = scmp.eq.s32.totalorder %s17, 1
    %p82 = por %p80, %p81
    %p84 = scmp.ne.s32.totalorder %s69, %s83
    %p85 = scmp.eq.s32.totalorder %s17, 0
    %p86 = por %p84, %p85
    %s88 = sadd.s32 %s87, 1
    %p91 = scmp.eq.s32.totalorder %s11, 1
    %p92 = scmp.ne.s32.totalorder %s87, %s89
    %p93 = scmp.eq.s32.totalorder %s11, 0
    %p94 = por %p92, %p93
    %p95 = scmp.ne.s32.totalorder %s87, %s89
    %p96 = scmp.eq.s32.totalorder %s16, 1
    %p97 = por %p95, %p96
    %p98 = scmp.ne.s32.totalorder %s89, %s90
    %p99 = scmp.eq.s32.totalorder %s16, 0
    %p100 = por %p98, %p99
    %p101 = scmp.ne.s32.totalorder %s89, %s90
    %p102 = scmp.eq.s32.totalorder %s17, 1
    %p103 = por %p101, %p102
    %p105 = scmp.ne.s32.totalorder %s90, %s104
    %p106 = scmp.eq.s32.totalorder %s17, 0
    %p107 = por %p105, %p106
    %s109 = sadd.s32 %s108, 1
    %p112 = scmp.eq.s32.totalorder %s11, 1
    %p113 = scmp.ne.s32.totalorder %s108, %s110
    %p114 = scmp.eq.s32.totalorder %s11, 0
    %p115 = por %p113, %p114
    %p116 = scmp.ne.s32.totalorder %s108, %s110
    %p117 = scmp.eq.s32.totalorder %s16, 1
    %p118 = por %p116, %p117
    %p119 = scmp.ne.s32.totalorder %s110, %s111
    %p120 = scmp.eq.s32.totalorder %s16, 0
    %p121 = por %p119, %p120
    %p122 = scmp.ne.s32.totalorder %s110, %s111
    %p123 = scmp.eq.s32.totalorder %s17, 1
    %p124 = por %p122, %p123
    %p126 = scmp.ne.s32.totalorder %s111, %s125
    %p127 = scmp.eq.s32.totalorder %s17, 0
    %p128 = por %p126, %p127
    %s129 = ssub.s32 %s11, %s18
    %p130 = scmp.eq.s32.totalorder %s129, 0
    %s132 = sadd.s32 %s131, 1
    %s133 = scalar_select %p130, %s131, %s132
    %p136 = pneg %p130
    %p137 = scmp.eq.s32.totalorder %s11, 1
    %p138 = por %p136, %p137
    %p139 = scmp.ne.s32.totalorder %s131, %s134
    %p140 = scmp.eq.s32.totalorder %s11, 0
    %p141 = por %p139, %p140
    %p142 = scmp.ne.s32.totalorder %s131, %s134
    %p143 = scmp.eq.s32.totalorder %s16, 1
    %p144 = por %p142, %p143
    %p145 = scmp.ne.s32.totalorder %s134, %s135
    %p146 = scmp.eq.s32.totalorder %s16, 0
    %p147 = por %p145, %p146
    %p148 = scmp.ne.s32.totalorder %s134, %s135
    %p149 = scmp.eq.s32.totalorder %s17, 1
    %p150 = por %p148, %p149
    %p152 = scmp.ne.s32.totalorder %s135, %s151
    %p153 = scmp.eq.s32.totalorder %s17, 0
    %p154 = por %p152, %p153
    %p155 = scmp.le.s32.totalorder 1, %s11
    %p156 = scmp.lt.s32.totalorder %s11, 3
    %p157 = pnand %p155, %p156
    %p158 = pneg %p157
    // Predicated region
    $region9: #{hire_block_forward.9} parent=5 // pred_check
      _
    $region10: #{hire_block_forward.9} parent=5 // pred_check_branch
      %160 = sbr.rel (%p157) target = $region12
    $region11: #{hire_block_forward.9} parent=5 // pred_region
      %s161 = ssub.s32 %s11, 1
      // Predicated region
      $region13: #{hire_block_forward.9} parent=11 // pred_check
        %p162 = pneg %p58
      $region14: #{hire_block_forward.9} parent=11 // pred_check_branch
        %164 = sbr.rel (%p162) target = $region16
      $region15: #{hire_block_forward.9} parent=11 // pred_region
        _
      $region16: #{hire_block_forward.9} parent=11 // pred_fallthru
        _
      // Predicated region
      $region17: #{hire_block_forward.9} parent=11 // pred_check
        %p165 = pneg %p79
      $region18: #{hire_block_forward.9} parent=11 // pred_check_branch
        %167 = sbr.rel (%p165) target = $region20
      $region19: #{hire_block_forward.9} parent=11 // pred_region
        _
      $region20: #{hire_block_forward.9} parent=11 // pred_fallthru
        _
      // Predicated region
      $region21: #{hire_block_forward.9} parent=11 // pred_check
        %p168 = pneg %p100
      $region22: #{hire_block_forward.9} parent=11 // pred_check_branch
        %170 = sbr.rel (%p168) target = $region24
      $region23: #{hire_block_forward.9} parent=11 // pred_region
        _
      $region24: #{hire_block_forward.9} parent=11 // pred_fallthru
        _
      // Predicated region
      $region25: #{hire_block_forward.9} parent=11 // pred_check
        %p171 = pneg %p121
      $region26: #{hire_block_forward.9} parent=11 // pred_check_branch
        %173 = sbr.rel (%p171) target = $region28
      $region27: #{hire_block_forward.9} parent=11 // pred_region
        _
      $region28: #{hire_block_forward.9} parent=11 // pred_fallthru
        _
    $region12: #{hire_block_forward.9} parent=5 // pred_fallthru
      _
    %p174 = scmp.lt.s32.totalorder %s11, 2
    // Predicated region
    $region29: #{hire_block_forward.9} parent=5 // pred_check
      %p175 = pneg %p174
    $region30: #{hire_block_forward.9} parent=5 // pred_check_branch
      %177 = sbr.rel (%p175) target = $region32
    $region31: #{hire_block_forward.9} parent=5 // pred_region
      // Predicated region
      $region33: #{hire_block_forward.9} parent=31 // pred_check
        %p178 = pneg %p31
      $region34: #{hire_block_forward.9} parent=31 // pred_check_branch
        %180 = sbr.rel (%p178) target = $region36
      $region35: #{hire_block_forward.9} parent=31 // pred_region
        %s181 = smul.u32 32, %s11
        %p182 = scmp.lt.s32.totalorder %s181, 63
        %s183 = scalar_select %p182, %s181, 63
        %s184 = smul.addr %s183, 4
        %s185 = scalar_lea.vmem %s0, %s184
        %s186 = smul.u32 32, %s11
      $region36: #{hire_block_forward.9} parent=31 // pred_fallthru
        _
    $region32: #{hire_block_forward.9} parent=5 // pred_fallthru
      _
    %p187 = scmp.le.s32.totalorder 1, %s11
    %p188 = scmp.lt.s32.totalorder %s11, 3
    %p189 = pnand %p187, %p188
    %p190 = pneg %p189
    // Predicated region
    $region37: #{hire_block_forward.9} parent=5 // pred_check
      _
    $region38: #{hire_block_forward.9} parent=5 // pred_check_branch
      %192 = sbr.rel (%p189) target = $region40
    $region39: #{hire_block_forward.9} parent=5 // pred_region
      %s193 = ssub.s32 %s11, 1
      %s194 = smul.u32 32, %s16
      %p195 = scmp.lt.s32.totalorder %s194, 63
      %s196 = scalar_select %p195, %s194, 63
      %s197 = smul.addr %s196, 4
      %s198 = scalar_lea.vmem %s0, %s197
      %p199 = pneg %p37
      %p200 = pneg %p34
      %p201 = pneg %p58
      %p202 = pneg %p55
      %p203 = pneg %p79
      %p204 = pneg %p76
      %p205 = pneg %p100
      %p206 = pneg %p97
      %p207 = pneg %p121
      %p208 = pneg %p118
      %p209 = pneg %p147
      %p210 = pneg %p144
      %s211 = smul.u32 32, %s16
      %p212 = scmp.lt.s32.totalorder %s211, 63
      %s213 = scalar_select %p212, %s211, 63
      %s214 = smul.addr %s213, 8
      %s215 = scalar_lea.vmem %s5, %s214
      %s216 = smul.u32 32, %s16
      %p217 = scmp.lt.s32.totalorder %s216, 63
      %s218 = scalar_select %p217, %s216, 63
      %s219 = smul.addr %s218, 4
      %s220 = scalar_lea.vmem %s0, %s219
      %s221 = smul.u32 32, %s16
      %s222 = smul.u32 32, %s16
      %p223 = scmp.lt.s32.totalorder %s222, 63
      %s224 = scalar_select %p223, %s222, 63
      %s225 = smul.addr %s224, 8
      %s226 = scalar_lea.vmem %s5, %s225
      %s227 = smul.u32 32, %s16
      %v229 = vld [vmem:[%s220] sm:$0xf]
      %v230 = vld [vmem:[%s220 + $0x4] sm:$0xf]
      %v231 = vld [vmem:[%s220 + $0x8] sm:$0xf]
      %v232 = vld [vmem:[%s220 + $0xc] sm:$0xf]
      %v233 = vld [vmem:[%s220 + $0x10] sm:$0xf]
      %v234 = vld [vmem:[%s220 + $0x14] sm:$0xf]
      %v235 = vld [vmem:[%s220 + $0x18] sm:$0xf]
      %v236 = vld [vmem:[%s220 + $0x1c] sm:$0xf]
      %v237 = vld [vmem:[%s220 + $0x20] sm:$0xf]
      %v238 = vld [vmem:[%s220 + $0x24] sm:$0xf]
      %v239 = vld [vmem:[%s220 + $0x28] sm:$0xf]
      %v240 = vld [vmem:[%s220 + $0x2c] sm:$0xf]
      %v241 = vld [vmem:[%s220 + $0x30] sm:$0xf]
      %v242 = vld [vmem:[%s220 + $0x34] sm:$0xf]
      %v243 = vld [vmem:[%s220 + $0x38] sm:$0xf]
      %v244 = vld [vmem:[%s220 + $0x3c] sm:$0xf]
      %v245 = vld [vmem:[%s220 + $0x40] sm:$0xf]
      %v246 = vld [vmem:[%s220 + $0x44] sm:$0xf]
      %v247 = vld [vmem:[%s220 + $0x48] sm:$0xf]
      %v248 = vld [vmem:[%s220 + $0x4c] sm:$0xf]
      %v249 = vld [vmem:[%s220 + $0x50] sm:$0xf]
      %v250 = vld [vmem:[%s220 + $0x54] sm:$0xf]
      %v251 = vld [vmem:[%s220 + $0x58] sm:$0xf]
      %v252 = vld [vmem:[%s220 + $0x5c] sm:$0xf]
      %v253 = vld [vmem:[%s220 + $0x60] sm:$0xf]
      %v254 = vld [vmem:[%s220 + $0x64] sm:$0xf]
      %v255 = vld [vmem:[%s220 + $0x68] sm:$0xf]
      %v256 = vld [vmem:[%s220 + $0x6c] sm:$0xf]
      %v257 = vld [vmem:[%s220 + $0x70] sm:$0xf]
      %v258 = vld [vmem:[%s220 + $0x74] sm:$0xf]
      %v259 = vld [vmem:[%s220 + $0x78] sm:$0xf]
      %v260 = vld [vmem:[%s220 + $0x7c] sm:$0xf]
      %v261 = vld [vmem:[%s1] sm:$0xf]
      %v262 = vld [vmem:[%s1 + $0x4] sm:$0xf]
      %v263 = vld [vmem:[%s2] sm:$0x1]
      %v265 = vlaneseq
      %v266 = vshrl.u32 %v265, 7
      %v267 = vsub.s32 0, %v266
      %v268 = vrot.slane %v263, %v267
      %v302 = vunpack.c.l.b16 %v229
      %v303 = vunpack.c.l.b16 %v230
      %v304 = vunpack.c.l.b16 %v231
      %v305 = vunpack.c.l.b16 %v232
      %v306 = vunpack.c.l.b16 %v233
      %v307 = vunpack.c.l.b16 %v234
      %v308 = vunpack.c.l.b16 %v235
      %v309 = vunpack.c.l.b16 %v236
      %v310 = vunpack.c.l.b16 %v237
      %v311 = vunpack.c.l.b16 %v238
      %v312 = vunpack.c.l.b16 %v239
      %v313 = vunpack.c.l.b16 %v240
      %v314 = vunpack.c.l.b16 %v241
      %v315 = vunpack.c.l.b16 %v242
      %v316 = vunpack.c.l.b16 %v243
      %v317 = vunpack.c.l.b16 %v244
      %v318 = vunpack.c.l.b16 %v245
      %v319 = vunpack.c.l.b16 %v246
      %v320 = vunpack.c.l.b16 %v247
      %v321 = vunpack.c.l.b16 %v248
      %v322 = vunpack.c.l.b16 %v249
      %v323 = vunpack.c.l.b16 %v250
      %v324 = vunpack.c.l.b16 %v251
      %v325 = vunpack.c.l.b16 %v252
      %v326 = vunpack.c.l.b16 %v253
      %v327 = vunpack.c.l.b16 %v254
      %v328 = vunpack.c.l.b16 %v255
      %v329 = vunpack.c.l.b16 %v256
      %v330 = vunpack.c.l.b16 %v257
      %v331 = vunpack.c.l.b16 %v258
      %v332 = vunpack.c.l.b16 %v259
      %v333 = vunpack.c.l.b16 %v260
      %v334 = vpack.c.b16 %v303, %v302
      %v335 = vpack.c.b16 %v305, %v304
      %v336 = vpack.c.b16 %v307, %v306
      %v337 = vpack.c.b16 %v309, %v308
      %v338 = vpack.c.b16 %v311, %v310
      %v339 = vpack.c.b16 %v313, %v312
      %v340 = vpack.c.b16 %v315, %v314
      %v341 = vpack.c.b16 %v317, %v316
      %v342 = vpack.c.b16 %v319, %v318
      %v343 = vpack.c.b16 %v321, %v320
      %v344 = vpack.c.b16 %v323, %v322
      %v345 = vpack.c.b16 %v325, %v324
      %v346 = vpack.c.b16 %v327, %v326
      %v347 = vpack.c.b16 %v329, %v328
      %v348 = vpack.c.b16 %v331, %v330
      %v349 = vpack.c.b16 %v333, %v332
      %v352 = vunpack.c.l.b16 %v261
      %v353 = vunpack.c.l.b16 %v262
      %v354 = vpack.c.b16 %v353, %v352
      %vm356 = vcmask 130048
      %v358 = vsel %vm356, %v334, 0
      %v361 = vsel %vm356, %v335, 0
      %v364 = vsel %vm356, %v336, 0
      %v367 = vsel %vm356, %v337, 0
      %v370 = vsel %vm356, %v338, 0
      %v373 = vsel %vm356, %v339, 0
      %v376 = vsel %vm356, %v340, 0
      %v379 = vsel %vm356, %v341, 0
      %v382 = vsel %vm356, %v342, 0
      %v385 = vsel %vm356, %v343, 0
      %v388 = vsel %vm356, %v344, 0
      %v391 = vsel %vm356, %v345, 0
      %v394 = vsel %vm356, %v346, 0
      %v397 = vsel %vm356, %v347, 0
      %v400 = vsel %vm356, %v348, 0
      %v403 = vsel %vm356, %v349, 0
      %405 = vmatprep.subr.bf16.mxu0 0
      %406 = vmatpush1.bf16.msra.mxu0 0
      %407 = vmatprep.subr.bf16.mxu0 0
      %408 = vmatpush1.bf16.msra.mxu0 0
      %409 = vmatprep.subr.bf16.mxu0 0
      %410 = vmatpush1.bf16.msra.mxu0 0
      %411 = vmatprep.subr.bf16.mxu0 0
      %412 = vmatpush1.bf16.msra.mxu0 0
      %413 = vmatprep.subr.bf16.mxu0 0
      %414 = vmatpush1.bf16.msra.mxu0 0
      %415 = vmatprep.subr.bf16.mxu0 0
      %416 = vmatpush1.bf16.msra.mxu0 0
      %417 = vmatprep.subr.bf16.mxu0 0
      %418 = vmatpush1.bf16.msra.mxu0 0
      %419 = vmatprep.subr.bf16.mxu0 0
      %420 = vmatpush1.bf16.msra.mxu0 %v354
      %421 = vmatprep.subr.bf16.mxu0 0
      %422 = vmatpush2.bf16.msra.mxu0 0
      %423 = vmatprep.subr.bf16.mxu0 0
      %424 = vmatpush2.bf16.msra.mxu0 0
      %425 = vmatprep.subr.bf16.mxu0 0
      %426 = vmatpush2.bf16.msra.mxu0 0
      %427 = vmatprep.subr.bf16.mxu0 0
      %428 = vmatpush2.bf16.msra.mxu0 0
      %429 = vmatprep.subr.bf16.mxu0 0
      %430 = vmatpush2.bf16.msra.mxu0 0
      %431 = vmatprep.subr.bf16.mxu0 0
      %432 = vmatpush2.bf16.msra.mxu0 0
      %433 = vmatprep.subr.bf16.mxu0 0
      %434 = vmatpush2.bf16.msra.mxu0 0
      %435 = vmatprep.subr.bf16.mxu0 0
      %436 = vmatpush2.bf16.msra.mxu0 0
      %437 = vmatprep.mubr.bf16.mxu0 0
      %438 = vmatmul.mubr.bf16.gmra.mxu0 %v358
      %v439 = vpop.f32.mrf.mxu0
      %v440 = vadd.f32 %v268, %v439
      %v441 = vpop.f32.mrf.mxu0
      %v442 = vpop.f32.mrf.mxu0
      %v443 = vadd.f32 %v268, %v442
      %v444 = vpop.f32.mrf.mxu0
      %445 = vmatprep.mubr.bf16.mxu0 0
      %446 = vmatmul.mubr.bf16.gmra.mxu0 %v361
      %v447 = vpop.f32.mrf.mxu0
      %v448 = vadd.f32 %v268, %v447
      %v449 = vpop.f32.mrf.mxu0
      %v450 = vpop.f32.mrf.mxu0
      %v451 = vadd.f32 %v268, %v450
      %v452 = vpop.f32.mrf.mxu0
      %453 = vmatprep.mubr.bf16.mxu0 0
      %454 = vmatmul.mubr.bf16.gmra.mxu0 %v364
      %v455 = vpop.f32.mrf.mxu0
      %v456 = vadd.f32 %v268, %v455
      %v457 = vpop.f32.mrf.mxu0
      %v458 = vpop.f32.mrf.mxu0
      %v459 = vadd.f32 %v268, %v458
      %v460 = vpop.f32.mrf.mxu0
      %461 = vmatprep.mubr.bf16.mxu0 0
      %462 = vmatmul.mubr.bf16.gmra.mxu0 %v367
      %v463 = vpop.f32.mrf.mxu0
      %v464 = vadd.f32 %v268, %v463
      %v465 = vpop.f32.mrf.mxu0
      %v466 = vpop.f32.mrf.mxu0
      %v467 = vadd.f32 %v268, %v466
      %v468 = vpop.f32.mrf.mxu0
      %469 = vmatprep.mubr.bf16.mxu0 0
      %470 = vmatmul.mubr.bf16.gmra.mxu0 %v370
      %v471 = vpop.f32.mrf.mxu0
      %v472 = vadd.f32 %v268, %v471
      %v473 = vpop.f32.mrf.mxu0
      %v474 = vpop.f32.mrf.mxu0
      %v475 = vadd.f32 %v268, %v474
      %v476 = vpop.f32.mrf.mxu0
      %477 = vmatprep.mubr.bf16.mxu0 0
      %478 = vmatmul.mubr.bf16.gmra.mxu0 %v373
      %v479 = vpop.f32.mrf.mxu0
      %v480 = vadd.f32 %v268, %v479
      %v481 = vpop.f32.mrf.mxu0
      %v482 = vpop.f32.mrf.mxu0
      %v483 = vadd.f32 %v268, %v482
      %v484 = vpop.f32.mrf.mxu0
      %485 = vmatprep.mubr.bf16.mxu0 0
      %486 = vmatmul.mubr.bf16.gmra.mxu0 %v376
      %v487 = vpop.f32.mrf.mxu0
      %v488 = vadd.f32 %v268, %v487
      %v489 = vpop.f32.mrf.mxu0
      %v490 = vpop.f32.mrf.mxu0
      %v491 = vadd.f32 %v268, %v490
      %v492 = vpop.f32.mrf.mxu0
      %493 = vmatprep.mubr.bf16.mxu0 0
      %494 = vmatmul.mubr.bf16.gmra.mxu0 %v379
      %v495 = vpop.f32.mrf.mxu0
      %v496 = vadd.f32 %v268, %v495
      %v497 = vpop.f32.mrf.mxu0
      %v498 = vpop.f32.mrf.mxu0
      %v499 = vadd.f32 %v268, %v498
      %v500 = vpop.f32.mrf.mxu0
      %501 = vmatprep.mubr.bf16.mxu0 0
      %502 = vmatmul.mubr.bf16.gmra.mxu0 %v382
      %v503 = vpop.f32.mrf.mxu0
      %v504 = vadd.f32 %v268, %v503
      %v505 = vpop.f32.mrf.mxu0
      %v506 = vpop.f32.mrf.mxu0
      %v507 = vadd.f32 %v268, %v506
      %v508 = vpop.f32.mrf.mxu0
      %509 = vmatprep.mubr.bf16.mxu0 0
      %510 = vmatmul.mubr.bf16.gmra.mxu0 %v385
      %v511 = vpop.f32.mrf.mxu0
      %v512 = vadd.f32 %v268, %v511
      %v513 = vpop.f32.mrf.mxu0
      %v514 = vpop.f32.mrf.mxu0
      %v515 = vadd.f32 %v268, %v514
      %v516 = vpop.f32.mrf.mxu0
      %517 = vmatprep.mubr.bf16.mxu0 0
      %518 = vmatmul.mubr.bf16.gmra.mxu0 %v388
      %v519 = vpop.f32.mrf.mxu0
      %v520 = vadd.f32 %v268, %v519
      %v521 = vpop.f32.mrf.mxu0
      %v522 = vpop.f32.mrf.mxu0
      %v523 = vadd.f32 %v268, %v522
      %v524 = vpop.f32.mrf.mxu0
      %525 = vmatprep.mubr.bf16.mxu0 0
      %526 = vmatmul.mubr.bf16.gmra.mxu0 %v391
      %v527 = vpop.f32.mrf.mxu0
      %v528 = vadd.f32 %v268, %v527
      %v529 = vpop.f32.mrf.mxu0
      %v530 = vpop.f32.mrf.mxu0
      %v531 = vadd.f32 %v268, %v530
      %v532 = vpop.f32.mrf.mxu0
      %533 = vmatprep.mubr.bf16.mxu0 0
      %534 = vmatmul.mubr.bf16.gmra.mxu0 %v394
      %v535 = vpop.f32.mrf.mxu0
      %v536 = vadd.f32 %v268, %v535
      %v537 = vpop.f32.mrf.mxu0
      %v538 = vpop.f32.mrf.mxu0
      %v539 = vadd.f32 %v268, %v538
      %v540 = vpop.f32.mrf.mxu0
      %541 = vmatprep.mubr.bf16.mxu0 0
      %542 = vmatmul.mubr.bf16.gmra.mxu0 %v397
      %v543 = vpop.f32.mrf.mxu0
      %v544 = vadd.f32 %v268, %v543
      %v545 = vpop.f32.mrf.mxu0
      %v546 = vpop.f32.mrf.mxu0
      %v547 = vadd.f32 %v268, %v546
      %v548 = vpop.f32.mrf.mxu0
      %549 = vmatprep.mubr.bf16.mxu0 0
      %550 = vmatmul.mubr.bf16.gmra.mxu0 %v400
      %v551 = vpop.f32.mrf.mxu0
      %v552 = vadd.f32 %v268, %v551
      %v553 = vpop.f32.mrf.mxu0
      %v554 = vpop.f32.mrf.mxu0
      %v555 = vadd.f32 %v268, %v554
      %v556 = vpop.f32.mrf.mxu0
      %557 = vmatprep.mubr.bf16.mxu0 0
      %558 = vmatmul.mubr.bf16.gmra.mxu0 %v403
      %v559 = vpop.f32.mrf.mxu0
      %v560 = vadd.f32 %v268, %v559
      %v561 = vpop.f32.mrf.mxu0
      %v562 = vpop.f32.mrf.mxu0
      %v563 = vadd.f32 %v268, %v562
      %v564 = vpop.f32.mrf.mxu0
      %565 = vdwg.mxu0
      %v566 = vmul.f32 %v440, 0.5
      %v567 = vmul.f32 %v443, 0.5
      %v568 = vmul.f32 %v448, 0.5
      %v569 = vmul.f32 %v451, 0.5
      %v570 = vmul.f32 %v456, 0.5
      %v571 = vmul.f32 %v459, 0.5
      %v572 = vmul.f32 %v464, 0.5
      %v573 = vmul.f32 %v467, 0.5
      %v574 = vmul.f32 %v472, 0.5
      %v575 = vmul.f32 %v475, 0.5
      %v576 = vmul.f32 %v480, 0.5
      %v577 = vmul.f32 %v483, 0.5
      %v578 = vmul.f32 %v488, 0.5
      %v579 = vmul.f32 %v491, 0.5
      %v580 = vmul.f32 %v496, 0.5
      %v581 = vmul.f32 %v499, 0.5
      %v582 = vmul.f32 %v504, 0.5
      %v583 = vmul.f32 %v507, 0.5
      %v584 = vmul.f32 %v512, 0.5
      %v585 = vmul.f32 %v515, 0.5
      %v586 = vmul.f32 %v520, 0.5
      %v587 = vmul.f32 %v523, 0.5
      %v588 = vmul.f32 %v528, 0.5
      %v589 = vmul.f32 %v531, 0.5
      %v590 = vmul.f32 %v536, 0.5
      %v591 = vmul.f32 %v539, 0.5
      %v592 = vmul.f32 %v544, 0.5
      %v593 = vmul.f32 %v547, 0.5
      %v594 = vmul.f32 %v552, 0.5
      %v595 = vmul.f32 %v555, 0.5
      %v596 = vmul.f32 %v560, 0.5
      %v597 = vmul.f32 %v563, 0.5
      %v598 = vmul.f32 %v440, 0.044715
      %v599 = vmul.f32 %v443, 0.044715
      %v600 = vmul.f32 %v448, 0.044715
      %v601 = vmul.f32 %v451, 0.044715
      %v602 = vmul.f32 %v456, 0.044715
      %v603 = vmul.f32 %v459, 0.044715
      %v604 = vmul.f32 %v464, 0.044715
      %v605 = vmul.f32 %v467, 0.044715
      %v606 = vmul.f32 %v472, 0.044715
      %v607 = vmul.f32 %v475, 0.044715
      %v608 = vmul.f32 %v480, 0.044715
      %v609 = vmul.f32 %v483, 0.044715
      %v610 = vmul.f32 %v488, 0.044715
      %v611 = vmul.f32 %v491, 0.044715
      %v612 = vmul.f32 %v496, 0.044715
      %v613 = vmul.f32 %v499, 0.044715
      %v614 = vmul.f32 %v504, 0.044715
      %v615 = vmul.f32 %v507, 0.044715
      %v616 = vmul.f32 %v512, 0.044715
      %v617 = vmul.f32 %v515, 0.044715
      %v618 = vmul.f32 %v520, 0.044715
      %v619 = vmul.f32 %v523, 0.044715
      %v620 = vmul.f32 %v528, 0.044715
      %v621 = vmul.f32 %v531, 0.044715
      %v622 = vmul.f32 %v536, 0.044715
      %v623 = vmul.f32 %v539, 0.044715
      %v624 = vmul.f32 %v544, 0.044715
      %v625 = vmul.f32 %v547, 0.044715
      %v626 = vmul.f32 %v552, 0.044715
      %v627 = vmul.f32 %v555, 0.044715
      %v628 = vmul.f32 %v560, 0.044715
      %v629 = vmul.f32 %v563, 0.044715
      %v630 = vmul.f32 %v598, %v440
      %v631 = vmul.f32 %v599, %v443
      %v632 = vmul.f32 %v600, %v448
      %v633 = vmul.f32 %v601, %v451
      %v634 = vmul.f32 %v602, %v456
      %v635 = vmul.f32 %v603, %v459
      %v636 = vmul.f32 %v604, %v464
      %v637 = vmul.f32 %v605, %v467
      %v638 = vmul.f32 %v606, %v472
      %v639 = vmul.f32 %v607, %v475
      %v640 = vmul.f32 %v608, %v480
      %v641 = vmul.f32 %v609, %v483
      %v642 = vmul.f32 %v610, %v488
      %v643 = vmul.f32 %v611, %v491
      %v644 = vmul.f32 %v612, %v496
      %v645 = vmul.f32 %v613, %v499
      %v646 = vmul.f32 %v614, %v504
      %v647 = vmul.f32 %v615, %v507
      %v648 = vmul.f32 %v616, %v512
      %v649 = vmul.f32 %v617, %v515
      %v650 = vmul.f32 %v618, %v520
      %v651 = vmul.f32 %v619, %v523
      %v652 = vmul.f32 %v620, %v528
      %v653 = vmul.f32 %v621, %v531
      %v654 = vmul.f32 %v622, %v536
      %v655 = vmul.f32 %v623, %v539
      %v656 = vmul.f32 %v624, %v544
      %v657 = vmul.f32 %v625, %v547
      %v658 = vmul.f32 %v626, %v552
      %v659 = vmul.f32 %v627, %v555
      %v660 = vmul.f32 %v628, %v560
      %v661 = vmul.f32 %v629, %v563
      %v662 = vmul.f32 %v630, %v440
      %v663 = vmul.f32 %v631, %v443
      %v664 = vmul.f32 %v632, %v448
      %v665 = vmul.f32 %v633, %v451
      %v666 = vmul.f32 %v634, %v456
      %v667 = vmul.f32 %v635, %v459
      %v668 = vmul.f32 %v636, %v464
      %v669 = vmul.f32 %v637, %v467
      %v670 = vmul.f32 %v638, %v472
      %v671 = vmul.f32 %v639, %v475
      %v672 = vmul.f32 %v640, %v480
      %v673 = vmul.f32 %v641, %v483
      %v674 = vmul.f32 %v642, %v488
      %v675 = vmul.f32 %v643, %v491
      %v676 = vmul.f32 %v644, %v496
      %v677 = vmul.f32 %v645, %v499
      %v678 = vmul.f32 %v646, %v504
      %v679 = vmul.f32 %v647, %v507
      %v680 = vmul.f32 %v648, %v512
      %v681 = vmul.f32 %v649, %v515
      %v682 = vmul.f32 %v650, %v520
      %v683 = vmul.f32 %v651, %v523
      %v684 = vmul.f32 %v652, %v528
      %v685 = vmul.f32 %v653, %v531
      %v686 = vmul.f32 %v654, %v536
      %v687 = vmul.f32 %v655, %v539
      %v688 = vmul.f32 %v656, %v544
      %v689 = vmul.f32 %v657, %v547
      %v690 = vmul.f32 %v658, %v552
      %v691 = vmul.f32 %v659, %v555
      %v692 = vmul.f32 %v660, %v560
      %v693 = vmul.f32 %v661, %v563
      %v694 = vadd.f32 %v440, %v662
      %v695 = vadd.f32 %v443, %v663
      %v696 = vadd.f32 %v448, %v664
      %v697 = vadd.f32 %v451, %v665
      %v698 = vadd.f32 %v456, %v666
      %v699 = vadd.f32 %v459, %v667
      %v700 = vadd.f32 %v464, %v668
      %v701 = vadd.f32 %v467, %v669
      %v702 = vadd.f32 %v472, %v670
      %v703 = vadd.f32 %v475, %v671
      %v704 = vadd.f32 %v480, %v672
      %v705 = vadd.f32 %v483, %v673
      %v706 = vadd.f32 %v488, %v674
      %v707 = vadd.f32 %v491, %v675
      %v708 = vadd.f32 %v496, %v676
      %v709 = vadd.f32 %v499, %v677
      %v710 = vadd.f32 %v504, %v678
      %v711 = vadd.f32 %v507, %v679
      %v712 = vadd.f32 %v512, %v680
      %v713 = vadd.f32 %v515, %v681
      %v714 = vadd.f32 %v520, %v682
      %v715 = vadd.f32 %v523, %v683
      %v716 = vadd.f32 %v528, %v684
      %v717 = vadd.f32 %v531, %v685
      %v718 = vadd.f32 %v536, %v686
      %v719 = vadd.f32 %v539, %v687
      %v720 = vadd.f32 %v544, %v688
      %v721 = vadd.f32 %v547, %v689
      %v722 = vadd.f32 %v552, %v690
      %v723 = vadd.f32 %v555, %v691
      %v724 = vadd.f32 %v560, %v692
      %v725 = vadd.f32 %v563, %v693
      %v726 = vmul.f32 %v694, 0.7978846
      %v727 = vmul.f32 %v695, 0.7978846
      %v728 = vmul.f32 %v696, 0.7978846
      %v729 = vmul.f32 %v697, 0.7978846
      %v730 = vmul.f32 %v698, 0.7978846
      %v731 = vmul.f32 %v699, 0.7978846
      %v732 = vmul.f32 %v700, 0.7978846
      %v733 = vmul.f32 %v701, 0.7978846
      %v734 = vmul.f32 %v702, 0.7978846
      %v735 = vmul.f32 %v703, 0.7978846
      %v736 = vmul.f32 %v704, 0.7978846
      %v737 = vmul.f32 %v705, 0.7978846
      %v738 = vmul.f32 %v706, 0.7978846
      %v739 = vmul.f32 %v707, 0.7978846
      %v740 = vmul.f32 %v708, 0.7978846
      %v741 = vmul.f32 %v709, 0.7978846
      %v742 = vmul.f32 %v710, 0.7978846
      %v743 = vmul.f32 %v711, 0.7978846
      %v744 = vmul.f32 %v712, 0.7978846
      %v745 = vmul.f32 %v713, 0.7978846
      %v746 = vmul.f32 %v714, 0.7978846
      %v747 = vmul.f32 %v715, 0.7978846
      %v748 = vmul.f32 %v716, 0.7978846
      %v749 = vmul.f32 %v717, 0.7978846
      %v750 = vmul.f32 %v718, 0.7978846
      %v751 = vmul.f32 %v719, 0.7978846
      %v752 = vmul.f32 %v720, 0.7978846
      %v753 = vmul.f32 %v721, 0.7978846
      %v754 = vmul.f32 %v722, 0.7978846
      %v755 = vmul.f32 %v723, 0.7978846
      %v756 = vmul.f32 %v724, 0.7978846
      %v757 = vmul.f32 %v725, 0.7978846
      %v758 = vtanh.pop %v726
      %v759 = vtanh.pop %v727
      %v760 = vtanh.pop %v728
      %v761 = vtanh.pop %v729
      %v762 = vtanh.pop %v730
      %v763 = vtanh.pop %v731
      %v764 = vtanh.pop %v732
      %v765 = vtanh.pop %v733
      %v766 = vtanh.pop %v734
      %v767 = vtanh.pop %v735
      %v768 = vtanh.pop %v736
      %v769 = vtanh.pop %v737
      %v770 = vtanh.pop %v738
      %v771 = vtanh.pop %v739
      %v772 = vtanh.pop %v740
      %v773 = vtanh.pop %v741
      %v774 = vtanh.pop %v742
      %v775 = vtanh.pop %v743
      %v776 = vtanh.pop %v744
      %v777 = vtanh.pop %v745
      %v778 = vtanh.pop %v746
      %v779 = vtanh.pop %v747
      %v780 = vtanh.pop %v748
      %v781 = vtanh.pop %v749
      %v782 = vtanh.pop %v750
      %v783 = vtanh.pop %v751
      %v784 = vtanh.pop %v752
      %v785 = vtanh.pop %v753
      %v786 = vtanh.pop %v754
      %v787 = vtanh.pop %v755
      %v788 = vtanh.pop %v756
      %v789 = vtanh.pop %v757
      %v790 = vadd.f32 %v758, 1.0
      %v791 = vadd.f32 %v759, 1.0
      %v792 = vadd.f32 %v760, 1.0
      %v793 = vadd.f32 %v761, 1.0
      %v794 = vadd.f32 %v762, 1.0
      %v795 = vadd.f32 %v763, 1.0
      %v796 = vadd.f32 %v764, 1.0
      %v797 = vadd.f32 %v765, 1.0
      %v798 = vadd.f32 %v766, 1.0
      %v799 = vadd.f32 %v767, 1.0
      %v800 = vadd.f32 %v768, 1.0
      %v801 = vadd.f32 %v769, 1.0
      %v802 = vadd.f32 %v770, 1.0
      %v803 = vadd.f32 %v771, 1.0
      %v804 = vadd.f32 %v772, 1.0
      %v805 = vadd.f32 %v773, 1.0
      %v806 = vadd.f32 %v774, 1.0
      %v807 = vadd.f32 %v775, 1.0
      %v808 = vadd.f32 %v776, 1.0
      %v809 = vadd.f32 %v777, 1.0
      %v810 = vadd.f32 %v778, 1.0
      %v811 = vadd.f32 %v779, 1.0
      %v812 = vadd.f32 %v780, 1.0
      %v813 = vadd.f32 %v781, 1.0
      %v814 = vadd.f32 %v782, 1.0
      %v815 = vadd.f32 %v783, 1.0
      %v816 = vadd.f32 %v784, 1.0
      %v817 = vadd.f32 %v785, 1.0
      %v818 = vadd.f32 %v786, 1.0
      %v819 = vadd.f32 %v787, 1.0
      %v820 = vadd.f32 %v788, 1.0
      %v821 = vadd.f32 %v789, 1.0
      %v822 = vmul.f32 %v566, %v790
      %v823 = vmul.f32 %v567, %v791
      %v824 = vmul.f32 %v568, %v792
      %v825 = vmul.f32 %v569, %v793
      %v826 = vmul.f32 %v570, %v794
      %v827 = vmul.f32 %v571, %v795
      %v828 = vmul.f32 %v572, %v796
      %v829 = vmul.f32 %v573, %v797
      %v830 = vmul.f32 %v574, %v798
      %v831 = vmul.f32 %v575, %v799
      %v832 = vmul.f32 %v576, %v800
      %v833 = vmul.f32 %v577, %v801
      %v834 = vmul.f32 %v578, %v802
      %v835 = vmul.f32 %v579, %v803
      %v836 = vmul.f32 %v580, %v804
      %v837 = vmul.f32 %v581, %v805
      %v838 = vmul.f32 %v582, %v806
      %v839 = vmul.f32 %v583, %v807
      %v840 = vmul.f32 %v584, %v808
      %v841 = vmul.f32 %v585, %v809
      %v842 = vmul.f32 %v586, %v810
      %v843 = vmul.f32 %v587, %v811
      %v844 = vmul.f32 %v588, %v812
      %v845 = vmul.f32 %v589, %v813
      %v846 = vmul.f32 %v590, %v814
      %v847 = vmul.f32 %v591, %v815
      %v848 = vmul.f32 %v592, %v816
      %v849 = vmul.f32 %v593, %v817
      %v850 = vmul.f32 %v594, %v818
      %v851 = vmul.f32 %v595, %v819
      %v852 = vmul.f32 %v596, %v820
      %v853 = vmul.f32 %v597, %v821
      %v854 = vpack.c.bf16 %v823, %v822
      %v855 = vpack.c.bf16 %v825, %v824
      %v856 = vpack.c.bf16 %v827, %v826
      %v857 = vpack.c.bf16 %v829, %v828
      %v858 = vpack.c.bf16 %v831, %v830
      %v859 = vpack.c.bf16 %v833, %v832
      %v860 = vpack.c.bf16 %v835, %v834
      %v861 = vpack.c.bf16 %v837, %v836
      %v862 = vpack.c.bf16 %v839, %v838
      %v863 = vpack.c.bf16 %v841, %v840
      %v864 = vpack.c.bf16 %v843, %v842
      %v865 = vpack.c.bf16 %v845, %v844
      %v866 = vpack.c.bf16 %v847, %v846
      %v867 = vpack.c.bf16 %v849, %v848
      %v868 = vpack.c.bf16 %v851, %v850
      %v869 = vpack.c.bf16 %v853, %v852
      %v870 = vld [vmem:[%s3] sm:$0xf]
      %v871 = vld [vmem:[%s3 + $0x4] sm:$0xf]
      %v872 = vld [vmem:[%s3 + $0x8] sm:$0xf]
      %v873 = vld [vmem:[%s3 + $0xc] sm:$0xf]
      %v874 = vld [vmem:[%s3 + $0x10] sm:$0xf]
      %v875 = vld [vmem:[%s3 + $0x14] sm:$0xf]
      %v876 = vld [vmem:[%s3 + $0x18] sm:$0xf]
      %v877 = vld [vmem:[%s3 + $0x1c] sm:$0xf]
      %v878 = vld [vmem:[%s4] sm:$0x1]
      %v880 = vlaneseq
      %v881 = vshrl.u32 %v880, 7
      %v882 = vsub.s32 0, %v881
      %v883 = vrot.slane %v878, %v882
      %v893 = vunpack.c.l.b16 %v870
      %v894 = vunpack.c.l.b16 %v871
      %v895 = vunpack.c.l.b16 %v872
      %v896 = vunpack.c.l.b16 %v873
      %v897 = vunpack.c.l.b16 %v874
      %v898 = vunpack.c.l.b16 %v875
      %v899 = vunpack.c.l.b16 %v876
      %v900 = vunpack.c.l.b16 %v877
      %v901 = vpack.c.b16 %v894, %v893
      %v902 = vpack.c.b16 %v896, %v895
      %v903 = vpack.c.b16 %v898, %v897
      %v904 = vpack.c.b16 %v900, %v899
      %vm909 = vcmask 523264
      %v911 = vsel %vm909, %v854, 0
      %v914 = vsel %vm909, %v855, 0
      %v917 = vsel %vm909, %v856, 0
      %v920 = vsel %vm909, %v857, 0
      %v923 = vsel %vm909, %v858, 0
      %v926 = vsel %vm909, %v859, 0
      %v929 = vsel %vm909, %v860, 0
      %v932 = vsel %vm909, %v861, 0
      %v935 = vsel %vm909, %v862, 0
      %v938 = vsel %vm909, %v863, 0
      %v941 = vsel %vm909, %v864, 0
      %v944 = vsel %vm909, %v865, 0
      %v947 = vsel %vm909, %v866, 0
      %v950 = vsel %vm909, %v867, 0
      %v953 = vsel %vm909, %v868, 0
      %v956 = vsel %vm909, %v869, 0
      %958 = vmatprep.subr.bf16.mxu0 0
      %959 = vmatpush1.bf16.msra.mxu0 0
      %960 = vmatprep.subr.bf16.mxu0 0
      %961 = vmatpush1.bf16.msra.mxu0 0
      %962 = vmatprep.subr.bf16.mxu0 0
      %963 = vmatpush1.bf16.msra.mxu0 0
      %964 = vmatprep.subr.bf16.mxu0 0
      %965 = vmatpush1.bf16.msra.mxu0 0
      %966 = vmatprep.subr.bf16.mxu0 0
      %967 = vmatpush1.bf16.msra.mxu0 %v904
      %968 = vmatprep.subr.bf16.mxu0 0
      %969 = vmatpush1.bf16.msra.mxu0 %v903
      %970 = vmatprep.subr.bf16.mxu0 0
      %971 = vmatpush1.bf16.msra.mxu0 %v902
      %972 = vmatprep.subr.bf16.mxu0 0
      %973 = vmatpush1.bf16.msra.mxu0 %v901
      %974 = vmatprep.subr.bf16.mxu0 0
      %975 = vmatpush2.bf16.msra.mxu0 0
      %976 = vmatprep.subr.bf16.mxu0 0
      %977 = vmatpush2.bf16.msra.mxu0 0
      %978 = vmatprep.subr.bf16.mxu0 0
      %979 = vmatpush2.bf16.msra.mxu0 0
      %980 = vmatprep.subr.bf16.mxu0 0
      %981 = vmatpush2.bf16.msra.mxu0 0
      %982 = vmatprep.subr.bf16.mxu0 0
      %983 = vmatpush2.bf16.msra.mxu0 0
      %984 = vmatprep.subr.bf16.mxu0 0
      %985 = vmatpush2.bf16.msra.mxu0 0
      %986 = vmatprep.subr.bf16.mxu0 0
      %987 = vmatpush2.bf16.msra.mxu0 0
      %988 = vmatprep.subr.bf16.mxu0 0
      %989 = vmatpush2.bf16.msra.mxu0 0
      %990 = vmatprep.mubr.bf16.mxu0 0
      %991 = vmatmul.mubr.bf16.gmra.mxu0 %v911
      %v992 = vpop.f32.mrf.mxu0
      %v993 = vadd.f32 %v883, %v992
      %v994 = vpop.f32.mrf.mxu0
      %v995 = vpop.f32.mrf.mxu0
      %v996 = vadd.f32 %v883, %v995
      %v997 = vpop.f32.mrf.mxu0
      %998 = vmatprep.mubr.bf16.mxu0 0
      %999 = vmatmul.mubr.bf16.gmra.mxu0 %v914
      %v1000 = vpop.f32.mrf.mxu0
      %v1001 = vadd.f32 %v883, %v1000
      %v1002 = vpop.f32.mrf.mxu0
      %v1003 = vpop.f32.mrf.mxu0
      %v1004 = vadd.f32 %v883, %v1003
      %v1005 = vpop.f32.mrf.mxu0
      %1006 = vmatprep.mubr.bf16.mxu0 0
      %1007 = vmatmul.mubr.bf16.gmra.mxu0 %v917
      %v1008 = vpop.f32.mrf.mxu0
      %v1009 = vadd.f32 %v883, %v1008
      %v1010 = vpop.f32.mrf.mxu0
      %v1011 = vpop.f32.mrf.mxu0
      %v1012 = vadd.f32 %v883, %v1011
      %v1013 = vpop.f32.mrf.mxu0
      %1014 = vmatprep.mubr.bf16.mxu0 0
      %1015 = vmatmul.mubr.bf16.gmra.mxu0 %v920
      %v1016 = vpop.f32.mrf.mxu0
      %v1017 = vadd.f32 %v883, %v1016
      %v1018 = vpop.f32.mrf.mxu0
      %v1019 = vpop.f32.mrf.mxu0
      %v1020 = vadd.f32 %v883, %v1019
      %v1021 = vpop.f32.mrf.mxu0
      %1022 = vmatprep.mubr.bf16.mxu0 0
      %1023 = vmatmul.mubr.bf16.gmra.mxu0 %v923
      %v1024 = vpop.f32.mrf.mxu0
      %v1025 = vadd.f32 %v883, %v1024
      %v1026 = vpop.f32.mrf.mxu0
      %v1027 = vpop.f32.mrf.mxu0
      %v1028 = vadd.f32 %v883, %v1027
      %v1029 = vpop.f32.mrf.mxu0
      %1030 = vmatprep.mubr.bf16.mxu0 0
      %1031 = vmatmul.mubr.bf16.gmra.mxu0 %v926
      %v1032 = vpop.f32.mrf.mxu0
      %v1033 = vadd.f32 %v883, %v1032
      %v1034 = vpop.f32.mrf.mxu0
      %v1035 = vpop.f32.mrf.mxu0
      %v1036 = vadd.f32 %v883, %v1035
      %v1037 = vpop.f32.mrf.mxu0
      %1038 = vmatprep.mubr.bf16.mxu0 0
      %1039 = vmatmul.mubr.bf16.gmra.mxu0 %v929
      %v1040 = vpop.f32.mrf.mxu0
      %v1041 = vadd.f32 %v883, %v1040
      %v1042 = vpop.f32.mrf.mxu0
      %v1043 = vpop.f32.mrf.mxu0
      %v1044 = vadd.f32 %v883, %v1043
      %v1045 = vpop.f32.mrf.mxu0
      %1046 = vmatprep.mubr.bf16.mxu0 0
      %1047 = vmatmul.mubr.bf16.gmra.mxu0 %v932
      %v1048 = vpop.f32.mrf.mxu0
      %v1049 = vadd.f32 %v883, %v1048
      %v1050 = vpop.f32.mrf.mxu0
      %v1051 = vpop.f32.mrf.mxu0
      %v1052 = vadd.f32 %v883, %v1051
      %v1053 = vpop.f32.mrf.mxu0
      %1054 = vmatprep.mubr.bf16.mxu0 0
      %1055 = vmatmul.mubr.bf16.gmra.mxu0 %v935
      %v1056 = vpop.f32.mrf.mxu0
      %v1057 = vadd.f32 %v883, %v1056
      %v1058 = vpop.f32.mrf.mxu0
      %v1059 = vpop.f32.mrf.mxu0
      %v1060 = vadd.f32 %v883, %v1059
      %v1061 = vpop.f32.mrf.mxu0
      %1062 = vmatprep.mubr.bf16.mxu0 0
      %1063 = vmatmul.mubr.bf16.gmra.mxu0 %v938
      %v1064 = vpop.f32.mrf.mxu0
      %v1065 = vadd.f32 %v883, %v1064
      %v1066 = vpop.f32.mrf.mxu0
      %v1067 = vpop.f32.mrf.mxu0
      %v1068 = vadd.f32 %v883, %v1067
      %v1069 = vpop.f32.mrf.mxu0
      %1070 = vmatprep.mubr.bf16.mxu0 0
      %1071 = vmatmul.mubr.bf16.gmra.mxu0 %v941
      %v1072 = vpop.f32.mrf.mxu0
      %v1073 = vadd.f32 %v883, %v1072
      %v1074 = vpop.f32.mrf.mxu0
      %v1075 = vpop.f32.mrf.mxu0
      %v1076 = vadd.f32 %v883, %v1075
      %v1077 = vpop.f32.mrf.mxu0
      %1078 = vmatprep.mubr.bf16.mxu0 0
      %1079 = vmatmul.mubr.bf16.gmra.mxu0 %v944
      %v1080 = vpop.f32.mrf.mxu0
      %v1081 = vadd.f32 %v883, %v1080
      %v1082 = vpop.f32.mrf.mxu0
      %v1083 = vpop.f32.mrf.mxu0
      %v1084 = vadd.f32 %v883, %v1083
      %v1085 = vpop.f32.mrf.mxu0
      %1086 = vmatprep.mubr.bf16.mxu0 0
      %1087 = vmatmul.mubr.bf16.gmra.mxu0 %v947
      %v1088 = vpop.f32.mrf.mxu0
      %v1089 = vadd.f32 %v883, %v1088
      %v1090 = vpop.f32.mrf.mxu0
      %v1091 = vpop.f32.mrf.mxu0
      %v1092 = vadd.f32 %v883, %v1091
      %v1093 = vpop.f32.mrf.mxu0
      %1094 = vmatprep.mubr.bf16.mxu0 0
      %1095 = vmatmul.mubr.bf16.gmra.mxu0 %v950
      %v1096 = vpop.f32.mrf.mxu0
      %v1097 = vadd.f32 %v883, %v1096
      %v1098 = vpop.f32.mrf.mxu0
      %v1099 = vpop.f32.mrf.mxu0
      %v1100 = vadd.f32 %v883, %v1099
      %v1101 = vpop.f32.mrf.mxu0
      %1102 = vmatprep.mubr.bf16.mxu0 0
      %1103 = vmatmul.mubr.bf16.gmra.mxu0 %v953
      %v1104 = vpop.f32.mrf.mxu0
      %v1105 = vadd.f32 %v883, %v1104
      %v1106 = vpop.f32.mrf.mxu0
      %v1107 = vpop.f32.mrf.mxu0
      %v1108 = vadd.f32 %v883, %v1107
      %v1109 = vpop.f32.mrf.mxu0
      %1110 = vmatprep.mubr.bf16.mxu0 0
      %1111 = vmatmul.mubr.bf16.gmra.mxu0 %v956
      %v1112 = vpop.f32.mrf.mxu0
      %v1113 = vadd.f32 %v883, %v1112
      %v1114 = vpop.f32.mrf.mxu0
      %v1115 = vpop.f32.mrf.mxu0
      %v1116 = vadd.f32 %v883, %v1115
      %v1117 = vpop.f32.mrf.mxu0
      %1118 = vdwg.mxu0
      %v1119 = vunpack.c.l.bf16 %v229
      %v1120 = vunpack.c.l.bf16 %v230
      %v1121 = vunpack.c.l.bf16 %v231
      %v1122 = vunpack.c.l.bf16 %v232
      %v1123 = vunpack.c.l.bf16 %v233
      %v1124 = vunpack.c.l.bf16 %v234
      %v1125 = vunpack.c.l.bf16 %v235
      %v1126 = vunpack.c.l.bf16 %v236
      %v1127 = vunpack.c.l.bf16 %v237
      %v1128 = vunpack.c.l.bf16 %v238
      %v1129 = vunpack.c.l.bf16 %v239
      %v1130 = vunpack.c.l.bf16 %v240
      %v1131 = vunpack.c.l.bf16 %v241
      %v1132 = vunpack.c.l.bf16 %v242
      %v1133 = vunpack.c.l.bf16 %v243
      %v1134 = vunpack.c.l.bf16 %v244
      %v1135 = vunpack.c.l.bf16 %v245
      %v1136 = vunpack.c.l.bf16 %v246
      %v1137 = vunpack.c.l.bf16 %v247
      %v1138 = vunpack.c.l.bf16 %v248
      %v1139 = vunpack.c.l.bf16 %v249
      %v1140 = vunpack.c.l.bf16 %v250
      %v1141 = vunpack.c.l.bf16 %v251
      %v1142 = vunpack.c.l.bf16 %v252
      %v1143 = vunpack.c.l.bf16 %v253
      %v1144 = vunpack.c.l.bf16 %v254
      %v1145 = vunpack.c.l.bf16 %v255
      %v1146 = vunpack.c.l.bf16 %v256
      %v1147 = vunpack.c.l.bf16 %v257
      %v1148 = vunpack.c.l.bf16 %v258
      %v1149 = vunpack.c.l.bf16 %v259
      %v1150 = vunpack.c.l.bf16 %v260
      %v1151 = vadd.f32 %v1119, %v993
      %v1152 = vadd.f32 %v1120, %v996
      %v1153 = vadd.f32 %v1121, %v1001
      %v1154 = vadd.f32 %v1122, %v1004
      %v1155 = vadd.f32 %v1123, %v1009
      %v1156 = vadd.f32 %v1124, %v1012
      %v1157 = vadd.f32 %v1125, %v1017
      %v1158 = vadd.f32 %v1126, %v1020
      %v1159 = vadd.f32 %v1127, %v1025
      %v1160 = vadd.f32 %v1128, %v1028
      %v1161 = vadd.f32 %v1129, %v1033
      %v1162 = vadd.f32 %v1130, %v1036
      %v1163 = vadd.f32 %v1131, %v1041
      %v1164 = vadd.f32 %v1132, %v1044
      %v1165 = vadd.f32 %v1133, %v1049
      %v1166 = vadd.f32 %v1134, %v1052
      %v1167 = vadd.f32 %v1135, %v1057
      %v1168 = vadd.f32 %v1136, %v1060
      %v1169 = vadd.f32 %v1137, %v1065
      %v1170 = vadd.f32 %v1138, %v1068
      %v1171 = vadd.f32 %v1139, %v1073
      %v1172 = vadd.f32 %v1140, %v1076
      %v1173 = vadd.f32 %v1141, %v1081
      %v1174 = vadd.f32 %v1142, %v1084
      %v1175 = vadd.f32 %v1143, %v1089
      %v1176 = vadd.f32 %v1144, %v1092
      %v1177 = vadd.f32 %v1145, %v1097
      %v1178 = vadd.f32 %v1146, %v1100
      %v1179 = vadd.f32 %v1147, %v1105
      %v1180 = vadd.f32 %v1148, %v1108
      %v1181 = vadd.f32 %v1149, %v1113
      %v1182 = vadd.f32 %v1150, %v1116
      %1183 = vst.msk [vmem:[%s226] sm:$0xff] %vm356, %v1151
      %1184 = vst.msk [vmem:[%s226 + $0x8] sm:$0xff] %vm356, %v1152
      %1185 = vst.msk [vmem:[%s226 + $0x10] sm:$0xff] %vm356, %v1153
      %1186 = vst.msk [vmem:[%s226 + $0x18] sm:$0xff] %vm356, %v1154
      %1187 = vst.msk [vmem:[%s226 + $0x20] sm:$0xff] %vm356, %v1155
      %1188 = vst.msk [vmem:[%s226 + $0x28] sm:$0xff] %vm356, %v1156
      %1189 = vst.msk [vmem:[%s226 + $0x30] sm:$0xff] %vm356, %v1157
      %1190 = vst.msk [vmem:[%s226 + $0x38] sm:$0xff] %vm356, %v1158
      %1191 = vst.msk [vmem:[%s226 + $0x40] sm:$0xff] %vm356, %v1159
      %1192 = vst.msk [vmem:[%s226 + $0x48] sm:$0xff] %vm356, %v1160
      %1193 = vst.msk [vmem:[%s226 + $0x50] sm:$0xff] %vm356, %v1161
      %1194 = vst.msk [vmem:[%s226 + $0x58] sm:$0xff] %vm356, %v1162
      %1195 = vst.msk [vmem:[%s226 + $0x60] sm:$0xff] %vm356, %v1163
      %1196 = vst.msk [vmem:[%s226 + $0x68] sm:$0xff] %vm356, %v1164
      %1197 = vst.msk [vmem:[%s226 + $0x70] sm:$0xff] %vm356, %v1165
      %1198 = vst.msk [vmem:[%s226 + $0x78] sm:$0xff] %vm356, %v1166
      %1199 = vst.msk [vmem:[%s226 + $0x80] sm:$0xff] %vm356, %v1167
      %1200 = vst.msk [vmem:[%s226 + $0x88] sm:$0xff] %vm356, %v1168
      %1201 = vst.msk [vmem:[%s226 + $0x90] sm:$0xff] %vm356, %v1169
      %1202 = vst.msk [vmem:[%s226 + $0x98] sm:$0xff] %vm356, %v1170
      %1203 = vst.msk [vmem:[%s226 + $0xa0] sm:$0xff] %vm356, %v1171
      %1204 = vst.msk [vmem:[%s226 + $0xa8] sm:$0xff] %vm356, %v1172
      %1205 = vst.msk [vmem:[%s226 + $0xb0] sm:$0xff] %vm356, %v1173
      %1206 = vst.msk [vmem:[%s226 + $0xb8] sm:$0xff] %vm356, %v1174
      %1207 = vst.msk [vmem:[%s226 + $0xc0] sm:$0xff] %vm356, %v1175
      %1208 = vst.msk [vmem:[%s226 + $0xc8] sm:$0xff] %vm356, %v1176
      %1209 = vst.msk [vmem:[%s226 + $0xd0] sm:$0xff] %vm356, %v1177
      %1210 = vst.msk [vmem:[%s226 + $0xd8] sm:$0xff] %vm356, %v1178
      %1211 = vst.msk [vmem:[%s226 + $0xe0] sm:$0xff] %vm356, %v1179
      %1212 = vst.msk [vmem:[%s226 + $0xe8] sm:$0xff] %vm356, %v1180
      %1213 = vst.msk [vmem:[%s226 + $0xf0] sm:$0xff] %vm356, %v1181
      %1214 = vst.msk [vmem:[%s226 + $0xf8] sm:$0xff] %vm356, %v1182
      %s1215 = smul.u32 32, %s16
      %p1216 = scmp.lt.s32.totalorder %s1215, 63
      %s1217 = scalar_select %p1216, %s1215, 63
      %s1218 = smul.addr %s1217, 8
      %s1219 = scalar_lea.vmem %s5, %s1218
      // Predicated region
      $region41: #{hire_block_forward.9} parent=39 // pred_check
        %p1220 = pneg %p144
      $region42: #{hire_block_forward.9} parent=39 // pred_check_branch
        %1222 = sbr.rel (%p1220) target = $region44
      $region43: #{hire_block_forward.9} parent=39 // pred_region
        %s1223 = smul.u32 32, %s16
      $region44: #{hire_block_forward.9} parent=39 // pred_fallthru
        _
    $region40: #{hire_block_forward.9} parent=5 // pred_fallthru
      _
    %p1224 = scmp.le.s32.totalorder 2, %s11
    // Predicated region
    $region45: #{hire_block_forward.9} parent=5 // pred_check
      %p1225 = pneg %p1224
    $region46: #{hire_block_forward.9} parent=5 // pred_check_branch
      %1227 = sbr.rel (%p1225) target = $region48
    $region47: #{hire_block_forward.9} parent=5 // pred_region
      %s1228 = ssub.s32 %s11, 2
      // Predicated region
      $region49: #{hire_block_forward.9} parent=47 // pred_check
        %p1229 = pneg %p150
      $region50: #{hire_block_forward.9} parent=47 // pred_check_branch
        %1231 = sbr.rel (%p1229) target = $region52
      $region51: #{hire_block_forward.9} parent=47 // pred_region
        %s1232 = smul.u32 32, %s17
        %p1233 = scmp.lt.s32.totalorder %s1232, 63
        %s1234 = scalar_select %p1233, %s1232, 63
        %s1235 = smul.addr %s1234, 8
        %s1236 = scalar_lea.vmem %s5, %s1235
      $region52: #{hire_block_forward.9} parent=47 // pred_fallthru
        _
    $region48: #{hire_block_forward.9} parent=5 // pred_fallthru
      _
  $region6: #{hire_block_forward.9} parent=0 // loop_footer
    %s15 = sadd.s32 1, %s11
  $region7: #{hire_block_forward.9} parent=0 // loop_footer_branch
    %10 = sbr.rel target = $region3
  $region8: #{hire_block_forward.9} parent=0 // loop_exit
    _

</llo_original>
